<compile_context>
chip_gen: v7x
topology: tpu7x:2x2x1
jax: 0.10.0
libtpu: 0.0.40
codegen_flags: <defaults>
</compile_context>

<pallas_src>
import functools

import jax
import jax.numpy as jnp
from jax.experimental import pallas as pl
from jax.experimental.pallas import tpu as pltpu


# ----------------------------- static geometry ----------------------------- #

H0 = W0 = 28            # input spatial size (implied by linear1's 32*3*3)
H1 = W1 = 14            # after conv1: k3 s2 p1
H2 = W2 = 7             # after conv2: k3 s2 p1
H3 = W3 = 3             # after conv3: k3 s2 p0
C1, C2, C3 = 8, 16, 32  # conv channel counts
HID = 128               # linear1 width
K = 3                   # conv kernel size

# Stored W-position orderings of activation rows.  Grouping columns by
# congruence class (mod 4 after conv1, mod 2 after conv2) makes every stride-2
# column gather used by the next conv layer a *contiguous* row range, so
# in-kernel patch assembly is a short static list of plain 2-D slice copies.
W1_ORDER = [w for r in range(4) for w in range(r, W1, 4)]
W2_ORDER = [w for r in range(2) for w in range(r, W2, 2)]
POS1 = {w: i for i, w in enumerate(W1_ORDER)}
POS2 = {w: i for i, w in enumerate(W2_ORDER)}
POS3 = {w: w for w in range(W3)}
W2_GROUPS = ([0, 2, 4, 6], [1, 3, 5])   # conv2 output columns, grouped by parity
W3_GROUPS = ([0, 1, 2],)                # conv3 output columns (natural order)


def _build_patch_plan(*, stride, pad, hi, wi, ho, wo, in_pos, out_pos,
                      out_groups, cin, batch):
    """Static plan filling an im2col buffer whose lanes are (tap, cin).

    Activation rows are stored as [(h * W + pos(w)) * batch + b, cin]; the patch
    buffer is [(oh * Wo + pos(ow)) * batch + b, K*K*cin].  Returns
      copies: (src_row, dst_row, n_rows, col)  p[dst:dst+n, col:col+cin] = act[src:src+n, :]
      zeros : (dst_row, n_rows, col)           p[dst:dst+n, col:col+cin] = 0 (conv padding)
    Together they cover every cell of the patch buffer exactly once.
    """
    copies, zeros = [], []
    for oh in range(ho):
        for i in range(K):
            ih = stride * oh + i - pad
            row_ok = 0 <= ih < hi
            for j in range(K):
                col = (i * K + j) * cin
                for group in out_groups:
                    dst_pos, src_pos, pad_pos = [], [], []
                    for ow in group:
                        iw = stride * ow + j - pad
                        if row_ok and 0 <= iw < wi:
                            dst_pos.append(out_pos[ow])
                            src_pos.append(in_pos[iw])
                        else:
                            pad_pos.append(out_pos[ow])
                    if dst_pos:
                        # a single 2-D slice copy needs both ranges contiguous
                        assert dst_pos == list(range(dst_pos[0], dst_pos[0] + len(dst_pos)))
                        assert src_pos == list(range(src_pos[0], src_pos[0] + len(src_pos)))
                        copies.append(((ih * wi + src_pos[0]) * batch,
                                       (oh * wo + dst_pos[0]) * batch,
                                       len(dst_pos) * batch, col))
                    if pad_pos:
                        assert pad_pos == list(range(pad_pos[0], pad_pos[0] + len(pad_pos)))
                        zeros.append(((oh * wo + pad_pos[0]) * batch,
                                      len(pad_pos) * batch, col))
    return tuple(copies), tuple(zeros)


# ------------------------------- fused kernel ------------------------------- #

def _encoder_kernel(p1_ref, w1_ref, b1_ref,
                    w2_ref, bn_g_ref, bn_b_ref,
                    w3_ref, b3_ref,
                    wl1_ref, bl1_ref, wl23_ref, bl23_ref,
                    eps_ref,
                    z_ref, kl_ref,
                    y1_ref, p2_ref, y2_ref, p3_ref, y3s_ref, y3b_ref,
                    *, batch, latent, plan2, zeros2, plan3):
    f32 = jnp.float32

    # conv1: one [n1, 9] @ [9, 8] matmul + bias + ReLU (patches pre-built).
    y1 = jnp.dot(p1_ref[...], w1_ref[...], preferred_element_type=f32)
    y1_ref[...] = jnp.maximum(y1 + b1_ref[...], 0.0)

    # conv2 im2col: contraction (tap, c1) packed along lanes -> [n2, 72].
    # Only the padded-border cells are zeroed (no full-buffer zero pass).
    for dst, n, col in zeros2:
        p2_ref[dst:dst + n, col:col + C1] = jnp.zeros((n, C1), f32)
    for src, dst, n, col in plan2:
        p2_ref[dst:dst + n, col:col + C1] = y1_ref[src:src + n, :]

    # conv2 as ONE 72-deep matmul, then train-mode BatchNorm2d (full-batch,
    # two-pass / centered biased variance, eps=1e-5) + ReLU.  conv2's bias is
    # omitted: BN's mean subtraction cancels it exactly.
    pre2 = jnp.dot(p2_ref[...], w2_ref[...], preferred_element_type=f32)
    inv_n = 1.0 / pre2.shape[0]
    mean = jnp.sum(pre2, axis=0, keepdims=True) * inv_n
    cen = pre2 - mean
    var = jnp.sum(cen * cen, axis=0, keepdims=True) * inv_n
    y2 = cen * jax.lax.rsqrt(var + 1e-5) * bn_g_ref[...] + bn_b_ref[...]
    y2_ref[...] = jnp.maximum(y2, 0.0)

    # conv3 im2col (pad=0 -> no zero fill) and ONE 144-deep matmul + bias + ReLU.
    for src, dst, n, col in plan3:
        p3_ref[dst:dst + n, col:col + C2] = y2_ref[src:src + n, :]
    y3 = jnp.dot(p3_ref[...], w3_ref[...], preferred_element_type=f32)
    y3s_ref[...] = jnp.maximum(y3 + b3_ref[...], 0.0)

    # Repack conv3's [(site, b), 32] rows into one lane-dense [B, 288] row per
    # sample (PyTorch's channel-major flatten is folded into wl1's row order),
    # so linear1 is a single [B, 288] @ [288, 128] matmul.
    for s in range(H3 * W3):
        y3b_ref[:, s * C3:(s + 1) * C3] = y3s_ref[s * batch:(s + 1) * batch, :]

    # linear1 + fused mu || log_sigma heads + reparameterization + KL.
    h = jnp.dot(y3b_ref[...], wl1_ref[...], preferred_element_type=f32) + bl1_ref[...]
    h = jnp.maximum(h, 0.0)
    heads = jnp.dot(h, wl23_ref[...], preferred_element_type=f32) + bl23_ref[...]
    mu = heads[:, :latent]
    log_sigma = heads[:, latent:]
    sigma = jnp.exp(log_sigma)
    z_ref[...] = mu + sigma * eps_ref[...]
    kl_ref[...] = jnp.sum(sigma * sigma + mu * mu - log_sigma - 0.5).reshape(1, 1)


def _fused_encoder_call(batch, latent):
    plan2, zeros2 = _build_patch_plan(stride=2, pad=1, hi=H1, wi=W1, ho=H2, wo=W2,
                                      in_pos=POS1, out_pos=POS2,
                                      out_groups=W2_GROUPS, cin=C1, batch=batch)
    plan3, zeros3 = _build_patch_plan(stride=2, pad=0, hi=H2, wi=W2, ho=H3, wo=W3,
                                      in_pos=POS2, out_pos=POS3,
                                      out_groups=W3_GROUPS, cin=C2, batch=batch)
    assert not zeros3          # conv3 has no padding -> no zero fills needed
    kernel = functools.partial(_encoder_kernel, batch=batch, latent=latent,
                               plan2=plan2, zeros2=zeros2, plan3=plan3)
    n1, n2, n3 = batch * H1 * W1, batch * H2 * W2, batch * H3 * W3
    vmem = pl.BlockSpec(memory_space=pltpu.MemorySpace.VMEM)
    return pl.pallas_call(
        kernel,
        out_shape=(jax.ShapeDtypeStruct((batch, latent), jnp.float32),
                   jax.ShapeDtypeStruct((1, 1), jnp.float32)),
        in_specs=[vmem] * 13,
        out_specs=(vmem, vmem),
        scratch_shapes=[
            pltpu.VMEM((n1, C1), jnp.float32),               # y1
            pltpu.VMEM((n2, K * K * C1), jnp.float32),       # conv2 im2col [n2, 72]
            pltpu.VMEM((n2, C2), jnp.float32),               # y2
            pltpu.VMEM((n3, K * K * C2), jnp.float32),       # conv3 im2col [n3, 144]
            pltpu.VMEM((n3, C3), jnp.float32),               # y3 (site-major)
            pltpu.VMEM((batch, H3 * W3 * C3), jnp.float32),  # y3 repacked [B, 288]
        ],
    )


# ----------------------------- host-side helpers ---------------------------- #

def _conv1_patches(x_nchw):
    """[B,1,28,28] -> [B*14*14, 9] conv1 im2col; rows ordered (h1, POS1(w1), b)."""
    batch = x_nchw.shape[0]
    x = x_nchw[:, 0, :, :].astype(jnp.float32)
    xp = jnp.pad(x, ((0, 0), (1, 1), (1, 1)))                          # [B, 30, 30]
    taps = [xp[:, i:i + 2 * H1 - 1:2, j:j + 2 * W1 - 1:2]
            for i in range(K) for j in range(K)]                       # 9 x [B,14,14]
    t = jnp.stack(taps, axis=-1)                                       # [B,14,14,9]
    t = jnp.concatenate([t[:, :, r::4, :] for r in range(4)], axis=2)  # W1_ORDER
    t = jnp.transpose(t, (1, 2, 0, 3))                                 # [14,14,B,9]
    return t.reshape(H1 * W1 * batch, K * K)


def init_params(key, latent_dims):
    """Parameters in the original PyTorch layouts."""
    ks = jax.random.split(key, 9)
    scale = 0.05

    def rnd(k, shape):
        return scale * jax.random.normal(k, shape, dtype=jnp.float32)

    return {
        "conv1_w": rnd(ks[0], (C1, 1, K, K)),  "conv1_b": rnd(ks[1], (C1,)),
        "conv2_w": rnd(ks[2], (C2, C1, K, K)), "conv2_b": rnd(ks[3], (C2,)),
        "bn_gamma": jnp.ones((C2,), jnp.float32),
        "bn_beta": jnp.zeros((C2,), jnp.float32),
        "conv3_w": rnd(ks[4], (C3, C2, K, K)), "conv3_b": rnd(ks[5], (C3,)),
        "lin1_w": rnd(ks[6], (HID, C3 * H3 * W3)),
        "lin1_b": jnp.zeros((HID,), jnp.float32),
        "lin2_w": rnd(ks[7], (latent_dims, HID)),
        "lin2_b": jnp.zeros((latent_dims,), jnp.float32),
        "lin3_w": rnd(ks[8], (latent_dims, HID)),
        "lin3_b": jnp.zeros((latent_dims,), jnp.float32),
    }


def prepare_params(params):
    """One-time layout prep (outside the jitted forward): conv weights to
    [k*k*Cin, Cout], linear weights to [in, out], PyTorch's channel-major
    flatten folded into linear1's row order, mu/log-sigma heads concatenated,
    biases as [1, n] rows."""

    def conv_mat(w):                      # [Cout, Cin, kh, kw] -> [kh*kw*Cin, Cout]
        cout, cin, kh, kw = w.shape
        return jnp.transpose(w, (2, 3, 1, 0)).reshape(kh * kw * cin, cout)

    wl1 = params["lin1_w"].reshape(HID, C3, H3 * W3)                  # [out, c, s]
    wl1 = jnp.transpose(wl1, (2, 1, 0)).reshape(H3 * W3 * C3, HID)    # row = s*C3+c

    row = lambda v: v.reshape(1, -1)
    wl23 = jnp.concatenate([params["lin2_w"].T, params["lin3_w"].T], axis=1)
    bl23 = jnp.concatenate([params["lin2_b"], params["lin3_b"]]).reshape(1, -1)
    return {
        "w1": conv_mat(params["conv1_w"]), "b1": row(params["conv1_b"]),
        # conv2_b intentionally not forwarded: train-mode BN cancels it exactly.
        "w2": conv_mat(params["conv2_w"]),
        "bn_g": row(params["bn_gamma"]), "bn_b": row(params["bn_beta"]),
        "w3": conv_mat(params["conv3_w"]), "b3": row(params["conv3_b"]),
        "wl1": wl1, "bl1": row(params["lin1_b"]),
        "wl23": wl23, "bl23": bl23,
    }


def variational_encoder_forward(prepped, x_nchw, eps):
    """x_nchw: [B, 1, 28, 28] float32; eps: [B, latent] ~ N(0,1) (replaces the
    torch.distributions sample). Returns (z, kl)."""
    batch, latent = eps.shape
    p1 = _conv1_patches(x_nchw)
    z, kl = _fused_encoder_call(batch, latent)(
        p1,
        prepped["w1"], prepped["b1"],
        prepped["w2"], prepped["bn_g"], prepped["bn_b"],
        prepped["w3"], prepped["b3"],
        prepped["wl1"], prepped["bl1"],
        prepped["wl23"], prepped["bl23"],
        eps)
    return z, kl[0, 0]


# ------------------------- plain-JAX reference check ------------------------ #

def _reference_forward(params, x, eps):
    """Direct transcription of the PyTorch forward (train-mode BatchNorm)."""
    prec = jax.lax.Precision.HIGHEST
    dn = ("NCHW", "OIHW", "NCHW")

    def conv(v, w, b, stride, pad):
        v = jax.lax.conv_general_dilated(v, w, (stride, stride), [(pad, pad)] * 2,
                                         dimension_numbers=dn, precision=prec)
        return v + b.reshape(1, -1, 1, 1)

    y = jax.nn.relu(conv(x, params["conv1_w"], params["conv1_b"], 2, 1))
    y = conv(y, params["conv2_w"], params["conv2_b"], 2, 1)
    mean = jnp.mean(y, axis=(0, 2, 3), keepdims=True)
    var = jnp.mean((y - mean) ** 2, axis=(0, 2, 3), keepdims=True)
    y = (y - mean) * jax.lax.rsqrt(var + 1e-5)
    y = jax.nn.relu(y * params["bn_gamma"].reshape(1, -1, 1, 1)
                    + params["bn_beta"].reshape(1, -1, 1, 1))
    y = jax.nn.relu(conv(y, params["conv3_w"], params["conv3_b"], 2, 0))
    flat = y.reshape(y.shape[0], -1)                                   # NCHW flatten
    h = jax.nn.relu(jnp.matmul(flat, params["lin1_w"].T, precision=prec)
                    + params["lin1_b"])
    mu = jnp.matmul(h, params["lin2_w"].T, precision=prec) + params["lin2_b"]
    log_sigma = jnp.matmul(h, params["lin3_w"].T, precision=prec) + params["lin3_b"]
    sigma = jnp.exp(log_sigma)
    z = mu + sigma * eps
    kl = jnp.sum(sigma ** 2 + mu ** 2 - log_sigma - 0.5)
    return z, kl


# ----------------------------------- main ----------------------------------- #

if __name__ == "__main__":
    latent_dims = 4
    batch = 2

    key = jax.random.PRNGKey(0)
    k_param, k_x, k_eps = jax.random.split(key, 3)

    params = init_params(k_param, latent_dims)
    prepped = prepare_params(params)          # one-time prep, outside the jitted fwd
    x = jax.random.normal(k_x, (batch, 1, H0, W0), dtype=jnp.float32)
    eps = jax.random.normal(k_eps, (batch, latent_dims), dtype=jnp.float32)

    fwd = jax.jit(variational_encoder_forward)
    z, kl = fwd(prepped, x, eps)
    jax.block_until_ready((z, kl))

    assert z.shape == (batch, latent_dims)
    assert kl.shape == ()

    # Numerical validation against the plain-JAX transcription of the module.
    z_expected, kl_expected = _reference_forward(params, x, eps)
    assert jnp.allclose(z, z_expected, atol=1e-2, rtol=2e-2), (z, z_expected)
    assert jnp.allclose(kl, kl_expected, atol=5e-2, rtol=5e-2), (kl, kl_expected)

    print("KERNEL_OK")
</pallas_src>

<mosaic_0001>
module attributes {stable_mosaic.version = 11 : i64} {
  func.func @_encoder_kernel(%arg0: memref<392x9xf32, #tpu.memory_space<vmem>>, %arg1: memref<9x8xf32, #tpu.memory_space<vmem>>, %arg2: memref<1x8xf32, #tpu.memory_space<vmem>>, %arg3: memref<72x16xf32, #tpu.memory_space<vmem>>, %arg4: memref<1x16xf32, #tpu.memory_space<vmem>>, %arg5: memref<1x16xf32, #tpu.memory_space<vmem>>, %arg6: memref<144x32xf32, #tpu.memory_space<vmem>>, %arg7: memref<1x32xf32, #tpu.memory_space<vmem>>, %arg8: memref<288x128xf32, #tpu.memory_space<vmem>>, %arg9: memref<1x128xf32, #tpu.memory_space<vmem>>, %arg10: memref<128x8xf32, #tpu.memory_space<vmem>>, %arg11: memref<1x8xf32, #tpu.memory_space<vmem>>, %arg12: memref<2x4xf32, #tpu.memory_space<vmem>>, %arg13: memref<2x4xf32, #tpu.memory_space<vmem>>, %arg14: memref<1x1xf32, #tpu.memory_space<vmem>>, %arg15: memref<392x8xf32, #tpu.memory_space<vmem>>, %arg16: memref<98x72xf32, #tpu.memory_space<vmem>>, %arg17: memref<98x16xf32, #tpu.memory_space<vmem>>, %arg18: memref<18x144xf32, #tpu.memory_space<vmem>>, %arg19: memref<18x32xf32, #tpu.memory_space<vmem>>, %arg20: memref<2x288xf32, #tpu.memory_space<vmem>>) attributes {dimension_semantics = [], scalar_prefetch = 0 : i64, scratch_operands = 6 : i64, tpu.core_type = #tpu.core_type<tc>} {
    %c0 = arith.constant 0 : index
    %c0_0 = arith.constant 0 : index
    %0 = vector.load %arg0[%c0, %c0_0] : memref<392x9xf32, #tpu.memory_space<vmem>>, vector<392x9xf32>
    %c0_1 = arith.constant 0 : index
    %c0_2 = arith.constant 0 : index
    %1 = vector.load %arg1[%c0_1, %c0_2] : memref<9x8xf32, #tpu.memory_space<vmem>>, vector<9x8xf32>
    %cst = arith.constant dense<0.000000e+00> : vector<392x8xf32>
    %2 = tpu.matmul %0, %1, %cst {dimension_numbers = #tpu.dot_dimension_numbers<[1], [0], [0], [1], [0, 0, 1, 1], [], []>} : vector<392x9xf32>, vector<9x8xf32>, vector<392x8xf32> -> vector<392x8xf32>
    %c0_3 = arith.constant 0 : index
    %c0_4 = arith.constant 0 : index
    %3 = vector.load %arg2[%c0_3, %c0_4] : memref<1x8xf32, #tpu.memory_space<vmem>>, vector<1x8xf32>
    %4 = vector.broadcast %3 : vector<1x8xf32> to vector<392x8xf32>
    %5 = arith.addf %2, %4 : vector<392x8xf32>
    %cst_5 = arith.constant 0.000000e+00 : f32
    %6 = vector.broadcast %cst_5 : f32 to vector<392x8xf32>
    %7 = arith.maximumf %5, %6 : vector<392x8xf32>
    %c0_6 = arith.constant 0 : index
    %c0_7 = arith.constant 0 : index
    %8 = vector.load %arg15[%c0_6, %c0_7] : memref<392x8xf32, #tpu.memory_space<vmem>>, vector<392x8xf32>
    tpu.vector_store %arg15[%c0_6, %c0_7], %7 {strides = array<i32>} : memref<392x8xf32, #tpu.memory_space<vmem>>, vector<392x8xf32>,
    %cst_8 = arith.constant 0.000000e+00 : f32
    %9 = vector.broadcast %cst_8 : f32 to vector<8x8xf32>
    %c0_9 = arith.constant 0 : index
    %c0_10 = arith.constant 0 : index
    %10 = vector.load %arg16[%c0_9, %c0_10] : memref<98x72xf32, #tpu.memory_space<vmem>>, vector<8x8xf32>
    tpu.vector_store %arg16[%c0_9, %c0_10], %9 {strides = array<i32>} : memref<98x72xf32, #tpu.memory_space<vmem>>, vector<8x8xf32>,
    %cst_11 = arith.constant 0.000000e+00 : f32
    %11 = vector.broadcast %cst_11 : f32 to vector<6x8xf32>
    %c8 = arith.constant 8 : index
    %c0_12 = arith.constant 0 : index
    %12 = vector.load %arg16[%c8, %c0_12] : memref<98x72xf32, #tpu.memory_space<vmem>>, vector<6x8xf32>
    tpu.vector_store %arg16[%c8, %c0_12], %11 {strides = array<i32>} : memref<98x72xf32, #tpu.memory_space<vmem>>, vector<6x8xf32>,
    %cst_13 = arith.constant 0.000000e+00 : f32
    %13 = vector.broadcast %cst_13 : f32 to vector<8x8xf32>
    %c0_14 = arith.constant 0 : index
    %c8_15 = arith.constant 8 : index
    %14 = vector.load %arg16[%c0_14, %c8_15] : memref<98x72xf32, #tpu.memory_space<vmem>>, vector<8x8xf32>
    tpu.vector_store %arg16[%c0_14, %c8_15], %13 {strides = array<i32>} : memref<98x72xf32, #tpu.memory_space<vmem>>, vector<8x8xf32>,
    %cst_16 = arith.constant 0.000000e+00 : f32
    %15 = vector.broadcast %cst_16 : f32 to vector<6x8xf32>
    %c8_17 = arith.constant 8 : index
    %c8_18 = arith.constant 8 : index
    %16 = vector.load %arg16[%c8_17, %c8_18] : memref<98x72xf32, #tpu.memory_space<vmem>>, vector<6x8xf32>
    tpu.vector_store %arg16[%c8_17, %c8_18], %15 {strides = array<i32>} : memref<98x72xf32, #tpu.memory_space<vmem>>, vector<6x8xf32>,
    %cst_19 = arith.constant 0.000000e+00 : f32
    %17 = vector.broadcast %cst_19 : f32 to vector<8x8xf32>
    %c0_20 = arith.constant 0 : index
    %c16 = arith.constant 16 : index
    %18 = vector.load %arg16[%c0_20, %c16] : memref<98x72xf32, #tpu.memory_space<vmem>>, vector<8x8xf32>
    tpu.vector_store %arg16[%c0_20, %c16], %17 {strides = array<i32>} : memref<98x72xf32, #tpu.memory_space<vmem>>, vector<8x8xf32>,
    %cst_21 = arith.constant 0.000000e+00 : f32
    %19 = vector.broadcast %cst_21 : f32 to vector<6x8xf32>
    %c8_22 = arith.constant 8 : index
    %c16_23 = arith.constant 16 : index
    %20 = vector.load %arg16[%c8_22, %c16_23] : memref<98x72xf32, #tpu.memory_space<vmem>>, vector<6x8xf32>
    tpu.vector_store %arg16[%c8_22, %c16_23], %19 {strides = array<i32>} : memref<98x72xf32, #tpu.memory_space<vmem>>, vector<6x8xf32>,
    %cst_24 = arith.constant 0.000000e+00 : f32
    %21 = vector.broadcast %cst_24 : f32 to vector<2x8xf32>
    %c0_25 = arith.constant 0 : index
    %c24 = arith.constant 24 : index
    %22 = vector.load %arg16[%c0_25, %c24] : memref<98x72xf32, #tpu.memory_space<vmem>>, vector<2x8xf32>
    tpu.vector_store %arg16[%c0_25, %c24], %21 {strides = array<i32>} : memref<98x72xf32, #tpu.memory_space<vmem>>, vector<2x8xf32>,
    %cst_26 = arith.constant 0.000000e+00 : f32
    %23 = vector.broadcast %cst_26 : f32 to vector<2x8xf32>
    %c0_27 = arith.constant 0 : index
    %c48 = arith.constant 48 : index
    %24 = vector.load %arg16[%c0_27, %c48] : memref<98x72xf32, #tpu.memory_space<vmem>>, vector<2x8xf32>
    tpu.vector_store %arg16[%c0_27, %c48], %23 {strides = array<i32>} : memref<98x72xf32, #tpu.memory_space<vmem>>, vector<2x8xf32>,
    %cst_28 = arith.constant 0.000000e+00 : f32
    %25 = vector.broadcast %cst_28 : f32 to vector<2x8xf32>
    %c14 = arith.constant 14 : index
    %c0_29 = arith.constant 0 : index
    %26 = vector.load %arg16[%c14, %c0_29] : memref<98x72xf32, #tpu.memory_space<vmem>>, vector<2x8xf32>
    tpu.vector_store %arg16[%c14, %c0_29], %25 {strides = array<i32>} : memref<98x72xf32, #tpu.memory_space<vmem>>, vector<2x8xf32>,
    %cst_30 = arith.constant 0.000000e+00 : f32
    %27 = vector.broadcast %cst_30 : f32 to vector<2x8xf32>
    %c14_31 = arith.constant 14 : index
    %c24_32 = arith.constant 24 : index
    %28 = vector.load %arg16[%c14_31, %c24_32] : memref<98x72xf32, #tpu.memory_space<vmem>>, vector<2x8xf32>
    tpu.vector_store %arg16[%c14_31, %c24_32], %27 {strides = array<i32>} : memref<98x72xf32, #tpu.memory_space<vmem>>, vector<2x8xf32>,
    %cst_33 = arith.constant 0.000000e+00 : f32
    %29 = vector.broadcast %cst_33 : f32 to vector<2x8xf32>
    %c14_34 = arith.constant 14 : index
    %c48_35 = arith.constant 48 : index
    %30 = vector.load %arg16[%c14_34, %c48_35] : memref<98x72xf32, #tpu.memory_space<vmem>>, vector<2x8xf32>
    tpu.vector_store %arg16[%c14_34, %c48_35], %29 {strides = array<i32>} : memref<98x72xf32, #tpu.memory_space<vmem>>, vector<2x8xf32>,
    %cst_36 = arith.constant 0.000000e+00 : f32
    %31 = vector.broadcast %cst_36 : f32 to vector<2x8xf32>
    %c28 = arith.constant 28 : index
    %c0_37 = arith.constant 0 : index
    %32 = vector.load %arg16[%c28, %c0_37] : memref<98x72xf32, #tpu.memory_space<vmem>>, vector<2x8xf32>
    tpu.vector_store %arg16[%c28, %c0_37], %31 {strides = array<i32>} : memref<98x72xf32, #tpu.memory_space<vmem>>, vector<2x8xf32>,
    %cst_38 = arith.constant 0.000000e+00 : f32
    %33 = vector.broadcast %cst_38 : f32 to vector<2x8xf32>
    %c28_39 = arith.constant 28 : index
    %c24_40 = arith.constant 24 : index
    %34 = vector.load %arg16[%c28_39, %c24_40] : memref<98x72xf32, #tpu.memory_space<vmem>>, vector<2x8xf32>
    tpu.vector_store %arg16[%c28_39, %c24_40], %33 {strides = array<i32>} : memref<98x72xf32, #tpu.memory_space<vmem>>, vector<2x8xf32>,
    %cst_41 = arith.constant 0.000000e+00 : f32
    %35 = vector.broadcast %cst_41 : f32 to vector<2x8xf32>
    %c28_42 = arith.constant 28 : index
    %c48_43 = arith.constant 48 : index
    %36 = vector.load %arg16[%c28_42, %c48_43] : memref<98x72xf32, #tpu.memory_space<vmem>>, vector<2x8xf32>
    tpu.vector_store %arg16[%c28_42, %c48_43], %35 {strides = array<i32>} : memref<98x72xf32, #tpu.memory_space<vmem>>, vector<2x8xf32>,
    %cst_44 = arith.constant 0.000000e+00 : f32
    %37 = vector.broadcast %cst_44 : f32 to vector<2x8xf32>
    %c42 = arith.constant 42 : index
    %c0_45 = arith.constant 0 : index
    %38 = vector.load %arg16[%c42, %c0_45] : memref<98x72xf32, #tpu.memory_space<vmem>>, vector<2x8xf32>
    tpu.vector_store %arg16[%c42, %c0_45], %37 {strides = array<i32>} : memref<98x72xf32, #tpu.memory_space<vmem>>, vector<2x8xf32>,
    %cst_46 = arith.constant 0.000000e+00 : f32
    %39 = vector.broadcast %cst_46 : f32 to vector<2x8xf32>
    %c42_47 = arith.constant 42 : index
    %c24_48 = arith.constant 24 : index
    %40 = vector.load %arg16[%c42_47, %c24_48] : memref<98x72xf32, #tpu.memory_space<vmem>>, vector<2x8xf32>
    tpu.vector_store %arg16[%c42_47, %c24_48], %39 {strides = array<i32>} : memref<98x72xf32, #tpu.memory_space<vmem>>, vector<2x8xf32>,
    %cst_49 = arith.constant 0.000000e+00 : f32
    %41 = vector.broadcast %cst_49 : f32 to vector<2x8xf32>
    %c42_50 = arith.constant 42 : index
    %c48_51 = arith.constant 48 : index
    %42 = vector.load %arg16[%c42_50, %c48_51] : memref<98x72xf32, #tpu.memory_space<vmem>>, vector<2x8xf32>
    tpu.vector_store %arg16[%c42_50, %c48_51], %41 {strides = array<i32>} : memref<98x72xf32, #tpu.memory_space<vmem>>, vector<2x8xf32>,
    %cst_52 = arith.constant 0.000000e+00 : f32
    %43 = vector.broadcast %cst_52 : f32 to vector<2x8xf32>
    %c56 = arith.constant 56 : index
    %c0_53 = arith.constant 0 : index
    %44 = vector.load %arg16[%c56, %c0_53] : memref<98x72xf32, #tpu.memory_space<vmem>>, vector<2x8xf32>
    tpu.vector_store %arg16[%c56, %c0_53], %43 {strides = array<i32>} : memref<98x72xf32, #tpu.memory_space<vmem>>, vector<2x8xf32>,
    %cst_54 = arith.constant 0.000000e+00 : f32
    %45 = vector.broadcast %cst_54 : f32 to vector<2x8xf32>
    %c56_55 = arith.constant 56 : index
    %c24_56 = arith.constant 24 : index
    %46 = vector.load %arg16[%c56_55, %c24_56] : memref<98x72xf32, #tpu.memory_space<vmem>>, vector<2x8xf32>
    tpu.vector_store %arg16[%c56_55, %c24_56], %45 {strides = array<i32>} : memref<98x72xf32, #tpu.memory_space<vmem>>, vector<2x8xf32>,
    %cst_57 = arith.constant 0.000000e+00 : f32
    %47 = vector.broadcast %cst_57 : f32 to vector<2x8xf32>
    %c56_58 = arith.constant 56 : index
    %c48_59 = arith.constant 48 : index
    %48 = vector.load %arg16[%c56_58, %c48_59] : memref<98x72xf32, #tpu.memory_space<vmem>>, vector<2x8xf32>
    tpu.vector_store %arg16[%c56_58, %c48_59], %47 {strides = array<i32>} : memref<98x72xf32, #tpu.memory_space<vmem>>, vector<2x8xf32>,
    %cst_60 = arith.constant 0.000000e+00 : f32
    %49 = vector.broadcast %cst_60 : f32 to vector<2x8xf32>
    %c70 = arith.constant 70 : index
    %c0_61 = arith.constant 0 : index
    %50 = vector.load %arg16[%c70, %c0_61] : memref<98x72xf32, #tpu.memory_space<vmem>>, vector<2x8xf32>
    tpu.vector_store %arg16[%c70, %c0_61], %49 {strides = array<i32>} : memref<98x72xf32, #tpu.memory_space<vmem>>, vector<2x8xf32>,
    %cst_62 = arith.constant 0.000000e+00 : f32
    %51 = vector.broadcast %cst_62 : f32 to vector<2x8xf32>
    %c70_63 = arith.constant 70 : index
    %c24_64 = arith.constant 24 : index
    %52 = vector.load %arg16[%c70_63, %c24_64] : memref<98x72xf32, #tpu.memory_space<vmem>>, vector<2x8xf32>
    tpu.vector_store %arg16[%c70_63, %c24_64], %51 {strides = array<i32>} : memref<98x72xf32, #tpu.memory_space<vmem>>, vector<2x8xf32>,
    %cst_65 = arith.constant 0.000000e+00 : f32
    %53 = vector.broadcast %cst_65 : f32 to vector<2x8xf32>
    %c70_66 = arith.constant 70 : index
    %c48_67 = arith.constant 48 : index
    %54 = vector.load %arg16[%c70_66, %c48_67] : memref<98x72xf32, #tpu.memory_space<vmem>>, vector<2x8xf32>
    tpu.vector_store %arg16[%c70_66, %c48_67], %53 {strides = array<i32>} : memref<98x72xf32, #tpu.memory_space<vmem>>, vector<2x8xf32>,
    %cst_68 = arith.constant 0.000000e+00 : f32
    %55 = vector.broadcast %cst_68 : f32 to vector<2x8xf32>
    %c84 = arith.constant 84 : index
    %c0_69 = arith.constant 0 : index
    %56 = vector.load %arg16[%c84, %c0_69] : memref<98x72xf32, #tpu.memory_space<vmem>>, vector<2x8xf32>
    tpu.vector_store %arg16[%c84, %c0_69], %55 {strides = array<i32>} : memref<98x72xf32, #tpu.memory_space<vmem>>, vector<2x8xf32>,
    %cst_70 = arith.constant 0.000000e+00 : f32
    %57 = vector.broadcast %cst_70 : f32 to vector<2x8xf32>
    %c84_71 = arith.constant 84 : index
    %c24_72 = arith.constant 24 : index
    %58 = vector.load %arg16[%c84_71, %c24_72] : memref<98x72xf32, #tpu.memory_space<vmem>>, vector<2x8xf32>
    tpu.vector_store %arg16[%c84_71, %c24_72], %57 {strides = array<i32>} : memref<98x72xf32, #tpu.memory_space<vmem>>, vector<2x8xf32>,
    %cst_73 = arith.constant 0.000000e+00 : f32
    %59 = vector.broadcast %cst_73 : f32 to vector<2x8xf32>
    %c84_74 = arith.constant 84 : index
    %c48_75 = arith.constant 48 : index
    %60 = vector.load %arg16[%c84_74, %c48_75] : memref<98x72xf32, #tpu.memory_space<vmem>>, vector<2x8xf32>
    tpu.vector_store %arg16[%c84_74, %c48_75], %59 {strides = array<i32>} : memref<98x72xf32, #tpu.memory_space<vmem>>, vector<2x8xf32>,
    %c22 = arith.constant 22 : index
    %c0_76 = arith.constant 0 : index
    %61 = vector.load %arg15[%c22, %c0_76] : memref<392x8xf32, #tpu.memory_space<vmem>>, vector<6x8xf32>
    %c2 = arith.constant 2 : index
    %c24_77 = arith.constant 24 : index
    %62 = vector.load %arg16[%c2, %c24_77] : memref<98x72xf32, #tpu.memory_space<vmem>>, vector<6x8xf32>
    tpu.vector_store %arg16[%c2, %c24_77], %61 {strides = array<i32>} : memref<98x72xf32, #tpu.memory_space<vmem>>, vector<6x8xf32>,
    %c8_78 = arith.constant 8 : index
    %c0_79 = arith.constant 0 : index
    %63 = vector.load %arg15[%c8_78, %c0_79] : memref<392x8xf32, #tpu.memory_space<vmem>>, vector<6x8xf32>
    %c8_80 = arith.constant 8 : index
    %c24_81 = arith.constant 24 : index
    %64 = vector.load %arg16[%c8_80, %c24_81] : memref<98x72xf32, #tpu.memory_space<vmem>>, vector<6x8xf32>
    tpu.vector_store %arg16[%c8_80, %c24_81], %63 {strides = array<i32>} : memref<98x72xf32, #tpu.memory_space<vmem>>, vector<6x8xf32>,
    %c0_82 = arith.constant 0 : index
    %c0_83 = arith.constant 0 : index
    %65 = vector.load %arg15[%c0_82, %c0_83] : memref<392x8xf32, #tpu.memory_space<vmem>>, vector<8x8xf32>
    %c0_84 = arith.constant 0 : index
    %c32 = arith.constant 32 : index
    %66 = vector.load %arg16[%c0_84, %c32] : memref<98x72xf32, #tpu.memory_space<vmem>>, vector<8x8xf32>
    tpu.vector_store %arg16[%c0_84, %c32], %65 {strides = array<i32>} : memref<98x72xf32, #tpu.memory_space<vmem>>, vector<8x8xf32>,
    %c16_85 = arith.constant 16 : index
    %c0_86 = arith.constant 0 : index
    %67 = vector.load %arg15[%c16_85, %c0_86] : memref<392x8xf32, #tpu.memory_space<vmem>>, vector<6x8xf32>
    %c8_87 = arith.constant 8 : index
    %c32_88 = arith.constant 32 : index
    %68 = vector.load %arg16[%c8_87, %c32_88] : memref<98x72xf32, #tpu.memory_space<vmem>>, vector<6x8xf32>
    tpu.vector_store %arg16[%c8_87, %c32_88], %67 {strides = array<i32>} : memref<98x72xf32, #tpu.memory_space<vmem>>, vector<6x8xf32>,
    %c8_89 = arith.constant 8 : index
    %c0_90 = arith.constant 0 : index
    %69 = vector.load %arg15[%c8_89, %c0_90] : memref<392x8xf32, #tpu.memory_space<vmem>>, vector<8x8xf32>
    %c0_91 = arith.constant 0 : index
    %c40 = arith.constant 40 : index
    %70 = vector.load %arg16[%c0_91, %c40] : memref<98x72xf32, #tpu.memory_space<vmem>>, vector<8x8xf32>
    tpu.vector_store %arg16[%c0_91, %c40], %69 {strides = array<i32>} : memref<98x72xf32, #tpu.memory_space<vmem>>, vector<8x8xf32>,
    %c22_92 = arith.constant 22 : index
    %c0_93 = arith.constant 0 : index
    %71 = vector.load %arg15[%c22_92, %c0_93] : memref<392x8xf32, #tpu.memory_space<vmem>>, vector<6x8xf32>
    %c8_94 = arith.constant 8 : index
    %c40_95 = arith.constant 40 : index
    %72 = vector.load %arg16[%c8_94, %c40_95] : memref<98x72xf32, #tpu.memory_space<vmem>>, vector<6x8xf32>
    tpu.vector_store %arg16[%c8_94, %c40_95], %71 {strides = array<i32>} : memref<98x72xf32, #tpu.memory_space<vmem>>, vector<6x8xf32>,
    %c50 = arith.constant 50 : index
    %c0_96 = arith.constant 0 : index
    %73 = vector.load %arg15[%c50, %c0_96] : memref<392x8xf32, #tpu.memory_space<vmem>>, vector<6x8xf32>
    %c2_97 = arith.constant 2 : index
    %c48_98 = arith.constant 48 : index
    %74 = vector.load %arg16[%c2_97, %c48_98] : memref<98x72xf32, #tpu.memory_space<vmem>>, vector<6x8xf32>
    tpu.vector_store %arg16[%c2_97, %c48_98], %73 {strides = array<i32>} : memref<98x72xf32, #tpu.memory_space<vmem>>, vector<6x8xf32>,
    %c36 = arith.constant 36 : index
    %c0_99 = arith.constant 0 : index
    %75 = vector.load %arg15[%c36, %c0_99] : memref<392x8xf32, #tpu.memory_space<vmem>>, vector<6x8xf32>
    %c8_100 = arith.constant 8 : index
    %c48_101 = arith.constant 48 : index
    %76 = vector.load %arg16[%c8_100, %c48_101] : memref<98x72xf32, #tpu.memory_space<vmem>>, vector<6x8xf32>
    tpu.vector_store %arg16[%c8_100, %c48_101], %75 {strides = array<i32>} : memref<98x72xf32, #tpu.memory_space<vmem>>, vector<6x8xf32>,
    %c28_102 = arith.constant 28 : index
    %c0_103 = arith.constant 0 : index
    %77 = vector.load %arg15[%c28_102, %c0_103] : memref<392x8xf32, #tpu.memory_space<vmem>>, vector<8x8xf32>
    %c0_104 = arith.constant 0 : index
    %c56_105 = arith.constant 56 : index
    %78 = vector.load %arg16[%c0_104, %c56_105] : memref<98x72xf32, #tpu.memory_space<vmem>>, vector<8x8xf32>
    tpu.vector_store %arg16[%c0_104, %c56_105], %77 {strides = array<i32>} : memref<98x72xf32, #tpu.memory_space<vmem>>, vector<8x8xf32>,
    %c44 = arith.constant 44 : index
    %c0_106 = arith.constant 0 : index
    %79 = vector.load %arg15[%c44, %c0_106] : memref<392x8xf32, #tpu.memory_space<vmem>>, vector<6x8xf32>
    %c8_107 = arith.constant 8 : index
    %c56_108 = arith.constant 56 : index
    %80 = vector.load %arg16[%c8_107, %c56_108] : memref<98x72xf32, #tpu.memory_space<vmem>>, vector<6x8xf32>
    tpu.vector_store %arg16[%c8_107, %c56_108], %79 {strides = array<i32>} : memref<98x72xf32, #tpu.memory_space<vmem>>, vector<6x8xf32>,
    %c36_109 = arith.constant 36 : index
    %c0_110 = arith.constant 0 : index
    %81 = vector.load %arg15[%c36_109, %c0_110] : memref<392x8xf32, #tpu.memory_space<vmem>>, vector<8x8xf32>
    %c0_111 = arith.constant 0 : index
    %c64 = arith.constant 64 : index
    %82 = vector.load %arg16[%c0_111, %c64] : memref<98x72xf32, #tpu.memory_space<vmem>>, vector<8x8xf32>
    tpu.vector_store %arg16[%c0_111, %c64], %81 {strides = array<i32>} : memref<98x72xf32, #tpu.memory_space<vmem>>, vector<8x8xf32>,
    %c50_112 = arith.constant 50 : index
    %c0_113 = arith.constant 0 : index
    %83 = vector.load %arg15[%c50_112, %c0_113] : memref<392x8xf32, #tpu.memory_space<vmem>>, vector<6x8xf32>
    %c8_114 = arith.constant 8 : index
    %c64_115 = arith.constant 64 : index
    %84 = vector.load %arg16[%c8_114, %c64_115] : memref<98x72xf32, #tpu.memory_space<vmem>>, vector<6x8xf32>
    tpu.vector_store %arg16[%c8_114, %c64_115], %83 {strides = array<i32>} : memref<98x72xf32, #tpu.memory_space<vmem>>, vector<6x8xf32>,
    %c50_116 = arith.constant 50 : index
    %c0_117 = arith.constant 0 : index
    %85 = vector.load %arg15[%c50_116, %c0_117] : memref<392x8xf32, #tpu.memory_space<vmem>>, vector<6x8xf32>
    %c16_118 = arith.constant 16 : index
    %c0_119 = arith.constant 0 : index
    %86 = vector.load %arg16[%c16_118, %c0_119] : memref<98x72xf32, #tpu.memory_space<vmem>>, vector<6x8xf32>
    tpu.vector_store %arg16[%c16_118, %c0_119], %85 {strides = array<i32>} : memref<98x72xf32, #tpu.memory_space<vmem>>, vector<6x8xf32>,
    %c36_120 = arith.constant 36 : index
    %c0_121 = arith.constant 0 : index
    %87 = vector.load %arg15[%c36_120, %c0_121] : memref<392x8xf32, #tpu.memory_space<vmem>>, vector<6x8xf32>
    %c22_122 = arith.constant 22 : index
    %c0_123 = arith.constant 0 : index
    %88 = vector.load %arg16[%c22_122, %c0_123] : memref<98x72xf32, #tpu.memory_space<vmem>>, vector<6x8xf32>
    tpu.vector_store %arg16[%c22_122, %c0_123], %87 {strides = array<i32>} : memref<98x72xf32, #tpu.memory_space<vmem>>, vector<6x8xf32>,
    %c28_124 = arith.constant 28 : index
    %c0_125 = arith.constant 0 : index
    %89 = vector.load %arg15[%c28_124, %c0_125] : memref<392x8xf32, #tpu.memory_space<vmem>>, vector<8x8xf32>
    %c14_126 = arith.constant 14 : index
    %c8_127 = arith.constant 8 : index
    %90 = vector.load %arg16[%c14_126, %c8_127] : memref<98x72xf32, #tpu.memory_space<vmem>>, vector<8x8xf32>
    tpu.vector_store %arg16[%c14_126, %c8_127], %89 {strides = array<i32>} : memref<98x72xf32, #tpu.memory_space<vmem>>, vector<8x8xf32>,
    %c44_128 = arith.constant 44 : index
    %c0_129 = arith.constant 0 : index
    %91 = vector.load %arg15[%c44_128, %c0_129] : memref<392x8xf32, #tpu.memory_space<vmem>>, vector<6x8xf32>
    %c22_130 = arith.constant 22 : index
    %c8_131 = arith.constant 8 : index
    %92 = vector.load %arg16[%c22_130, %c8_131] : memref<98x72xf32, #tpu.memory_space<vmem>>, vector<6x8xf32>
    tpu.vector_store %arg16[%c22_130, %c8_131], %91 {strides = array<i32>} : memref<98x72xf32, #tpu.memory_space<vmem>>, vector<6x8xf32>,
    %c36_132 = arith.constant 36 : index
    %c0_133 = arith.constant 0 : index
    %93 = vector.load %arg15[%c36_132, %c0_133] : memref<392x8xf32, #tpu.memory_space<vmem>>, vector<8x8xf32>
    %c14_134 = arith.constant 14 : index
    %c16_135 = arith.constant 16 : index
    %94 = vector.load %arg16[%c14_134, %c16_135] : memref<98x72xf32, #tpu.memory_space<vmem>>, vector<8x8xf32>
    tpu.vector_store %arg16[%c14_134, %c16_135], %93 {strides = array<i32>} : memref<98x72xf32, #tpu.memory_space<vmem>>, vector<8x8xf32>,
    %c50_136 = arith.constant 50 : index
    %c0_137 = arith.constant 0 : index
    %95 = vector.load %arg15[%c50_136, %c0_137] : memref<392x8xf32, #tpu.memory_space<vmem>>, vector<6x8xf32>
    %c22_138 = arith.constant 22 : index
    %c16_139 = arith.constant 16 : index
    %96 = vector.load %arg16[%c22_138, %c16_139] : memref<98x72xf32, #tpu.memory_space<vmem>>, vector<6x8xf32>
    tpu.vector_store %arg16[%c22_138, %c16_139], %95 {strides = array<i32>} : memref<98x72xf32, #tpu.memory_space<vmem>>, vector<6x8xf32>,
    %c78 = arith.constant 78 : index
    %c0_140 = arith.constant 0 : index
    %97 = vector.load %arg15[%c78, %c0_140] : memref<392x8xf32, #tpu.memory_space<vmem>>, vector<6x8xf32>
    %c16_141 = arith.constant 16 : index
    %c24_142 = arith.constant 24 : index
    %98 = vector.load %arg16[%c16_141, %c24_142] : memref<98x72xf32, #tpu.memory_space<vmem>>, vector<6x8xf32>
    tpu.vector_store %arg16[%c16_141, %c24_142], %97 {strides = array<i32>} : memref<98x72xf32, #tpu.memory_space<vmem>>, vector<6x8xf32>,
    %c64_143 = arith.constant 64 : index
    %c0_144 = arith.constant 0 : index
    %99 = vector.load %arg15[%c64_143, %c0_144] : memref<392x8xf32, #tpu.memory_space<vmem>>, vector<6x8xf32>
    %c22_145 = arith.constant 22 : index
    %c24_146 = arith.constant 24 : index
    %100 = vector.load %arg16[%c22_145, %c24_146] : memref<98x72xf32, #tpu.memory_space<vmem>>, vector<6x8xf32>
    tpu.vector_store %arg16[%c22_145, %c24_146], %99 {strides = array<i32>} : memref<98x72xf32, #tpu.memory_space<vmem>>, vector<6x8xf32>,
    %c56_147 = arith.constant 56 : index
    %c0_148 = arith.constant 0 : index
    %101 = vector.load %arg15[%c56_147, %c0_148] : memref<392x8xf32, #tpu.memory_space<vmem>>, vector<8x8xf32>
    %c14_149 = arith.constant 14 : index
    %c32_150 = arith.constant 32 : index
    %102 = vector.load %arg16[%c14_149, %c32_150] : memref<98x72xf32, #tpu.memory_space<vmem>>, vector<8x8xf32>
    tpu.vector_store %arg16[%c14_149, %c32_150], %101 {strides = array<i32>} : memref<98x72xf32, #tpu.memory_space<vmem>>, vector<8x8xf32>,
    %c72 = arith.constant 72 : index
    %c0_151 = arith.constant 0 : index
    %103 = vector.load %arg15[%c72, %c0_151] : memref<392x8xf32, #tpu.memory_space<vmem>>, vector<6x8xf32>
    %c22_152 = arith.constant 22 : index
    %c32_153 = arith.constant 32 : index
    %104 = vector.load %arg16[%c22_152, %c32_153] : memref<98x72xf32, #tpu.memory_space<vmem>>, vector<6x8xf32>
    tpu.vector_store %arg16[%c22_152, %c32_153], %103 {strides = array<i32>} : memref<98x72xf32, #tpu.memory_space<vmem>>, vector<6x8xf32>,
    %c64_154 = arith.constant 64 : index
    %c0_155 = arith.constant 0 : index
    %105 = vector.load %arg15[%c64_154, %c0_155] : memref<392x8xf32, #tpu.memory_space<vmem>>, vector<8x8xf32>
    %c14_156 = arith.constant 14 : index
    %c40_157 = arith.constant 40 : index
    %106 = vector.load %arg16[%c14_156, %c40_157] : memref<98x72xf32, #tpu.memory_space<vmem>>, vector<8x8xf32>
    tpu.vector_store %arg16[%c14_156, %c40_157], %105 {strides = array<i32>} : memref<98x72xf32, #tpu.memory_space<vmem>>, vector<8x8xf32>,
    %c78_158 = arith.constant 78 : index
    %c0_159 = arith.constant 0 : index
    %107 = vector.load %arg15[%c78_158, %c0_159] : memref<392x8xf32, #tpu.memory_space<vmem>>, vector<6x8xf32>
    %c22_160 = arith.constant 22 : index
    %c40_161 = arith.constant 40 : index
    %108 = vector.load %arg16[%c22_160, %c40_161] : memref<98x72xf32, #tpu.memory_space<vmem>>, vector<6x8xf32>
    tpu.vector_store %arg16[%c22_160, %c40_161], %107 {strides = array<i32>} : memref<98x72xf32, #tpu.memory_space<vmem>>, vector<6x8xf32>,
    %c106 = arith.constant 106 : index
    %c0_162 = arith.constant 0 : index
    %109 = vector.load %arg15[%c106, %c0_162] : memref<392x8xf32, #tpu.memory_space<vmem>>, vector<6x8xf32>
    %c16_163 = arith.constant 16 : index
    %c48_164 = arith.constant 48 : index
    %110 = vector.load %arg16[%c16_163, %c48_164] : memref<98x72xf32, #tpu.memory_space<vmem>>, vector<6x8xf32>
    tpu.vector_store %arg16[%c16_163, %c48_164], %109 {strides = array<i32>} : memref<98x72xf32, #tpu.memory_space<vmem>>, vector<6x8xf32>,
    %c92 = arith.constant 92 : index
    %c0_165 = arith.constant 0 : index
    %111 = vector.load %arg15[%c92, %c0_165] : memref<392x8xf32, #tpu.memory_space<vmem>>, vector<6x8xf32>
    %c22_166 = arith.constant 22 : index
    %c48_167 = arith.constant 48 : index
    %112 = vector.load %arg16[%c22_166, %c48_167] : memref<98x72xf32, #tpu.memory_space<vmem>>, vector<6x8xf32>
    tpu.vector_store %arg16[%c22_166, %c48_167], %111 {strides = array<i32>} : memref<98x72xf32, #tpu.memory_space<vmem>>, vector<6x8xf32>,
    %c84_168 = arith.constant 84 : index
    %c0_169 = arith.constant 0 : index
    %113 = vector.load %arg15[%c84_168, %c0_169] : memref<392x8xf32, #tpu.memory_space<vmem>>, vector<8x8xf32>
    %c14_170 = arith.constant 14 : index
    %c56_171 = arith.constant 56 : index
    %114 = vector.load %arg16[%c14_170, %c56_171] : memref<98x72xf32, #tpu.memory_space<vmem>>, vector<8x8xf32>
    tpu.vector_store %arg16[%c14_170, %c56_171], %113 {strides = array<i32>} : memref<98x72xf32, #tpu.memory_space<vmem>>, vector<8x8xf32>,
    %c100 = arith.constant 100 : index
    %c0_172 = arith.constant 0 : index
    %115 = vector.load %arg15[%c100, %c0_172] : memref<392x8xf32, #tpu.memory_space<vmem>>, vector<6x8xf32>
    %c22_173 = arith.constant 22 : index
    %c56_174 = arith.constant 56 : index
    %116 = vector.load %arg16[%c22_173, %c56_174] : memref<98x72xf32, #tpu.memory_space<vmem>>, vector<6x8xf32>
    tpu.vector_store %arg16[%c22_173, %c56_174], %115 {strides = array<i32>} : memref<98x72xf32, #tpu.memory_space<vmem>>, vector<6x8xf32>,
    %c92_175 = arith.constant 92 : index
    %c0_176 = arith.constant 0 : index
    %117 = vector.load %arg15[%c92_175, %c0_176] : memref<392x8xf32, #tpu.memory_space<vmem>>, vector<8x8xf32>
    %c14_177 = arith.constant 14 : index
    %c64_178 = arith.constant 64 : index
    %118 = vector.load %arg16[%c14_177, %c64_178] : memref<98x72xf32, #tpu.memory_space<vmem>>, vector<8x8xf32>
    tpu.vector_store %arg16[%c14_177, %c64_178], %117 {strides = array<i32>} : memref<98x72xf32, #tpu.memory_space<vmem>>, vector<8x8xf32>,
    %c106_179 = arith.constant 106 : index
    %c0_180 = arith.constant 0 : index
    %119 = vector.load %arg15[%c106_179, %c0_180] : memref<392x8xf32, #tpu.memory_space<vmem>>, vector<6x8xf32>
    %c22_181 = arith.constant 22 : index
    %c64_182 = arith.constant 64 : index
    %120 = vector.load %arg16[%c22_181, %c64_182] : memref<98x72xf32, #tpu.memory_space<vmem>>, vector<6x8xf32>
    tpu.vector_store %arg16[%c22_181, %c64_182], %119 {strides = array<i32>} : memref<98x72xf32, #tpu.memory_space<vmem>>, vector<6x8xf32>,
    %c106_183 = arith.constant 106 : index
    %c0_184 = arith.constant 0 : index
    %121 = vector.load %arg15[%c106_183, %c0_184] : memref<392x8xf32, #tpu.memory_space<vmem>>, vector<6x8xf32>
    %c30 = arith.constant 30 : index
    %c0_185 = arith.constant 0 : index
    %122 = vector.load %arg16[%c30, %c0_185] : memref<98x72xf32, #tpu.memory_space<vmem>>, vector<6x8xf32>
    tpu.vector_store %arg16[%c30, %c0_185], %121 {strides = array<i32>} : memref<98x72xf32, #tpu.memory_space<vmem>>, vector<6x8xf32>,
    %c92_186 = arith.constant 92 : index
    %c0_187 = arith.constant 0 : index
    %123 = vector.load %arg15[%c92_186, %c0_187] : memref<392x8xf32, #tpu.memory_space<vmem>>, vector<6x8xf32>
    %c36_188 = arith.constant 36 : index
    %c0_189 = arith.constant 0 : index
    %124 = vector.load %arg16[%c36_188, %c0_189] : memref<98x72xf32, #tpu.memory_space<vmem>>, vector<6x8xf32>
    tpu.vector_store %arg16[%c36_188, %c0_189], %123 {strides = array<i32>} : memref<98x72xf32, #tpu.memory_space<vmem>>, vector<6x8xf32>,
    %c84_190 = arith.constant 84 : index
    %c0_191 = arith.constant 0 : index
    %125 = vector.load %arg15[%c84_190, %c0_191] : memref<392x8xf32, #tpu.memory_space<vmem>>, vector<8x8xf32>
    %c28_192 = arith.constant 28 : index
    %c8_193 = arith.constant 8 : index
    %126 = vector.load %arg16[%c28_192, %c8_193] : memref<98x72xf32, #tpu.memory_space<vmem>>, vector<8x8xf32>
    tpu.vector_store %arg16[%c28_192, %c8_193], %125 {strides = array<i32>} : memref<98x72xf32, #tpu.memory_space<vmem>>, vector<8x8xf32>,
    %c100_194 = arith.constant 100 : index
    %c0_195 = arith.constant 0 : index
    %127 = vector.load %arg15[%c100_194, %c0_195] : memref<392x8xf32, #tpu.memory_space<vmem>>, vector<6x8xf32>
    %c36_196 = arith.constant 36 : index
    %c8_197 = arith.constant 8 : index
    %128 = vector.load %arg16[%c36_196, %c8_197] : memref<98x72xf32, #tpu.memory_space<vmem>>, vector<6x8xf32>
    tpu.vector_store %arg16[%c36_196, %c8_197], %127 {strides = array<i32>} : memref<98x72xf32, #tpu.memory_space<vmem>>, vector<6x8xf32>,
    %c92_198 = arith.constant 92 : index
    %c0_199 = arith.constant 0 : index
    %129 = vector.load %arg15[%c92_198, %c0_199] : memref<392x8xf32, #tpu.memory_space<vmem>>, vector<8x8xf32>
    %c28_200 = arith.constant 28 : index
    %c16_201 = arith.constant 16 : index
    %130 = vector.load %arg16[%c28_200, %c16_201] : memref<98x72xf32, #tpu.memory_space<vmem>>, vector<8x8xf32>
    tpu.vector_store %arg16[%c28_200, %c16_201], %129 {strides = array<i32>} : memref<98x72xf32, #tpu.memory_space<vmem>>, vector<8x8xf32>,
    %c106_202 = arith.constant 106 : index
    %c0_203 = arith.constant 0 : index
    %131 = vector.load %arg15[%c106_202, %c0_203] : memref<392x8xf32, #tpu.memory_space<vmem>>, vector<6x8xf32>
    %c36_204 = arith.constant 36 : index
    %c16_205 = arith.constant 16 : index
    %132 = vector.load %arg16[%c36_204, %c16_205] : memref<98x72xf32, #tpu.memory_space<vmem>>, vector<6x8xf32>
    tpu.vector_store %arg16[%c36_204, %c16_205], %131 {strides = array<i32>} : memref<98x72xf32, #tpu.memory_space<vmem>>, vector<6x8xf32>,
    %c134 = arith.constant 134 : index
    %c0_206 = arith.constant 0 : index
    %133 = vector.load %arg15[%c134, %c0_206] : memref<392x8xf32, #tpu.memory_space<vmem>>, vector<6x8xf32>
    %c30_207 = arith.constant 30 : index
    %c24_208 = arith.constant 24 : index
    %134 = vector.load %arg16[%c30_207, %c24_208] : memref<98x72xf32, #tpu.memory_space<vmem>>, vector<6x8xf32>
    tpu.vector_store %arg16[%c30_207, %c24_208], %133 {strides = array<i32>} : memref<98x72xf32, #tpu.memory_space<vmem>>, vector<6x8xf32>,
    %c120 = arith.constant 120 : index
    %c0_209 = arith.constant 0 : index
    %135 = vector.load %arg15[%c120, %c0_209] : memref<392x8xf32, #tpu.memory_space<vmem>>, vector<6x8xf32>
    %c36_210 = arith.constant 36 : index
    %c24_211 = arith.constant 24 : index
    %136 = vector.load %arg16[%c36_210, %c24_211] : memref<98x72xf32, #tpu.memory_space<vmem>>, vector<6x8xf32>
    tpu.vector_store %arg16[%c36_210, %c24_211], %135 {strides = array<i32>} : memref<98x72xf32, #tpu.memory_space<vmem>>, vector<6x8xf32>,
    %c112 = arith.constant 112 : index
    %c0_212 = arith.constant 0 : index
    %137 = vector.load %arg15[%c112, %c0_212] : memref<392x8xf32, #tpu.memory_space<vmem>>, vector<8x8xf32>
    %c28_213 = arith.constant 28 : index
    %c32_214 = arith.constant 32 : index
    %138 = vector.load %arg16[%c28_213, %c32_214] : memref<98x72xf32, #tpu.memory_space<vmem>>, vector<8x8xf32>
    tpu.vector_store %arg16[%c28_213, %c32_214], %137 {strides = array<i32>} : memref<98x72xf32, #tpu.memory_space<vmem>>, vector<8x8xf32>,
    %c128 = arith.constant 128 : index
    %c0_215 = arith.constant 0 : index
    %139 = vector.load %arg15[%c128, %c0_215] : memref<392x8xf32, #tpu.memory_space<vmem>>, vector<6x8xf32>
    %c36_216 = arith.constant 36 : index
    %c32_217 = arith.constant 32 : index
    %140 = vector.load %arg16[%c36_216, %c32_217] : memref<98x72xf32, #tpu.memory_space<vmem>>, vector<6x8xf32>
    tpu.vector_store %arg16[%c36_216, %c32_217], %139 {strides = array<i32>} : memref<98x72xf32, #tpu.memory_space<vmem>>, vector<6x8xf32>,
    %c120_218 = arith.constant 120 : index
    %c0_219 = arith.constant 0 : index
    %141 = vector.load %arg15[%c120_218, %c0_219] : memref<392x8xf32, #tpu.memory_space<vmem>>, vector<8x8xf32>
    %c28_220 = arith.constant 28 : index
    %c40_221 = arith.constant 40 : index
    %142 = vector.load %arg16[%c28_220, %c40_221] : memref<98x72xf32, #tpu.memory_space<vmem>>, vector<8x8xf32>
    tpu.vector_store %arg16[%c28_220, %c40_221], %141 {strides = array<i32>} : memref<98x72xf32, #tpu.memory_space<vmem>>, vector<8x8xf32>,
    %c134_222 = arith.constant 134 : index
    %c0_223 = arith.constant 0 : index
    %143 = vector.load %arg15[%c134_222, %c0_223] : memref<392x8xf32, #tpu.memory_space<vmem>>, vector<6x8xf32>
    %c36_224 = arith.constant 36 : index
    %c40_225 = arith.constant 40 : index
    %144 = vector.load %arg16[%c36_224, %c40_225] : memref<98x72xf32, #tpu.memory_space<vmem>>, vector<6x8xf32>
    tpu.vector_store %arg16[%c36_224, %c40_225], %143 {strides = array<i32>} : memref<98x72xf32, #tpu.memory_space<vmem>>, vector<6x8xf32>,
    %c162 = arith.constant 162 : index
    %c0_226 = arith.constant 0 : index
    %145 = vector.load %arg15[%c162, %c0_226] : memref<392x8xf32, #tpu.memory_space<vmem>>, vector<6x8xf32>
    %c30_227 = arith.constant 30 : index
    %c48_228 = arith.constant 48 : index
    %146 = vector.load %arg16[%c30_227, %c48_228] : memref<98x72xf32, #tpu.memory_space<vmem>>, vector<6x8xf32>
    tpu.vector_store %arg16[%c30_227, %c48_228], %145 {strides = array<i32>} : memref<98x72xf32, #tpu.memory_space<vmem>>, vector<6x8xf32>,
    %c148 = arith.constant 148 : index
    %c0_229 = arith.constant 0 : index
    %147 = vector.load %arg15[%c148, %c0_229] : memref<392x8xf32, #tpu.memory_space<vmem>>, vector<6x8xf32>
    %c36_230 = arith.constant 36 : index
    %c48_231 = arith.constant 48 : index
    %148 = vector.load %arg16[%c36_230, %c48_231] : memref<98x72xf32, #tpu.memory_space<vmem>>, vector<6x8xf32>
    tpu.vector_store %arg16[%c36_230, %c48_231], %147 {strides = array<i32>} : memref<98x72xf32, #tpu.memory_space<vmem>>, vector<6x8xf32>,
    %c140 = arith.constant 140 : index
    %c0_232 = arith.constant 0 : index
    %149 = vector.load %arg15[%c140, %c0_232] : memref<392x8xf32, #tpu.memory_space<vmem>>, vector<8x8xf32>
    %c28_233 = arith.constant 28 : index
    %c56_234 = arith.constant 56 : index
    %150 = vector.load %arg16[%c28_233, %c56_234] : memref<98x72xf32, #tpu.memory_space<vmem>>, vector<8x8xf32>
    tpu.vector_store %arg16[%c28_233, %c56_234], %149 {strides = array<i32>} : memref<98x72xf32, #tpu.memory_space<vmem>>, vector<8x8xf32>,
    %c156 = arith.constant 156 : index
    %c0_235 = arith.constant 0 : index
    %151 = vector.load %arg15[%c156, %c0_235] : memref<392x8xf32, #tpu.memory_space<vmem>>, vector<6x8xf32>
    %c36_236 = arith.constant 36 : index
    %c56_237 = arith.constant 56 : index
    %152 = vector.load %arg16[%c36_236, %c56_237] : memref<98x72xf32, #tpu.memory_space<vmem>>, vector<6x8xf32>
    tpu.vector_store %arg16[%c36_236, %c56_237], %151 {strides = array<i32>} : memref<98x72xf32, #tpu.memory_space<vmem>>, vector<6x8xf32>,
    %c148_238 = arith.constant 148 : index
    %c0_239 = arith.constant 0 : index
    %153 = vector.load %arg15[%c148_238, %c0_239] : memref<392x8xf32, #tpu.memory_space<vmem>>, vector<8x8xf32>
    %c28_240 = arith.constant 28 : index
    %c64_241 = arith.constant 64 : index
    %154 = vector.load %arg16[%c28_240, %c64_241] : memref<98x72xf32, #tpu.memory_space<vmem>>, vector<8x8xf32>
    tpu.vector_store %arg16[%c28_240, %c64_241], %153 {strides = array<i32>} : memref<98x72xf32, #tpu.memory_space<vmem>>, vector<8x8xf32>,
    %c162_242 = arith.constant 162 : index
    %c0_243 = arith.constant 0 : index
    %155 = vector.load %arg15[%c162_242, %c0_243] : memref<392x8xf32, #tpu.memory_space<vmem>>, vector<6x8xf32>
    %c36_244 = arith.constant 36 : index
    %c64_245 = arith.constant 64 : index
    %156 = vector.load %arg16[%c36_244, %c64_245] : memref<98x72xf32, #tpu.memory_space<vmem>>, vector<6x8xf32>
    tpu.vector_store %arg16[%c36_244, %c64_245], %155 {strides = array<i32>} : memref<98x72xf32, #tpu.memory_space<vmem>>, vector<6x8xf32>,
    %c162_246 = arith.constant 162 : index
    %c0_247 = arith.constant 0 : index
    %157 = vector.load %arg15[%c162_246, %c0_247] : memref<392x8xf32, #tpu.memory_space<vmem>>, vector<6x8xf32>
    %c44_248 = arith.constant 44 : index
    %c0_249 = arith.constant 0 : index
    %158 = vector.load %arg16[%c44_248, %c0_249] : memref<98x72xf32, #tpu.memory_space<vmem>>, vector<6x8xf32>
    tpu.vector_store %arg16[%c44_248, %c0_249], %157 {strides = array<i32>} : memref<98x72xf32, #tpu.memory_space<vmem>>, vector<6x8xf32>,
    %c148_250 = arith.constant 148 : index
    %c0_251 = arith.constant 0 : index
    %159 = vector.load %arg15[%c148_250, %c0_251] : memref<392x8xf32, #tpu.memory_space<vmem>>, vector<6x8xf32>
    %c50_252 = arith.constant 50 : index
    %c0_253 = arith.constant 0 : index
    %160 = vector.load %arg16[%c50_252, %c0_253] : memref<98x72xf32, #tpu.memory_space<vmem>>, vector<6x8xf32>
    tpu.vector_store %arg16[%c50_252, %c0_253], %159 {strides = array<i32>} : memref<98x72xf32, #tpu.memory_space<vmem>>, vector<6x8xf32>,
    %c140_254 = arith.constant 140 : index
    %c0_255 = arith.constant 0 : index
    %161 = vector.load %arg15[%c140_254, %c0_255] : memref<392x8xf32, #tpu.memory_space<vmem>>, vector<8x8xf32>
    %c42_256 = arith.constant 42 : index
    %c8_257 = arith.constant 8 : index
    %162 = vector.load %arg16[%c42_256, %c8_257] : memref<98x72xf32, #tpu.memory_space<vmem>>, vector<8x8xf32>
    tpu.vector_store %arg16[%c42_256, %c8_257], %161 {strides = array<i32>} : memref<98x72xf32, #tpu.memory_space<vmem>>, vector<8x8xf32>,
    %c156_258 = arith.constant 156 : index
    %c0_259 = arith.constant 0 : index
    %163 = vector.load %arg15[%c156_258, %c0_259] : memref<392x8xf32, #tpu.memory_space<vmem>>, vector<6x8xf32>
    %c50_260 = arith.constant 50 : index
    %c8_261 = arith.constant 8 : index
    %164 = vector.load %arg16[%c50_260, %c8_261] : memref<98x72xf32, #tpu.memory_space<vmem>>, vector<6x8xf32>
    tpu.vector_store %arg16[%c50_260, %c8_261], %163 {strides = array<i32>} : memref<98x72xf32, #tpu.memory_space<vmem>>, vector<6x8xf32>,
    %c148_262 = arith.constant 148 : index
    %c0_263 = arith.constant 0 : index
    %165 = vector.load %arg15[%c148_262, %c0_263] : memref<392x8xf32, #tpu.memory_space<vmem>>, vector<8x8xf32>
    %c42_264 = arith.constant 42 : index
    %c16_265 = arith.constant 16 : index
    %166 = vector.load %arg16[%c42_264, %c16_265] : memref<98x72xf32, #tpu.memory_space<vmem>>, vector<8x8xf32>
    tpu.vector_store %arg16[%c42_264, %c16_265], %165 {strides = array<i32>} : memref<98x72xf32, #tpu.memory_space<vmem>>, vector<8x8xf32>,
    %c162_266 = arith.constant 162 : index
    %c0_267 = arith.constant 0 : index
    %167 = vector.load %arg15[%c162_266, %c0_267] : memref<392x8xf32, #tpu.memory_space<vmem>>, vector<6x8xf32>
    %c50_268 = arith.constant 50 : index
    %c16_269 = arith.constant 16 : index
    %168 = vector.load %arg16[%c50_268, %c16_269] : memref<98x72xf32, #tpu.memory_space<vmem>>, vector<6x8xf32>
    tpu.vector_store %arg16[%c50_268, %c16_269], %167 {strides = array<i32>} : memref<98x72xf32, #tpu.memory_space<vmem>>, vector<6x8xf32>,
    %c190 = arith.constant 190 : index
    %c0_270 = arith.constant 0 : index
    %169 = vector.load %arg15[%c190, %c0_270] : memref<392x8xf32, #tpu.memory_space<vmem>>, vector<6x8xf32>
    %c44_271 = arith.constant 44 : index
    %c24_272 = arith.constant 24 : index
    %170 = vector.load %arg16[%c44_271, %c24_272] : memref<98x72xf32, #tpu.memory_space<vmem>>, vector<6x8xf32>
    tpu.vector_store %arg16[%c44_271, %c24_272], %169 {strides = array<i32>} : memref<98x72xf32, #tpu.memory_space<vmem>>, vector<6x8xf32>,
    %c176 = arith.constant 176 : index
    %c0_273 = arith.constant 0 : index
    %171 = vector.load %arg15[%c176, %c0_273] : memref<392x8xf32, #tpu.memory_space<vmem>>, vector<6x8xf32>
    %c50_274 = arith.constant 50 : index
    %c24_275 = arith.constant 24 : index
    %172 = vector.load %arg16[%c50_274, %c24_275] : memref<98x72xf32, #tpu.memory_space<vmem>>, vector<6x8xf32>
    tpu.vector_store %arg16[%c50_274, %c24_275], %171 {strides = array<i32>} : memref<98x72xf32, #tpu.memory_space<vmem>>, vector<6x8xf32>,
    %c168 = arith.constant 168 : index
    %c0_276 = arith.constant 0 : index
    %173 = vector.load %arg15[%c168, %c0_276] : memref<392x8xf32, #tpu.memory_space<vmem>>, vector<8x8xf32>
    %c42_277 = arith.constant 42 : index
    %c32_278 = arith.constant 32 : index
    %174 = vector.load %arg16[%c42_277, %c32_278] : memref<98x72xf32, #tpu.memory_space<vmem>>, vector<8x8xf32>
    tpu.vector_store %arg16[%c42_277, %c32_278], %173 {strides = array<i32>} : memref<98x72xf32, #tpu.memory_space<vmem>>, vector<8x8xf32>,
    %c184 = arith.constant 184 : index
    %c0_279 = arith.constant 0 : index
    %175 = vector.load %arg15[%c184, %c0_279] : memref<392x8xf32, #tpu.memory_space<vmem>>, vector<6x8xf32>
    %c50_280 = arith.constant 50 : index
    %c32_281 = arith.constant 32 : index
    %176 = vector.load %arg16[%c50_280, %c32_281] : memref<98x72xf32, #tpu.memory_space<vmem>>, vector<6x8xf32>
    tpu.vector_store %arg16[%c50_280, %c32_281], %175 {strides = array<i32>} : memref<98x72xf32, #tpu.memory_space<vmem>>, vector<6x8xf32>,
    %c176_282 = arith.constant 176 : index
    %c0_283 = arith.constant 0 : index
    %177 = vector.load %arg15[%c176_282, %c0_283] : memref<392x8xf32, #tpu.memory_space<vmem>>, vector<8x8xf32>
    %c42_284 = arith.constant 42 : index
    %c40_285 = arith.constant 40 : index
    %178 = vector.load %arg16[%c42_284, %c40_285] : memref<98x72xf32, #tpu.memory_space<vmem>>, vector<8x8xf32>
    tpu.vector_store %arg16[%c42_284, %c40_285], %177 {strides = array<i32>} : memref<98x72xf32, #tpu.memory_space<vmem>>, vector<8x8xf32>,
    %c190_286 = arith.constant 190 : index
    %c0_287 = arith.constant 0 : index
    %179 = vector.load %arg15[%c190_286, %c0_287] : memref<392x8xf32, #tpu.memory_space<vmem>>, vector<6x8xf32>
    %c50_288 = arith.constant 50 : index
    %c40_289 = arith.constant 40 : index
    %180 = vector.load %arg16[%c50_288, %c40_289] : memref<98x72xf32, #tpu.memory_space<vmem>>, vector<6x8xf32>
    tpu.vector_store %arg16[%c50_288, %c40_289], %179 {strides = array<i32>} : memref<98x72xf32, #tpu.memory_space<vmem>>, vector<6x8xf32>,
    %c218 = arith.constant 218 : index
    %c0_290 = arith.constant 0 : index
    %181 = vector.load %arg15[%c218, %c0_290] : memref<392x8xf32, #tpu.memory_space<vmem>>, vector<6x8xf32>
    %c44_291 = arith.constant 44 : index
    %c48_292 = arith.constant 48 : index
    %182 = vector.load %arg16[%c44_291, %c48_292] : memref<98x72xf32, #tpu.memory_space<vmem>>, vector<6x8xf32>
    tpu.vector_store %arg16[%c44_291, %c48_292], %181 {strides = array<i32>} : memref<98x72xf32, #tpu.memory_space<vmem>>, vector<6x8xf32>,
    %c204 = arith.constant 204 : index
    %c0_293 = arith.constant 0 : index
    %183 = vector.load %arg15[%c204, %c0_293] : memref<392x8xf32, #tpu.memory_space<vmem>>, vector<6x8xf32>
    %c50_294 = arith.constant 50 : index
    %c48_295 = arith.constant 48 : index
    %184 = vector.load %arg16[%c50_294, %c48_295] : memref<98x72xf32, #tpu.memory_space<vmem>>, vector<6x8xf32>
    tpu.vector_store %arg16[%c50_294, %c48_295], %183 {strides = array<i32>} : memref<98x72xf32, #tpu.memory_space<vmem>>, vector<6x8xf32>,
    %c196 = arith.constant 196 : index
    %c0_296 = arith.constant 0 : index
    %185 = vector.load %arg15[%c196, %c0_296] : memref<392x8xf32, #tpu.memory_space<vmem>>, vector<8x8xf32>
    %c42_297 = arith.constant 42 : index
    %c56_298 = arith.constant 56 : index
    %186 = vector.load %arg16[%c42_297, %c56_298] : memref<98x72xf32, #tpu.memory_space<vmem>>, vector<8x8xf32>
    tpu.vector_store %arg16[%c42_297, %c56_298], %185 {strides = array<i32>} : memref<98x72xf32, #tpu.memory_space<vmem>>, vector<8x8xf32>,
    %c212 = arith.constant 212 : index
    %c0_299 = arith.constant 0 : index
    %187 = vector.load %arg15[%c212, %c0_299] : memref<392x8xf32, #tpu.memory_space<vmem>>, vector<6x8xf32>
    %c50_300 = arith.constant 50 : index
    %c56_301 = arith.constant 56 : index
    %188 = vector.load %arg16[%c50_300, %c56_301] : memref<98x72xf32, #tpu.memory_space<vmem>>, vector<6x8xf32>
    tpu.vector_store %arg16[%c50_300, %c56_301], %187 {strides = array<i32>} : memref<98x72xf32, #tpu.memory_space<vmem>>, vector<6x8xf32>,
    %c204_302 = arith.constant 204 : index
    %c0_303 = arith.constant 0 : index
    %189 = vector.load %arg15[%c204_302, %c0_303] : memref<392x8xf32, #tpu.memory_space<vmem>>, vector<8x8xf32>
    %c42_304 = arith.constant 42 : index
    %c64_305 = arith.constant 64 : index
    %190 = vector.load %arg16[%c42_304, %c64_305] : memref<98x72xf32, #tpu.memory_space<vmem>>, vector<8x8xf32>
    tpu.vector_store %arg16[%c42_304, %c64_305], %189 {strides = array<i32>} : memref<98x72xf32, #tpu.memory_space<vmem>>, vector<8x8xf32>,
    %c218_306 = arith.constant 218 : index
    %c0_307 = arith.constant 0 : index
    %191 = vector.load %arg15[%c218_306, %c0_307] : memref<392x8xf32, #tpu.memory_space<vmem>>, vector<6x8xf32>
    %c50_308 = arith.constant 50 : index
    %c64_309 = arith.constant 64 : index
    %192 = vector.load %arg16[%c50_308, %c64_309] : memref<98x72xf32, #tpu.memory_space<vmem>>, vector<6x8xf32>
    tpu.vector_store %arg16[%c50_308, %c64_309], %191 {strides = array<i32>} : memref<98x72xf32, #tpu.memory_space<vmem>>, vector<6x8xf32>,
    %c218_310 = arith.constant 218 : index
    %c0_311 = arith.constant 0 : index
    %193 = vector.load %arg15[%c218_310, %c0_311] : memref<392x8xf32, #tpu.memory_space<vmem>>, vector<6x8xf32>
    %c58 = arith.constant 58 : index
    %c0_312 = arith.constant 0 : index
    %194 = vector.load %arg16[%c58, %c0_312] : memref<98x72xf32, #tpu.memory_space<vmem>>, vector<6x8xf32>
    tpu.vector_store %arg16[%c58, %c0_312], %193 {strides = array<i32>} : memref<98x72xf32, #tpu.memory_space<vmem>>, vector<6x8xf32>,
    %c204_313 = arith.constant 204 : index
    %c0_314 = arith.constant 0 : index
    %195 = vector.load %arg15[%c204_313, %c0_314] : memref<392x8xf32, #tpu.memory_space<vmem>>, vector<6x8xf32>
    %c64_315 = arith.constant 64 : index
    %c0_316 = arith.constant 0 : index
    %196 = vector.load %arg16[%c64_315, %c0_316] : memref<98x72xf32, #tpu.memory_space<vmem>>, vector<6x8xf32>
    tpu.vector_store %arg16[%c64_315, %c0_316], %195 {strides = array<i32>} : memref<98x72xf32, #tpu.memory_space<vmem>>, vector<6x8xf32>,
    %c196_317 = arith.constant 196 : index
    %c0_318 = arith.constant 0 : index
    %197 = vector.load %arg15[%c196_317, %c0_318] : memref<392x8xf32, #tpu.memory_space<vmem>>, vector<8x8xf32>
    %c56_319 = arith.constant 56 : index
    %c8_320 = arith.constant 8 : index
    %198 = vector.load %arg16[%c56_319, %c8_320] : memref<98x72xf32, #tpu.memory_space<vmem>>, vector<8x8xf32>
    tpu.vector_store %arg16[%c56_319, %c8_320], %197 {strides = array<i32>} : memref<98x72xf32, #tpu.memory_space<vmem>>, vector<8x8xf32>,
    %c212_321 = arith.constant 212 : index
    %c0_322 = arith.constant 0 : index
    %199 = vector.load %arg15[%c212_321, %c0_322] : memref<392x8xf32, #tpu.memory_space<vmem>>, vector<6x8xf32>
    %c64_323 = arith.constant 64 : index
    %c8_324 = arith.constant 8 : index
    %200 = vector.load %arg16[%c64_323, %c8_324] : memref<98x72xf32, #tpu.memory_space<vmem>>, vector<6x8xf32>
    tpu.vector_store %arg16[%c64_323, %c8_324], %199 {strides = array<i32>} : memref<98x72xf32, #tpu.memory_space<vmem>>, vector<6x8xf32>,
    %c204_325 = arith.constant 204 : index
    %c0_326 = arith.constant 0 : index
    %201 = vector.load %arg15[%c204_325, %c0_326] : memref<392x8xf32, #tpu.memory_space<vmem>>, vector<8x8xf32>
    %c56_327 = arith.constant 56 : index
    %c16_328 = arith.constant 16 : index
    %202 = vector.load %arg16[%c56_327, %c16_328] : memref<98x72xf32, #tpu.memory_space<vmem>>, vector<8x8xf32>
    tpu.vector_store %arg16[%c56_327, %c16_328], %201 {strides = array<i32>} : memref<98x72xf32, #tpu.memory_space<vmem>>, vector<8x8xf32>,
    %c218_329 = arith.constant 218 : index
    %c0_330 = arith.constant 0 : index
    %203 = vector.load %arg15[%c218_329, %c0_330] : memref<392x8xf32, #tpu.memory_space<vmem>>, vector<6x8xf32>
    %c64_331 = arith.constant 64 : index
    %c16_332 = arith.constant 16 : index
    %204 = vector.load %arg16[%c64_331, %c16_332] : memref<98x72xf32, #tpu.memory_space<vmem>>, vector<6x8xf32>
    tpu.vector_store %arg16[%c64_331, %c16_332], %203 {strides = array<i32>} : memref<98x72xf32, #tpu.memory_space<vmem>>, vector<6x8xf32>,
    %c246 = arith.constant 246 : index
    %c0_333 = arith.constant 0 : index
    %205 = vector.load %arg15[%c246, %c0_333] : memref<392x8xf32, #tpu.memory_space<vmem>>, vector<6x8xf32>
    %c58_334 = arith.constant 58 : index
    %c24_335 = arith.constant 24 : index
    %206 = vector.load %arg16[%c58_334, %c24_335] : memref<98x72xf32, #tpu.memory_space<vmem>>, vector<6x8xf32>
    tpu.vector_store %arg16[%c58_334, %c24_335], %205 {strides = array<i32>} : memref<98x72xf32, #tpu.memory_space<vmem>>, vector<6x8xf32>,
    %c232 = arith.constant 232 : index
    %c0_336 = arith.constant 0 : index
    %207 = vector.load %arg15[%c232, %c0_336] : memref<392x8xf32, #tpu.memory_space<vmem>>, vector<6x8xf32>
    %c64_337 = arith.constant 64 : index
    %c24_338 = arith.constant 24 : index
    %208 = vector.load %arg16[%c64_337, %c24_338] : memref<98x72xf32, #tpu.memory_space<vmem>>, vector<6x8xf32>
    tpu.vector_store %arg16[%c64_337, %c24_338], %207 {strides = array<i32>} : memref<98x72xf32, #tpu.memory_space<vmem>>, vector<6x8xf32>,
    %c224 = arith.constant 224 : index
    %c0_339 = arith.constant 0 : index
    %209 = vector.load %arg15[%c224, %c0_339] : memref<392x8xf32, #tpu.memory_space<vmem>>, vector<8x8xf32>
    %c56_340 = arith.constant 56 : index
    %c32_341 = arith.constant 32 : index
    %210 = vector.load %arg16[%c56_340, %c32_341] : memref<98x72xf32, #tpu.memory_space<vmem>>, vector<8x8xf32>
    tpu.vector_store %arg16[%c56_340, %c32_341], %209 {strides = array<i32>} : memref<98x72xf32, #tpu.memory_space<vmem>>, vector<8x8xf32>,
    %c240 = arith.constant 240 : index
    %c0_342 = arith.constant 0 : index
    %211 = vector.load %arg15[%c240, %c0_342] : memref<392x8xf32, #tpu.memory_space<vmem>>, vector<6x8xf32>
    %c64_343 = arith.constant 64 : index
    %c32_344 = arith.constant 32 : index
    %212 = vector.load %arg16[%c64_343, %c32_344] : memref<98x72xf32, #tpu.memory_space<vmem>>, vector<6x8xf32>
    tpu.vector_store %arg16[%c64_343, %c32_344], %211 {strides = array<i32>} : memref<98x72xf32, #tpu.memory_space<vmem>>, vector<6x8xf32>,
    %c232_345 = arith.constant 232 : index
    %c0_346 = arith.constant 0 : index
    %213 = vector.load %arg15[%c232_345, %c0_346] : memref<392x8xf32, #tpu.memory_space<vmem>>, vector<8x8xf32>
    %c56_347 = arith.constant 56 : index
    %c40_348 = arith.constant 40 : index
    %214 = vector.load %arg16[%c56_347, %c40_348] : memref<98x72xf32, #tpu.memory_space<vmem>>, vector<8x8xf32>
    tpu.vector_store %arg16[%c56_347, %c40_348], %213 {strides = array<i32>} : memref<98x72xf32, #tpu.memory_space<vmem>>, vector<8x8xf32>,
    %c246_349 = arith.constant 246 : index
    %c0_350 = arith.constant 0 : index
    %215 = vector.load %arg15[%c246_349, %c0_350] : memref<392x8xf32, #tpu.memory_space<vmem>>, vector<6x8xf32>
    %c64_351 = arith.constant 64 : index
    %c40_352 = arith.constant 40 : index
    %216 = vector.load %arg16[%c64_351, %c40_352] : memref<98x72xf32, #tpu.memory_space<vmem>>, vector<6x8xf32>
    tpu.vector_store %arg16[%c64_351, %c40_352], %215 {strides = array<i32>} : memref<98x72xf32, #tpu.memory_space<vmem>>, vector<6x8xf32>,
    %c274 = arith.constant 274 : index
    %c0_353 = arith.constant 0 : index
    %217 = vector.load %arg15[%c274, %c0_353] : memref<392x8xf32, #tpu.memory_space<vmem>>, vector<6x8xf32>
    %c58_354 = arith.constant 58 : index
    %c48_355 = arith.constant 48 : index
    %218 = vector.load %arg16[%c58_354, %c48_355] : memref<98x72xf32, #tpu.memory_space<vmem>>, vector<6x8xf32>
    tpu.vector_store %arg16[%c58_354, %c48_355], %217 {strides = array<i32>} : memref<98x72xf32, #tpu.memory_space<vmem>>, vector<6x8xf32>,
    %c260 = arith.constant 260 : index
    %c0_356 = arith.constant 0 : index
    %219 = vector.load %arg15[%c260, %c0_356] : memref<392x8xf32, #tpu.memory_space<vmem>>, vector<6x8xf32>
    %c64_357 = arith.constant 64 : index
    %c48_358 = arith.constant 48 : index
    %220 = vector.load %arg16[%c64_357, %c48_358] : memref<98x72xf32, #tpu.memory_space<vmem>>, vector<6x8xf32>
    tpu.vector_store %arg16[%c64_357, %c48_358], %219 {strides = array<i32>} : memref<98x72xf32, #tpu.memory_space<vmem>>, vector<6x8xf32>,
    %c252 = arith.constant 252 : index
    %c0_359 = arith.constant 0 : index
    %221 = vector.load %arg15[%c252, %c0_359] : memref<392x8xf32, #tpu.memory_space<vmem>>, vector<8x8xf32>
    %c56_360 = arith.constant 56 : index
    %c56_361 = arith.constant 56 : index
    %222 = vector.load %arg16[%c56_360, %c56_361] : memref<98x72xf32, #tpu.memory_space<vmem>>, vector<8x8xf32>
    tpu.vector_store %arg16[%c56_360, %c56_361], %221 {strides = array<i32>} : memref<98x72xf32, #tpu.memory_space<vmem>>, vector<8x8xf32>,
    %c268 = arith.constant 268 : index
    %c0_362 = arith.constant 0 : index
    %223 = vector.load %arg15[%c268, %c0_362] : memref<392x8xf32, #tpu.memory_space<vmem>>, vector<6x8xf32>
    %c64_363 = arith.constant 64 : index
    %c56_364 = arith.constant 56 : index
    %224 = vector.load %arg16[%c64_363, %c56_364] : memref<98x72xf32, #tpu.memory_space<vmem>>, vector<6x8xf32>
    tpu.vector_store %arg16[%c64_363, %c56_364], %223 {strides = array<i32>} : memref<98x72xf32, #tpu.memory_space<vmem>>, vector<6x8xf32>,
    %c260_365 = arith.constant 260 : index
    %c0_366 = arith.constant 0 : index
    %225 = vector.load %arg15[%c260_365, %c0_366] : memref<392x8xf32, #tpu.memory_space<vmem>>, vector<8x8xf32>
    %c56_367 = arith.constant 56 : index
    %c64_368 = arith.constant 64 : index
    %226 = vector.load %arg16[%c56_367, %c64_368] : memref<98x72xf32, #tpu.memory_space<vmem>>, vector<8x8xf32>
    tpu.vector_store %arg16[%c56_367, %c64_368], %225 {strides = array<i32>} : memref<98x72xf32, #tpu.memory_space<vmem>>, vector<8x8xf32>,
    %c274_369 = arith.constant 274 : index
    %c0_370 = arith.constant 0 : index
    %227 = vector.load %arg15[%c274_369, %c0_370] : memref<392x8xf32, #tpu.memory_space<vmem>>, vector<6x8xf32>
    %c64_371 = arith.constant 64 : index
    %c64_372 = arith.constant 64 : index
    %228 = vector.load %arg16[%c64_371, %c64_372] : memref<98x72xf32, #tpu.memory_space<vmem>>, vector<6x8xf32>
    tpu.vector_store %arg16[%c64_371, %c64_372], %227 {strides = array<i32>} : memref<98x72xf32, #tpu.memory_space<vmem>>, vector<6x8xf32>,
    %c274_373 = arith.constant 274 : index
    %c0_374 = arith.constant 0 : index
    %229 = vector.load %arg15[%c274_373, %c0_374] : memref<392x8xf32, #tpu.memory_space<vmem>>, vector<6x8xf32>
    %c72_375 = arith.constant 72 : index
    %c0_376 = arith.constant 0 : index
    %230 = vector.load %arg16[%c72_375, %c0_376] : memref<98x72xf32, #tpu.memory_space<vmem>>, vector<6x8xf32>
    tpu.vector_store %arg16[%c72_375, %c0_376], %229 {strides = array<i32>} : memref<98x72xf32, #tpu.memory_space<vmem>>, vector<6x8xf32>,
    %c260_377 = arith.constant 260 : index
    %c0_378 = arith.constant 0 : index
    %231 = vector.load %arg15[%c260_377, %c0_378] : memref<392x8xf32, #tpu.memory_space<vmem>>, vector<6x8xf32>
    %c78_379 = arith.constant 78 : index
    %c0_380 = arith.constant 0 : index
    %232 = vector.load %arg16[%c78_379, %c0_380] : memref<98x72xf32, #tpu.memory_space<vmem>>, vector<6x8xf32>
    tpu.vector_store %arg16[%c78_379, %c0_380], %231 {strides = array<i32>} : memref<98x72xf32, #tpu.memory_space<vmem>>, vector<6x8xf32>,
    %c252_381 = arith.constant 252 : index
    %c0_382 = arith.constant 0 : index
    %233 = vector.load %arg15[%c252_381, %c0_382] : memref<392x8xf32, #tpu.memory_space<vmem>>, vector<8x8xf32>
    %c70_383 = arith.constant 70 : index
    %c8_384 = arith.constant 8 : index
    %234 = vector.load %arg16[%c70_383, %c8_384] : memref<98x72xf32, #tpu.memory_space<vmem>>, vector<8x8xf32>
    tpu.vector_store %arg16[%c70_383, %c8_384], %233 {strides = array<i32>} : memref<98x72xf32, #tpu.memory_space<vmem>>, vector<8x8xf32>,
    %c268_385 = arith.constant 268 : index
    %c0_386 = arith.constant 0 : index
    %235 = vector.load %arg15[%c268_385, %c0_386] : memref<392x8xf32, #tpu.memory_space<vmem>>, vector<6x8xf32>
    %c78_387 = arith.constant 78 : index
    %c8_388 = arith.constant 8 : index
    %236 = vector.load %arg16[%c78_387, %c8_388] : memref<98x72xf32, #tpu.memory_space<vmem>>, vector<6x8xf32>
    tpu.vector_store %arg16[%c78_387, %c8_388], %235 {strides = array<i32>} : memref<98x72xf32, #tpu.memory_space<vmem>>, vector<6x8xf32>,
    %c260_389 = arith.constant 260 : index
    %c0_390 = arith.constant 0 : index
    %237 = vector.load %arg15[%c260_389, %c0_390] : memref<392x8xf32, #tpu.memory_space<vmem>>, vector<8x8xf32>
    %c70_391 = arith.constant 70 : index
    %c16_392 = arith.constant 16 : index
    %238 = vector.load %arg16[%c70_391, %c16_392] : memref<98x72xf32, #tpu.memory_space<vmem>>, vector<8x8xf32>
    tpu.vector_store %arg16[%c70_391, %c16_392], %237 {strides = array<i32>} : memref<98x72xf32, #tpu.memory_space<vmem>>, vector<8x8xf32>,
    %c274_393 = arith.constant 274 : index
    %c0_394 = arith.constant 0 : index
    %239 = vector.load %arg15[%c274_393, %c0_394] : memref<392x8xf32, #tpu.memory_space<vmem>>, vector<6x8xf32>
    %c78_395 = arith.constant 78 : index
    %c16_396 = arith.constant 16 : index
    %240 = vector.load %arg16[%c78_395, %c16_396] : memref<98x72xf32, #tpu.memory_space<vmem>>, vector<6x8xf32>
    tpu.vector_store %arg16[%c78_395, %c16_396], %239 {strides = array<i32>} : memref<98x72xf32, #tpu.memory_space<vmem>>, vector<6x8xf32>,
    %c302 = arith.constant 302 : index
    %c0_397 = arith.constant 0 : index
    %241 = vector.load %arg15[%c302, %c0_397] : memref<392x8xf32, #tpu.memory_space<vmem>>, vector<6x8xf32>
    %c72_398 = arith.constant 72 : index
    %c24_399 = arith.constant 24 : index
    %242 = vector.load %arg16[%c72_398, %c24_399] : memref<98x72xf32, #tpu.memory_space<vmem>>, vector<6x8xf32>
    tpu.vector_store %arg16[%c72_398, %c24_399], %241 {strides = array<i32>} : memref<98x72xf32, #tpu.memory_space<vmem>>, vector<6x8xf32>,
    %c288 = arith.constant 288 : index
    %c0_400 = arith.constant 0 : index
    %243 = vector.load %arg15[%c288, %c0_400] : memref<392x8xf32, #tpu.memory_space<vmem>>, vector<6x8xf32>
    %c78_401 = arith.constant 78 : index
    %c24_402 = arith.constant 24 : index
    %244 = vector.load %arg16[%c78_401, %c24_402] : memref<98x72xf32, #tpu.memory_space<vmem>>, vector<6x8xf32>
    tpu.vector_store %arg16[%c78_401, %c24_402], %243 {strides = array<i32>} : memref<98x72xf32, #tpu.memory_space<vmem>>, vector<6x8xf32>,
    %c280 = arith.constant 280 : index
    %c0_403 = arith.constant 0 : index
    %245 = vector.load %arg15[%c280, %c0_403] : memref<392x8xf32, #tpu.memory_space<vmem>>, vector<8x8xf32>
    %c70_404 = arith.constant 70 : index
    %c32_405 = arith.constant 32 : index
    %246 = vector.load %arg16[%c70_404, %c32_405] : memref<98x72xf32, #tpu.memory_space<vmem>>, vector<8x8xf32>
    tpu.vector_store %arg16[%c70_404, %c32_405], %245 {strides = array<i32>} : memref<98x72xf32, #tpu.memory_space<vmem>>, vector<8x8xf32>,
    %c296 = arith.constant 296 : index
    %c0_406 = arith.constant 0 : index
    %247 = vector.load %arg15[%c296, %c0_406] : memref<392x8xf32, #tpu.memory_space<vmem>>, vector<6x8xf32>
    %c78_407 = arith.constant 78 : index
    %c32_408 = arith.constant 32 : index
    %248 = vector.load %arg16[%c78_407, %c32_408] : memref<98x72xf32, #tpu.memory_space<vmem>>, vector<6x8xf32>
    tpu.vector_store %arg16[%c78_407, %c32_408], %247 {strides = array<i32>} : memref<98x72xf32, #tpu.memory_space<vmem>>, vector<6x8xf32>,
    %c288_409 = arith.constant 288 : index
    %c0_410 = arith.constant 0 : index
    %249 = vector.load %arg15[%c288_409, %c0_410] : memref<392x8xf32, #tpu.memory_space<vmem>>, vector<8x8xf32>
    %c70_411 = arith.constant 70 : index
    %c40_412 = arith.constant 40 : index
    %250 = vector.load %arg16[%c70_411, %c40_412] : memref<98x72xf32, #tpu.memory_space<vmem>>, vector<8x8xf32>
    tpu.vector_store %arg16[%c70_411, %c40_412], %249 {strides = array<i32>} : memref<98x72xf32, #tpu.memory_space<vmem>>, vector<8x8xf32>,
    %c302_413 = arith.constant 302 : index
    %c0_414 = arith.constant 0 : index
    %251 = vector.load %arg15[%c302_413, %c0_414] : memref<392x8xf32, #tpu.memory_space<vmem>>, vector<6x8xf32>
    %c78_415 = arith.constant 78 : index
    %c40_416 = arith.constant 40 : index
    %252 = vector.load %arg16[%c78_415, %c40_416] : memref<98x72xf32, #tpu.memory_space<vmem>>, vector<6x8xf32>
    tpu.vector_store %arg16[%c78_415, %c40_416], %251 {strides = array<i32>} : memref<98x72xf32, #tpu.memory_space<vmem>>, vector<6x8xf32>,
    %c330 = arith.constant 330 : index
    %c0_417 = arith.constant 0 : index
    %253 = vector.load %arg15[%c330, %c0_417] : memref<392x8xf32, #tpu.memory_space<vmem>>, vector<6x8xf32>
    %c72_418 = arith.constant 72 : index
    %c48_419 = arith.constant 48 : index
    %254 = vector.load %arg16[%c72_418, %c48_419] : memref<98x72xf32, #tpu.memory_space<vmem>>, vector<6x8xf32>
    tpu.vector_store %arg16[%c72_418, %c48_419], %253 {strides = array<i32>} : memref<98x72xf32, #tpu.memory_space<vmem>>, vector<6x8xf32>,
    %c316 = arith.constant 316 : index
    %c0_420 = arith.constant 0 : index
    %255 = vector.load %arg15[%c316, %c0_420] : memref<392x8xf32, #tpu.memory_space<vmem>>, vector<6x8xf32>
    %c78_421 = arith.constant 78 : index
    %c48_422 = arith.constant 48 : index
    %256 = vector.load %arg16[%c78_421, %c48_422] : memref<98x72xf32, #tpu.memory_space<vmem>>, vector<6x8xf32>
    tpu.vector_store %arg16[%c78_421, %c48_422], %255 {strides = array<i32>} : memref<98x72xf32, #tpu.memory_space<vmem>>, vector<6x8xf32>,
    %c308 = arith.constant 308 : index
    %c0_423 = arith.constant 0 : index
    %257 = vector.load %arg15[%c308, %c0_423] : memref<392x8xf32, #tpu.memory_space<vmem>>, vector<8x8xf32>
    %c70_424 = arith.constant 70 : index
    %c56_425 = arith.constant 56 : index
    %258 = vector.load %arg16[%c70_424, %c56_425] : memref<98x72xf32, #tpu.memory_space<vmem>>, vector<8x8xf32>
    tpu.vector_store %arg16[%c70_424, %c56_425], %257 {strides = array<i32>} : memref<98x72xf32, #tpu.memory_space<vmem>>, vector<8x8xf32>,
    %c324 = arith.constant 324 : index
    %c0_426 = arith.constant 0 : index
    %259 = vector.load %arg15[%c324, %c0_426] : memref<392x8xf32, #tpu.memory_space<vmem>>, vector<6x8xf32>
    %c78_427 = arith.constant 78 : index
    %c56_428 = arith.constant 56 : index
    %260 = vector.load %arg16[%c78_427, %c56_428] : memref<98x72xf32, #tpu.memory_space<vmem>>, vector<6x8xf32>
    tpu.vector_store %arg16[%c78_427, %c56_428], %259 {strides = array<i32>} : memref<98x72xf32, #tpu.memory_space<vmem>>, vector<6x8xf32>,
    %c316_429 = arith.constant 316 : index
    %c0_430 = arith.constant 0 : index
    %261 = vector.load %arg15[%c316_429, %c0_430] : memref<392x8xf32, #tpu.memory_space<vmem>>, vector<8x8xf32>
    %c70_431 = arith.constant 70 : index
    %c64_432 = arith.constant 64 : index
    %262 = vector.load %arg16[%c70_431, %c64_432] : memref<98x72xf32, #tpu.memory_space<vmem>>, vector<8x8xf32>
    tpu.vector_store %arg16[%c70_431, %c64_432], %261 {strides = array<i32>} : memref<98x72xf32, #tpu.memory_space<vmem>>, vector<8x8xf32>,
    %c330_433 = arith.constant 330 : index
    %c0_434 = arith.constant 0 : index
    %263 = vector.load %arg15[%c330_433, %c0_434] : memref<392x8xf32, #tpu.memory_space<vmem>>, vector<6x8xf32>
    %c78_435 = arith.constant 78 : index
    %c64_436 = arith.constant 64 : index
    %264 = vector.load %arg16[%c78_435, %c64_436] : memref<98x72xf32, #tpu.memory_space<vmem>>, vector<6x8xf32>
    tpu.vector_store %arg16[%c78_435, %c64_436], %263 {strides = array<i32>} : memref<98x72xf32, #tpu.memory_space<vmem>>, vector<6x8xf32>,
    %c330_437 = arith.constant 330 : index
    %c0_438 = arith.constant 0 : index
    %265 = vector.load %arg15[%c330_437, %c0_438] : memref<392x8xf32, #tpu.memory_space<vmem>>, vector<6x8xf32>
    %c86 = arith.constant 86 : index
    %c0_439 = arith.constant 0 : index
    %266 = vector.load %arg16[%c86, %c0_439] : memref<98x72xf32, #tpu.memory_space<vmem>>, vector<6x8xf32>
    tpu.vector_store %arg16[%c86, %c0_439], %265 {strides = array<i32>} : memref<98x72xf32, #tpu.memory_space<vmem>>, vector<6x8xf32>,
    %c316_440 = arith.constant 316 : index
    %c0_441 = arith.constant 0 : index
    %267 = vector.load %arg15[%c316_440, %c0_441] : memref<392x8xf32, #tpu.memory_space<vmem>>, vector<6x8xf32>
    %c92_442 = arith.constant 92 : index
    %c0_443 = arith.constant 0 : index
    %268 = vector.load %arg16[%c92_442, %c0_443] : memref<98x72xf32, #tpu.memory_space<vmem>>, vector<6x8xf32>
    tpu.vector_store %arg16[%c92_442, %c0_443], %267 {strides = array<i32>} : memref<98x72xf32, #tpu.memory_space<vmem>>, vector<6x8xf32>,
    %c308_444 = arith.constant 308 : index
    %c0_445 = arith.constant 0 : index
    %269 = vector.load %arg15[%c308_444, %c0_445] : memref<392x8xf32, #tpu.memory_space<vmem>>, vector<8x8xf32>
    %c84_446 = arith.constant 84 : index
    %c8_447 = arith.constant 8 : index
    %270 = vector.load %arg16[%c84_446, %c8_447] : memref<98x72xf32, #tpu.memory_space<vmem>>, vector<8x8xf32>
    tpu.vector_store %arg16[%c84_446, %c8_447], %269 {strides = array<i32>} : memref<98x72xf32, #tpu.memory_space<vmem>>, vector<8x8xf32>,
    %c324_448 = arith.constant 324 : index
    %c0_449 = arith.constant 0 : index
    %271 = vector.load %arg15[%c324_448, %c0_449] : memref<392x8xf32, #tpu.memory_space<vmem>>, vector<6x8xf32>
    %c92_450 = arith.constant 92 : index
    %c8_451 = arith.constant 8 : index
    %272 = vector.load %arg16[%c92_450, %c8_451] : memref<98x72xf32, #tpu.memory_space<vmem>>, vector<6x8xf32>
    tpu.vector_store %arg16[%c92_450, %c8_451], %271 {strides = array<i32>} : memref<98x72xf32, #tpu.memory_space<vmem>>, vector<6x8xf32>,
    %c316_452 = arith.constant 316 : index
    %c0_453 = arith.constant 0 : index
    %273 = vector.load %arg15[%c316_452, %c0_453] : memref<392x8xf32, #tpu.memory_space<vmem>>, vector<8x8xf32>
    %c84_454 = arith.constant 84 : index
    %c16_455 = arith.constant 16 : index
    %274 = vector.load %arg16[%c84_454, %c16_455] : memref<98x72xf32, #tpu.memory_space<vmem>>, vector<8x8xf32>
    tpu.vector_store %arg16[%c84_454, %c16_455], %273 {strides = array<i32>} : memref<98x72xf32, #tpu.memory_space<vmem>>, vector<8x8xf32>,
    %c330_456 = arith.constant 330 : index
    %c0_457 = arith.constant 0 : index
    %275 = vector.load %arg15[%c330_456, %c0_457] : memref<392x8xf32, #tpu.memory_space<vmem>>, vector<6x8xf32>
    %c92_458 = arith.constant 92 : index
    %c16_459 = arith.constant 16 : index
    %276 = vector.load %arg16[%c92_458, %c16_459] : memref<98x72xf32, #tpu.memory_space<vmem>>, vector<6x8xf32>
    tpu.vector_store %arg16[%c92_458, %c16_459], %275 {strides = array<i32>} : memref<98x72xf32, #tpu.memory_space<vmem>>, vector<6x8xf32>,
    %c358 = arith.constant 358 : index
    %c0_460 = arith.constant 0 : index
    %277 = vector.load %arg15[%c358, %c0_460] : memref<392x8xf32, #tpu.memory_space<vmem>>, vector<6x8xf32>
    %c86_461 = arith.constant 86 : index
    %c24_462 = arith.constant 24 : index
    %278 = vector.load %arg16[%c86_461, %c24_462] : memref<98x72xf32, #tpu.memory_space<vmem>>, vector<6x8xf32>
    tpu.vector_store %arg16[%c86_461, %c24_462], %277 {strides = array<i32>} : memref<98x72xf32, #tpu.memory_space<vmem>>, vector<6x8xf32>,
    %c344 = arith.constant 344 : index
    %c0_463 = arith.constant 0 : index
    %279 = vector.load %arg15[%c344, %c0_463] : memref<392x8xf32, #tpu.memory_space<vmem>>, vector<6x8xf32>
    %c92_464 = arith.constant 92 : index
    %c24_465 = arith.constant 24 : index
    %280 = vector.load %arg16[%c92_464, %c24_465] : memref<98x72xf32, #tpu.memory_space<vmem>>, vector<6x8xf32>
    tpu.vector_store %arg16[%c92_464, %c24_465], %279 {strides = array<i32>} : memref<98x72xf32, #tpu.memory_space<vmem>>, vector<6x8xf32>,
    %c336 = arith.constant 336 : index
    %c0_466 = arith.constant 0 : index
    %281 = vector.load %arg15[%c336, %c0_466] : memref<392x8xf32, #tpu.memory_space<vmem>>, vector<8x8xf32>
    %c84_467 = arith.constant 84 : index
    %c32_468 = arith.constant 32 : index
    %282 = vector.load %arg16[%c84_467, %c32_468] : memref<98x72xf32, #tpu.memory_space<vmem>>, vector<8x8xf32>
    tpu.vector_store %arg16[%c84_467, %c32_468], %281 {strides = array<i32>} : memref<98x72xf32, #tpu.memory_space<vmem>>, vector<8x8xf32>,
    %c352 = arith.constant 352 : index
    %c0_469 = arith.constant 0 : index
    %283 = vector.load %arg15[%c352, %c0_469] : memref<392x8xf32, #tpu.memory_space<vmem>>, vector<6x8xf32>
    %c92_470 = arith.constant 92 : index
    %c32_471 = arith.constant 32 : index
    %284 = vector.load %arg16[%c92_470, %c32_471] : memref<98x72xf32, #tpu.memory_space<vmem>>, vector<6x8xf32>
    tpu.vector_store %arg16[%c92_470, %c32_471], %283 {strides = array<i32>} : memref<98x72xf32, #tpu.memory_space<vmem>>, vector<6x8xf32>,
    %c344_472 = arith.constant 344 : index
    %c0_473 = arith.constant 0 : index
    %285 = vector.load %arg15[%c344_472, %c0_473] : memref<392x8xf32, #tpu.memory_space<vmem>>, vector<8x8xf32>
    %c84_474 = arith.constant 84 : index
    %c40_475 = arith.constant 40 : index
    %286 = vector.load %arg16[%c84_474, %c40_475] : memref<98x72xf32, #tpu.memory_space<vmem>>, vector<8x8xf32>
    tpu.vector_store %arg16[%c84_474, %c40_475], %285 {strides = array<i32>} : memref<98x72xf32, #tpu.memory_space<vmem>>, vector<8x8xf32>,
    %c358_476 = arith.constant 358 : index
    %c0_477 = arith.constant 0 : index
    %287 = vector.load %arg15[%c358_476, %c0_477] : memref<392x8xf32, #tpu.memory_space<vmem>>, vector<6x8xf32>
    %c92_478 = arith.constant 92 : index
    %c40_479 = arith.constant 40 : index
    %288 = vector.load %arg16[%c92_478, %c40_479] : memref<98x72xf32, #tpu.memory_space<vmem>>, vector<6x8xf32>
    tpu.vector_store %arg16[%c92_478, %c40_479], %287 {strides = array<i32>} : memref<98x72xf32, #tpu.memory_space<vmem>>, vector<6x8xf32>,
    %c386 = arith.constant 386 : index
    %c0_480 = arith.constant 0 : index
    %289 = vector.load %arg15[%c386, %c0_480] : memref<392x8xf32, #tpu.memory_space<vmem>>, vector<6x8xf32>
    %c86_481 = arith.constant 86 : index
    %c48_482 = arith.constant 48 : index
    %290 = vector.load %arg16[%c86_481, %c48_482] : memref<98x72xf32, #tpu.memory_space<vmem>>, vector<6x8xf32>
    tpu.vector_store %arg16[%c86_481, %c48_482], %289 {strides = array<i32>} : memref<98x72xf32, #tpu.memory_space<vmem>>, vector<6x8xf32>,
    %c372 = arith.constant 372 : index
    %c0_483 = arith.constant 0 : index
    %291 = vector.load %arg15[%c372, %c0_483] : memref<392x8xf32, #tpu.memory_space<vmem>>, vector<6x8xf32>
    %c92_484 = arith.constant 92 : index
    %c48_485 = arith.constant 48 : index
    %292 = vector.load %arg16[%c92_484, %c48_485] : memref<98x72xf32, #tpu.memory_space<vmem>>, vector<6x8xf32>
    tpu.vector_store %arg16[%c92_484, %c48_485], %291 {strides = array<i32>} : memref<98x72xf32, #tpu.memory_space<vmem>>, vector<6x8xf32>,
    %c364 = arith.constant 364 : index
    %c0_486 = arith.constant 0 : index
    %293 = vector.load %arg15[%c364, %c0_486] : memref<392x8xf32, #tpu.memory_space<vmem>>, vector<8x8xf32>
    %c84_487 = arith.constant 84 : index
    %c56_488 = arith.constant 56 : index
    %294 = vector.load %arg16[%c84_487, %c56_488] : memref<98x72xf32, #tpu.memory_space<vmem>>, vector<8x8xf32>
    tpu.vector_store %arg16[%c84_487, %c56_488], %293 {strides = array<i32>} : memref<98x72xf32, #tpu.memory_space<vmem>>, vector<8x8xf32>,
    %c380 = arith.constant 380 : index
    %c0_489 = arith.constant 0 : index
    %295 = vector.load %arg15[%c380, %c0_489] : memref<392x8xf32, #tpu.memory_space<vmem>>, vector<6x8xf32>
    %c92_490 = arith.constant 92 : index
    %c56_491 = arith.constant 56 : index
    %296 = vector.load %arg16[%c92_490, %c56_491] : memref<98x72xf32, #tpu.memory_space<vmem>>, vector<6x8xf32>
    tpu.vector_store %arg16[%c92_490, %c56_491], %295 {strides = array<i32>} : memref<98x72xf32, #tpu.memory_space<vmem>>, vector<6x8xf32>,
    %c372_492 = arith.constant 372 : index
    %c0_493 = arith.constant 0 : index
    %297 = vector.load %arg15[%c372_492, %c0_493] : memref<392x8xf32, #tpu.memory_space<vmem>>, vector<8x8xf32>
    %c84_494 = arith.constant 84 : index
    %c64_495 = arith.constant 64 : index
    %298 = vector.load %arg16[%c84_494, %c64_495] : memref<98x72xf32, #tpu.memory_space<vmem>>, vector<8x8xf32>
    tpu.vector_store %arg16[%c84_494, %c64_495], %297 {strides = array<i32>} : memref<98x72xf32, #tpu.memory_space<vmem>>, vector<8x8xf32>,
    %c386_496 = arith.constant 386 : index
    %c0_497 = arith.constant 0 : index
    %299 = vector.load %arg15[%c386_496, %c0_497] : memref<392x8xf32, #tpu.memory_space<vmem>>, vector<6x8xf32>
    %c92_498 = arith.constant 92 : index
    %c64_499 = arith.constant 64 : index
    %300 = vector.load %arg16[%c92_498, %c64_499] : memref<98x72xf32, #tpu.memory_space<vmem>>, vector<6x8xf32>
    tpu.vector_store %arg16[%c92_498, %c64_499], %299 {strides = array<i32>} : memref<98x72xf32, #tpu.memory_space<vmem>>, vector<6x8xf32>,
    %c0_500 = arith.constant 0 : index
    %c0_501 = arith.constant 0 : index
    %301 = vector.load %arg16[%c0_500, %c0_501] : memref<98x72xf32, #tpu.memory_space<vmem>>, vector<98x72xf32>
    %c0_502 = arith.constant 0 : index
    %c0_503 = arith.constant 0 : index
    %302 = vector.load %arg3[%c0_502, %c0_503] : memref<72x16xf32, #tpu.memory_space<vmem>>, vector<72x16xf32>
    %cst_504 = arith.constant dense<0.000000e+00> : vector<98x16xf32>
    %303 = tpu.matmul %301, %302, %cst_504 {dimension_numbers = #tpu.dot_dimension_numbers<[1], [0], [0], [1], [0, 0, 1, 1], [], []>} : vector<98x72xf32>, vector<72x16xf32>, vector<98x16xf32> -> vector<98x16xf32>
    %cst_505 = arith.constant dense<0.000000e+00> : vector<16xf32>
    %304 = vector.multi_reduction <add>, %303, %cst_505 [0] : vector<98x16xf32> to vector<16xf32>
    %305 = vector.shape_cast %304 : vector<16xf32> to vector<1x16xf32>
    %cst_506 = arith.constant 0.0102040814 : f32
    %306 = vector.broadcast %cst_506 : f32 to vector<1x16xf32>
    %307 = arith.mulf %305, %306 : vector<1x16xf32>
    %308 = vector.broadcast %307 : vector<1x16xf32> to vector<98x16xf32>
    %309 = arith.subf %303, %308 : vector<98x16xf32>
    %310 = arith.mulf %309, %309 : vector<98x16xf32>
    %cst_507 = arith.constant dense<0.000000e+00> : vector<16xf32>
    %311 = vector.multi_reduction <add>, %310, %cst_507 [0] : vector<98x16xf32> to vector<16xf32>
    %312 = vector.shape_cast %311 : vector<16xf32> to vector<1x16xf32>
    %cst_508 = arith.constant 0.0102040814 : f32
    %313 = vector.broadcast %cst_508 : f32 to vector<1x16xf32>
    %314 = arith.mulf %312, %313 : vector<1x16xf32>
    %cst_509 = arith.constant 9.99999974E-6 : f32
    %315 = vector.broadcast %cst_509 : f32 to vector<1x16xf32>
    %316 = arith.addf %314, %315 : vector<1x16xf32>
    %317 = math.rsqrt %316 : vector<1x16xf32>
    %318 = vector.broadcast %317 : vector<1x16xf32> to vector<98x16xf32>
    %319 = arith.mulf %309, %318 : vector<98x16xf32>
    %c0_510 = arith.constant 0 : index
    %c0_511 = arith.constant 0 : index
    %320 = vector.load %arg4[%c0_510, %c0_511] : memref<1x16xf32, #tpu.memory_space<vmem>>, vector<1x16xf32>
    %321 = vector.broadcast %320 : vector<1x16xf32> to vector<98x16xf32>
    %322 = arith.mulf %319, %321 : vector<98x16xf32>
    %c0_512 = arith.constant 0 : index
    %c0_513 = arith.constant 0 : index
    %323 = vector.load %arg5[%c0_512, %c0_513] : memref<1x16xf32, #tpu.memory_space<vmem>>, vector<1x16xf32>
    %324 = vector.broadcast %323 : vector<1x16xf32> to vector<98x16xf32>
    %325 = arith.addf %322, %324 : vector<98x16xf32>
    %cst_514 = arith.constant 0.000000e+00 : f32
    %326 = vector.broadcast %cst_514 : f32 to vector<98x16xf32>
    %327 = arith.maximumf %325, %326 : vector<98x16xf32>
    %c0_515 = arith.constant 0 : index
    %c0_516 = arith.constant 0 : index
    %328 = vector.load %arg17[%c0_515, %c0_516] : memref<98x16xf32, #tpu.memory_space<vmem>>, vector<98x16xf32>
    tpu.vector_store %arg17[%c0_515, %c0_516], %327 {strides = array<i32>} : memref<98x16xf32, #tpu.memory_space<vmem>>, vector<98x16xf32>,
    %c0_517 = arith.constant 0 : index
    %c0_518 = arith.constant 0 : index
    %329 = vector.load %arg17[%c0_517, %c0_518] : memref<98x16xf32, #tpu.memory_space<vmem>>, vector<6x16xf32>
    %c0_519 = arith.constant 0 : index
    %c0_520 = arith.constant 0 : index
    %330 = vector.load %arg18[%c0_519, %c0_520] : memref<18x144xf32, #tpu.memory_space<vmem>>, vector<6x16xf32>
    tpu.vector_store %arg18[%c0_519, %c0_520], %329 {strides = array<i32>} : memref<18x144xf32, #tpu.memory_space<vmem>>, vector<6x16xf32>,
    %c8_521 = arith.constant 8 : index
    %c0_522 = arith.constant 0 : index
    %331 = vector.load %arg17[%c8_521, %c0_522] : memref<98x16xf32, #tpu.memory_space<vmem>>, vector<6x16xf32>
    %c0_523 = arith.constant 0 : index
    %c16_524 = arith.constant 16 : index
    %332 = vector.load %arg18[%c0_523, %c16_524] : memref<18x144xf32, #tpu.memory_space<vmem>>, vector<6x16xf32>
    tpu.vector_store %arg18[%c0_523, %c16_524], %331 {strides = array<i32>} : memref<18x144xf32, #tpu.memory_space<vmem>>, vector<6x16xf32>,
    %c2_525 = arith.constant 2 : index
    %c0_526 = arith.constant 0 : index
    %333 = vector.load %arg17[%c2_525, %c0_526] : memref<98x16xf32, #tpu.memory_space<vmem>>, vector<6x16xf32>
    %c0_527 = arith.constant 0 : index
    %c32_528 = arith.constant 32 : index
    %334 = vector.load %arg18[%c0_527, %c32_528] : memref<18x144xf32, #tpu.memory_space<vmem>>, vector<6x16xf32>
    tpu.vector_store %arg18[%c0_527, %c32_528], %333 {strides = array<i32>} : memref<18x144xf32, #tpu.memory_space<vmem>>, vector<6x16xf32>,
    %c14_529 = arith.constant 14 : index
    %c0_530 = arith.constant 0 : index
    %335 = vector.load %arg17[%c14_529, %c0_530] : memref<98x16xf32, #tpu.memory_space<vmem>>, vector<6x16xf32>
    %c0_531 = arith.constant 0 : index
    %c48_532 = arith.constant 48 : index
    %336 = vector.load %arg18[%c0_531, %c48_532] : memref<18x144xf32, #tpu.memory_space<vmem>>, vector<6x16xf32>
    tpu.vector_store %arg18[%c0_531, %c48_532], %335 {strides = array<i32>} : memref<18x144xf32, #tpu.memory_space<vmem>>, vector<6x16xf32>,
    %c22_533 = arith.constant 22 : index
    %c0_534 = arith.constant 0 : index
    %337 = vector.load %arg17[%c22_533, %c0_534] : memref<98x16xf32, #tpu.memory_space<vmem>>, vector<6x16xf32>
    %c0_535 = arith.constant 0 : index
    %c64_536 = arith.constant 64 : index
    %338 = vector.load %arg18[%c0_535, %c64_536] : memref<18x144xf32, #tpu.memory_space<vmem>>, vector<6x16xf32>
    tpu.vector_store %arg18[%c0_535, %c64_536], %337 {strides = array<i32>} : memref<18x144xf32, #tpu.memory_space<vmem>>, vector<6x16xf32>,
    %c16_537 = arith.constant 16 : index
    %c0_538 = arith.constant 0 : index
    %339 = vector.load %arg17[%c16_537, %c0_538] : memref<98x16xf32, #tpu.memory_space<vmem>>, vector<6x16xf32>
    %c0_539 = arith.constant 0 : index
    %c80 = arith.constant 80 : index
    %340 = vector.load %arg18[%c0_539, %c80] : memref<18x144xf32, #tpu.memory_space<vmem>>, vector<6x16xf32>
    tpu.vector_store %arg18[%c0_539, %c80], %339 {strides = array<i32>} : memref<18x144xf32, #tpu.memory_space<vmem>>, vector<6x16xf32>,
    %c28_540 = arith.constant 28 : index
    %c0_541 = arith.constant 0 : index
    %341 = vector.load %arg17[%c28_540, %c0_541] : memref<98x16xf32, #tpu.memory_space<vmem>>, vector<6x16xf32>
    %c0_542 = arith.constant 0 : index
    %c96 = arith.constant 96 : index
    %342 = vector.load %arg18[%c0_542, %c96] : memref<18x144xf32, #tpu.memory_space<vmem>>, vector<6x16xf32>
    tpu.vector_store %arg18[%c0_542, %c96], %341 {strides = array<i32>} : memref<18x144xf32, #tpu.memory_space<vmem>>, vector<6x16xf32>,
    %c36_543 = arith.constant 36 : index
    %c0_544 = arith.constant 0 : index
    %343 = vector.load %arg17[%c36_543, %c0_544] : memref<98x16xf32, #tpu.memory_space<vmem>>, vector<6x16xf32>
    %c0_545 = arith.constant 0 : index
    %c112_546 = arith.constant 112 : index
    %344 = vector.load %arg18[%c0_545, %c112_546] : memref<18x144xf32, #tpu.memory_space<vmem>>, vector<6x16xf32>
    tpu.vector_store %arg18[%c0_545, %c112_546], %343 {strides = array<i32>} : memref<18x144xf32, #tpu.memory_space<vmem>>, vector<6x16xf32>,
    %c30_547 = arith.constant 30 : index
    %c0_548 = arith.constant 0 : index
    %345 = vector.load %arg17[%c30_547, %c0_548] : memref<98x16xf32, #tpu.memory_space<vmem>>, vector<6x16xf32>
    %c0_549 = arith.constant 0 : index
    %c128_550 = arith.constant 128 : index
    %346 = vector.load %arg18[%c0_549, %c128_550] : memref<18x144xf32, #tpu.memory_space<vmem>>, vector<6x16xf32>
    tpu.vector_store %arg18[%c0_549, %c128_550], %345 {strides = array<i32>} : memref<18x144xf32, #tpu.memory_space<vmem>>, vector<6x16xf32>,
    %c28_551 = arith.constant 28 : index
    %c0_552 = arith.constant 0 : index
    %347 = vector.load %arg17[%c28_551, %c0_552] : memref<98x16xf32, #tpu.memory_space<vmem>>, vector<6x16xf32>
    %c6 = arith.constant 6 : index
    %c0_553 = arith.constant 0 : index
    %348 = vector.load %arg18[%c6, %c0_553] : memref<18x144xf32, #tpu.memory_space<vmem>>, vector<6x16xf32>
    tpu.vector_store %arg18[%c6, %c0_553], %347 {strides = array<i32>} : memref<18x144xf32, #tpu.memory_space<vmem>>, vector<6x16xf32>,
    %c36_554 = arith.constant 36 : index
    %c0_555 = arith.constant 0 : index
    %349 = vector.load %arg17[%c36_554, %c0_555] : memref<98x16xf32, #tpu.memory_space<vmem>>, vector<6x16xf32>
    %c6_556 = arith.constant 6 : index
    %c16_557 = arith.constant 16 : index
    %350 = vector.load %arg18[%c6_556, %c16_557] : memref<18x144xf32, #tpu.memory_space<vmem>>, vector<6x16xf32>
    tpu.vector_store %arg18[%c6_556, %c16_557], %349 {strides = array<i32>} : memref<18x144xf32, #tpu.memory_space<vmem>>, vector<6x16xf32>,
    %c30_558 = arith.constant 30 : index
    %c0_559 = arith.constant 0 : index
    %351 = vector.load %arg17[%c30_558, %c0_559] : memref<98x16xf32, #tpu.memory_space<vmem>>, vector<6x16xf32>
    %c6_560 = arith.constant 6 : index
    %c32_561 = arith.constant 32 : index
    %352 = vector.load %arg18[%c6_560, %c32_561] : memref<18x144xf32, #tpu.memory_space<vmem>>, vector<6x16xf32>
    tpu.vector_store %arg18[%c6_560, %c32_561], %351 {strides = array<i32>} : memref<18x144xf32, #tpu.memory_space<vmem>>, vector<6x16xf32>,
    %c42_562 = arith.constant 42 : index
    %c0_563 = arith.constant 0 : index
    %353 = vector.load %arg17[%c42_562, %c0_563] : memref<98x16xf32, #tpu.memory_space<vmem>>, vector<6x16xf32>
    %c6_564 = arith.constant 6 : index
    %c48_565 = arith.constant 48 : index
    %354 = vector.load %arg18[%c6_564, %c48_565] : memref<18x144xf32, #tpu.memory_space<vmem>>, vector<6x16xf32>
    tpu.vector_store %arg18[%c6_564, %c48_565], %353 {strides = array<i32>} : memref<18x144xf32, #tpu.memory_space<vmem>>, vector<6x16xf32>,
    %c50_566 = arith.constant 50 : index
    %c0_567 = arith.constant 0 : index
    %355 = vector.load %arg17[%c50_566, %c0_567] : memref<98x16xf32, #tpu.memory_space<vmem>>, vector<6x16xf32>
    %c6_568 = arith.constant 6 : index
    %c64_569 = arith.constant 64 : index
    %356 = vector.load %arg18[%c6_568, %c64_569] : memref<18x144xf32, #tpu.memory_space<vmem>>, vector<6x16xf32>
    tpu.vector_store %arg18[%c6_568, %c64_569], %355 {strides = array<i32>} : memref<18x144xf32, #tpu.memory_space<vmem>>, vector<6x16xf32>,
    %c44_570 = arith.constant 44 : index
    %c0_571 = arith.constant 0 : index
    %357 = vector.load %arg17[%c44_570, %c0_571] : memref<98x16xf32, #tpu.memory_space<vmem>>, vector<6x16xf32>
    %c6_572 = arith.constant 6 : index
    %c80_573 = arith.constant 80 : index
    %358 = vector.load %arg18[%c6_572, %c80_573] : memref<18x144xf32, #tpu.memory_space<vmem>>, vector<6x16xf32>
    tpu.vector_store %arg18[%c6_572, %c80_573], %357 {strides = array<i32>} : memref<18x144xf32, #tpu.memory_space<vmem>>, vector<6x16xf32>,
    %c56_574 = arith.constant 56 : index
    %c0_575 = arith.constant 0 : index
    %359 = vector.load %arg17[%c56_574, %c0_575] : memref<98x16xf32, #tpu.memory_space<vmem>>, vector<6x16xf32>
    %c6_576 = arith.constant 6 : index
    %c96_577 = arith.constant 96 : index
    %360 = vector.load %arg18[%c6_576, %c96_577] : memref<18x144xf32, #tpu.memory_space<vmem>>, vector<6x16xf32>
    tpu.vector_store %arg18[%c6_576, %c96_577], %359 {strides = array<i32>} : memref<18x144xf32, #tpu.memory_space<vmem>>, vector<6x16xf32>,
    %c64_578 = arith.constant 64 : index
    %c0_579 = arith.constant 0 : index
    %361 = vector.load %arg17[%c64_578, %c0_579] : memref<98x16xf32, #tpu.memory_space<vmem>>, vector<6x16xf32>
    %c6_580 = arith.constant 6 : index
    %c112_581 = arith.constant 112 : index
    %362 = vector.load %arg18[%c6_580, %c112_581] : memref<18x144xf32, #tpu.memory_space<vmem>>, vector<6x16xf32>
    tpu.vector_store %arg18[%c6_580, %c112_581], %361 {strides = array<i32>} : memref<18x144xf32, #tpu.memory_space<vmem>>, vector<6x16xf32>,
    %c58_582 = arith.constant 58 : index
    %c0_583 = arith.constant 0 : index
    %363 = vector.load %arg17[%c58_582, %c0_583] : memref<98x16xf32, #tpu.memory_space<vmem>>, vector<6x16xf32>
    %c6_584 = arith.constant 6 : index
    %c128_585 = arith.constant 128 : index
    %364 = vector.load %arg18[%c6_584, %c128_585] : memref<18x144xf32, #tpu.memory_space<vmem>>, vector<6x16xf32>
    tpu.vector_store %arg18[%c6_584, %c128_585], %363 {strides = array<i32>} : memref<18x144xf32, #tpu.memory_space<vmem>>, vector<6x16xf32>,
    %c56_586 = arith.constant 56 : index
    %c0_587 = arith.constant 0 : index
    %365 = vector.load %arg17[%c56_586, %c0_587] : memref<98x16xf32, #tpu.memory_space<vmem>>, vector<6x16xf32>
    %c12 = arith.constant 12 : index
    %c0_588 = arith.constant 0 : index
    %366 = vector.load %arg18[%c12, %c0_588] : memref<18x144xf32, #tpu.memory_space<vmem>>, vector<6x16xf32>
    tpu.vector_store %arg18[%c12, %c0_588], %365 {strides = array<i32>} : memref<18x144xf32, #tpu.memory_space<vmem>>, vector<6x16xf32>,
    %c64_589 = arith.constant 64 : index
    %c0_590 = arith.constant 0 : index
    %367 = vector.load %arg17[%c64_589, %c0_590] : memref<98x16xf32, #tpu.memory_space<vmem>>, vector<6x16xf32>
    %c12_591 = arith.constant 12 : index
    %c16_592 = arith.constant 16 : index
    %368 = vector.load %arg18[%c12_591, %c16_592] : memref<18x144xf32, #tpu.memory_space<vmem>>, vector<6x16xf32>
    tpu.vector_store %arg18[%c12_591, %c16_592], %367 {strides = array<i32>} : memref<18x144xf32, #tpu.memory_space<vmem>>, vector<6x16xf32>,
    %c58_593 = arith.constant 58 : index
    %c0_594 = arith.constant 0 : index
    %369 = vector.load %arg17[%c58_593, %c0_594] : memref<98x16xf32, #tpu.memory_space<vmem>>, vector<6x16xf32>
    %c12_595 = arith.constant 12 : index
    %c32_596 = arith.constant 32 : index
    %370 = vector.load %arg18[%c12_595, %c32_596] : memref<18x144xf32, #tpu.memory_space<vmem>>, vector<6x16xf32>
    tpu.vector_store %arg18[%c12_595, %c32_596], %369 {strides = array<i32>} : memref<18x144xf32, #tpu.memory_space<vmem>>, vector<6x16xf32>,
    %c70_597 = arith.constant 70 : index
    %c0_598 = arith.constant 0 : index
    %371 = vector.load %arg17[%c70_597, %c0_598] : memref<98x16xf32, #tpu.memory_space<vmem>>, vector<6x16xf32>
    %c12_599 = arith.constant 12 : index
    %c48_600 = arith.constant 48 : index
    %372 = vector.load %arg18[%c12_599, %c48_600] : memref<18x144xf32, #tpu.memory_space<vmem>>, vector<6x16xf32>
    tpu.vector_store %arg18[%c12_599, %c48_600], %371 {strides = array<i32>} : memref<18x144xf32, #tpu.memory_space<vmem>>, vector<6x16xf32>,
    %c78_601 = arith.constant 78 : index
    %c0_602 = arith.constant 0 : index
    %373 = vector.load %arg17[%c78_601, %c0_602] : memref<98x16xf32, #tpu.memory_space<vmem>>, vector<6x16xf32>
    %c12_603 = arith.constant 12 : index
    %c64_604 = arith.constant 64 : index
    %374 = vector.load %arg18[%c12_603, %c64_604] : memref<18x144xf32, #tpu.memory_space<vmem>>, vector<6x16xf32>
    tpu.vector_store %arg18[%c12_603, %c64_604], %373 {strides = array<i32>} : memref<18x144xf32, #tpu.memory_space<vmem>>, vector<6x16xf32>,
    %c72_605 = arith.constant 72 : index
    %c0_606 = arith.constant 0 : index
    %375 = vector.load %arg17[%c72_605, %c0_606] : memref<98x16xf32, #tpu.memory_space<vmem>>, vector<6x16xf32>
    %c12_607 = arith.constant 12 : index
    %c80_608 = arith.constant 80 : index
    %376 = vector.load %arg18[%c12_607, %c80_608] : memref<18x144xf32, #tpu.memory_space<vmem>>, vector<6x16xf32>
    tpu.vector_store %arg18[%c12_607, %c80_608], %375 {strides = array<i32>} : memref<18x144xf32, #tpu.memory_space<vmem>>, vector<6x16xf32>,
    %c84_609 = arith.constant 84 : index
    %c0_610 = arith.constant 0 : index
    %377 = vector.load %arg17[%c84_609, %c0_610] : memref<98x16xf32, #tpu.memory_space<vmem>>, vector<6x16xf32>
    %c12_611 = arith.constant 12 : index
    %c96_612 = arith.constant 96 : index
    %378 = vector.load %arg18[%c12_611, %c96_612] : memref<18x144xf32, #tpu.memory_space<vmem>>, vector<6x16xf32>
    tpu.vector_store %arg18[%c12_611, %c96_612], %377 {strides = array<i32>} : memref<18x144xf32, #tpu.memory_space<vmem>>, vector<6x16xf32>,
    %c92_613 = arith.constant 92 : index
    %c0_614 = arith.constant 0 : index
    %379 = vector.load %arg17[%c92_613, %c0_614] : memref<98x16xf32, #tpu.memory_space<vmem>>, vector<6x16xf32>
    %c12_615 = arith.constant 12 : index
    %c112_616 = arith.constant 112 : index
    %380 = vector.load %arg18[%c12_615, %c112_616] : memref<18x144xf32, #tpu.memory_space<vmem>>, vector<6x16xf32>
    tpu.vector_store %arg18[%c12_615, %c112_616], %379 {strides = array<i32>} : memref<18x144xf32, #tpu.memory_space<vmem>>, vector<6x16xf32>,
    %c86_617 = arith.constant 86 : index
    %c0_618 = arith.constant 0 : index
    %381 = vector.load %arg17[%c86_617, %c0_618] : memref<98x16xf32, #tpu.memory_space<vmem>>, vector<6x16xf32>
    %c12_619 = arith.constant 12 : index
    %c128_620 = arith.constant 128 : index
    %382 = vector.load %arg18[%c12_619, %c128_620] : memref<18x144xf32, #tpu.memory_space<vmem>>, vector<6x16xf32>
    tpu.vector_store %arg18[%c12_619, %c128_620], %381 {strides = array<i32>} : memref<18x144xf32, #tpu.memory_space<vmem>>, vector<6x16xf32>,
    %c0_621 = arith.constant 0 : index
    %c0_622 = arith.constant 0 : index
    %383 = vector.load %arg18[%c0_621, %c0_622] : memref<18x144xf32, #tpu.memory_space<vmem>>, vector<18x144xf32>
    %c0_623 = arith.constant 0 : index
    %c0_624 = arith.constant 0 : index
    %384 = vector.load %arg6[%c0_623, %c0_624] : memref<144x32xf32, #tpu.memory_space<vmem>>, vector<144x32xf32>
    %cst_625 = arith.constant dense<0.000000e+00> : vector<18x32xf32>
    %385 = tpu.matmul %383, %384, %cst_625 {dimension_numbers = #tpu.dot_dimension_numbers<[1], [0], [0], [1], [0, 0, 1, 1], [], []>} : vector<18x144xf32>, vector<144x32xf32>, vector<18x32xf32> -> vector<18x32xf32>
    %c0_626 = arith.constant 0 : index
    %c0_627 = arith.constant 0 : index
    %386 = vector.load %arg7[%c0_626, %c0_627] : memref<1x32xf32, #tpu.memory_space<vmem>>, vector<1x32xf32>
    %387 = vector.broadcast %386 : vector<1x32xf32> to vector<18x32xf32>
    %388 = arith.addf %385, %387 : vector<18x32xf32>
    %cst_628 = arith.constant 0.000000e+00 : f32
    %389 = vector.broadcast %cst_628 : f32 to vector<18x32xf32>
    %390 = arith.maximumf %388, %389 : vector<18x32xf32>
    %c0_629 = arith.constant 0 : index
    %c0_630 = arith.constant 0 : index
    %391 = vector.load %arg19[%c0_629, %c0_630] : memref<18x32xf32, #tpu.memory_space<vmem>>, vector<18x32xf32>
    tpu.vector_store %arg19[%c0_629, %c0_630], %390 {strides = array<i32>} : memref<18x32xf32, #tpu.memory_space<vmem>>, vector<18x32xf32>,
    %c0_631 = arith.constant 0 : index
    %c0_632 = arith.constant 0 : index
    %392 = vector.load %arg19[%c0_631, %c0_632] : memref<18x32xf32, #tpu.memory_space<vmem>>, vector<2x32xf32>
    %c0_633 = arith.constant 0 : index
    %c0_634 = arith.constant 0 : index
    %393 = vector.load %arg20[%c0_633, %c0_634] : memref<2x288xf32, #tpu.memory_space<vmem>>, vector<2x32xf32>
    tpu.vector_store %arg20[%c0_633, %c0_634], %392 {strides = array<i32>} : memref<2x288xf32, #tpu.memory_space<vmem>>, vector<2x32xf32>,
    %c2_635 = arith.constant 2 : index
    %c0_636 = arith.constant 0 : index
    %394 = vector.load %arg19[%c2_635, %c0_636] : memref<18x32xf32, #tpu.memory_space<vmem>>, vector<2x32xf32>
    %c0_637 = arith.constant 0 : index
    %c32_638 = arith.constant 32 : index
    %395 = vector.load %arg20[%c0_637, %c32_638] : memref<2x288xf32, #tpu.memory_space<vmem>>, vector<2x32xf32>
    tpu.vector_store %arg20[%c0_637, %c32_638], %394 {strides = array<i32>} : memref<2x288xf32, #tpu.memory_space<vmem>>, vector<2x32xf32>,
    %c4 = arith.constant 4 : index
    %c0_639 = arith.constant 0 : index
    %396 = vector.load %arg19[%c4, %c0_639] : memref<18x32xf32, #tpu.memory_space<vmem>>, vector<2x32xf32>
    %c0_640 = arith.constant 0 : index
    %c64_641 = arith.constant 64 : index
    %397 = vector.load %arg20[%c0_640, %c64_641] : memref<2x288xf32, #tpu.memory_space<vmem>>, vector<2x32xf32>
    tpu.vector_store %arg20[%c0_640, %c64_641], %396 {strides = array<i32>} : memref<2x288xf32, #tpu.memory_space<vmem>>, vector<2x32xf32>,
    %c6_642 = arith.constant 6 : index
    %c0_643 = arith.constant 0 : index
    %398 = vector.load %arg19[%c6_642, %c0_643] : memref<18x32xf32, #tpu.memory_space<vmem>>, vector<2x32xf32>
    %c0_644 = arith.constant 0 : index
    %c96_645 = arith.constant 96 : index
    %399 = vector.load %arg20[%c0_644, %c96_645] : memref<2x288xf32, #tpu.memory_space<vmem>>, vector<2x32xf32>
    tpu.vector_store %arg20[%c0_644, %c96_645], %398 {strides = array<i32>} : memref<2x288xf32, #tpu.memory_space<vmem>>, vector<2x32xf32>,
    %c8_646 = arith.constant 8 : index
    %c0_647 = arith.constant 0 : index
    %400 = vector.load %arg19[%c8_646, %c0_647] : memref<18x32xf32, #tpu.memory_space<vmem>>, vector<2x32xf32>
    %c0_648 = arith.constant 0 : index
    %c128_649 = arith.constant 128 : index
    %401 = vector.load %arg20[%c0_648, %c128_649] : memref<2x288xf32, #tpu.memory_space<vmem>>, vector<2x32xf32>
    tpu.vector_store %arg20[%c0_648, %c128_649], %400 {strides = array<i32>} : memref<2x288xf32, #tpu.memory_space<vmem>>, vector<2x32xf32>,
    %c10 = arith.constant 10 : index
    %c0_650 = arith.constant 0 : index
    %402 = vector.load %arg19[%c10, %c0_650] : memref<18x32xf32, #tpu.memory_space<vmem>>, vector<2x32xf32>
    %c0_651 = arith.constant 0 : index
    %c160 = arith.constant 160 : index
    %403 = vector.load %arg20[%c0_651, %c160] : memref<2x288xf32, #tpu.memory_space<vmem>>, vector<2x32xf32>
    tpu.vector_store %arg20[%c0_651, %c160], %402 {strides = array<i32>} : memref<2x288xf32, #tpu.memory_space<vmem>>, vector<2x32xf32>,
    %c12_652 = arith.constant 12 : index
    %c0_653 = arith.constant 0 : index
    %404 = vector.load %arg19[%c12_652, %c0_653] : memref<18x32xf32, #tpu.memory_space<vmem>>, vector<2x32xf32>
    %c0_654 = arith.constant 0 : index
    %c192 = arith.constant 192 : index
    %405 = vector.load %arg20[%c0_654, %c192] : memref<2x288xf32, #tpu.memory_space<vmem>>, vector<2x32xf32>
    tpu.vector_store %arg20[%c0_654, %c192], %404 {strides = array<i32>} : memref<2x288xf32, #tpu.memory_space<vmem>>, vector<2x32xf32>,
    %c14_655 = arith.constant 14 : index
    %c0_656 = arith.constant 0 : index
    %406 = vector.load %arg19[%c14_655, %c0_656] : memref<18x32xf32, #tpu.memory_space<vmem>>, vector<2x32xf32>
    %c0_657 = arith.constant 0 : index
    %c224_658 = arith.constant 224 : index
    %407 = vector.load %arg20[%c0_657, %c224_658] : memref<2x288xf32, #tpu.memory_space<vmem>>, vector<2x32xf32>
    tpu.vector_store %arg20[%c0_657, %c224_658], %406 {strides = array<i32>} : memref<2x288xf32, #tpu.memory_space<vmem>>, vector<2x32xf32>,
    %c16_659 = arith.constant 16 : index
    %c0_660 = arith.constant 0 : index
    %408 = vector.load %arg19[%c16_659, %c0_660] : memref<18x32xf32, #tpu.memory_space<vmem>>, vector<2x32xf32>
    %c0_661 = arith.constant 0 : index
    %c256 = arith.constant 256 : index
    %409 = vector.load %arg20[%c0_661, %c256] : memref<2x288xf32, #tpu.memory_space<vmem>>, vector<2x32xf32>
    tpu.vector_store %arg20[%c0_661, %c256], %408 {strides = array<i32>} : memref<2x288xf32, #tpu.memory_space<vmem>>, vector<2x32xf32>,
    %c0_662 = arith.constant 0 : index
    %c0_663 = arith.constant 0 : index
    %410 = vector.load %arg20[%c0_662, %c0_663] : memref<2x288xf32, #tpu.memory_space<vmem>>, vector<2x288xf32>
    %c0_664 = arith.constant 0 : index
    %c0_665 = arith.constant 0 : index
    %411 = vector.load %arg8[%c0_664, %c0_665] : memref<288x128xf32, #tpu.memory_space<vmem>>, vector<288x128xf32>
    %cst_666 = arith.constant dense<0.000000e+00> : vector<2x128xf32>
    %412 = tpu.matmul %410, %411, %cst_666 {dimension_numbers = #tpu.dot_dimension_numbers<[1], [0], [0], [1], [0, 0, 1, 1], [], []>} : vector<2x288xf32>, vector<288x128xf32>, vector<2x128xf32> -> vector<2x128xf32>
    %c0_667 = arith.constant 0 : index
    %c0_668 = arith.constant 0 : index
    %413 = vector.load %arg9[%c0_667, %c0_668] : memref<1x128xf32, #tpu.memory_space<vmem>>, vector<1x128xf32>
    %414 = vector.broadcast %413 : vector<1x128xf32> to vector<2x128xf32>
    %415 = arith.addf %412, %414 : vector<2x128xf32>
    %cst_669 = arith.constant 0.000000e+00 : f32
    %416 = vector.broadcast %cst_669 : f32 to vector<2x128xf32>
    %417 = arith.maximumf %415, %416 : vector<2x128xf32>
    %c0_670 = arith.constant 0 : index
    %c0_671 = arith.constant 0 : index
    %418 = vector.load %arg10[%c0_670, %c0_671] : memref<128x8xf32, #tpu.memory_space<vmem>>, vector<128x8xf32>
    %cst_672 = arith.constant dense<0.000000e+00> : vector<2x8xf32>
    %419 = tpu.matmul %417, %418, %cst_672 {dimension_numbers = #tpu.dot_dimension_numbers<[1], [0], [0], [1], [0, 0, 1, 1], [], []>} : vector<2x128xf32>, vector<128x8xf32>, vector<2x8xf32> -> vector<2x8xf32>
    %c0_673 = arith.constant 0 : index
    %c0_674 = arith.constant 0 : index
    %420 = vector.load %arg11[%c0_673, %c0_674] : memref<1x8xf32, #tpu.memory_space<vmem>>, vector<1x8xf32>
    %421 = vector.broadcast %420 : vector<1x8xf32> to vector<2x8xf32>
    %422 = arith.addf %419, %421 : vector<2x8xf32>
    %423 = vector.extract_strided_slice %422 {offsets = [0, 0], sizes = [2, 4], strides = [1, 1]} : vector<2x8xf32> to vector<2x4xf32>
    %424 = vector.extract_strided_slice %422 {offsets = [0, 4], sizes = [2, 4], strides = [1, 1]} : vector<2x8xf32> to vector<2x4xf32>
    %425 = math.exp %424 : vector<2x4xf32>
    %c0_675 = arith.constant 0 : index
    %c0_676 = arith.constant 0 : index
    %426 = vector.load %arg12[%c0_675, %c0_676] : memref<2x4xf32, #tpu.memory_space<vmem>>, vector<2x4xf32>
    %427 = arith.mulf %425, %426 : vector<2x4xf32>
    %428 = arith.addf %423, %427 : vector<2x4xf32>
    %c0_677 = arith.constant 0 : index
    %c0_678 = arith.constant 0 : index
    %429 = vector.load %arg13[%c0_677, %c0_678] : memref<2x4xf32, #tpu.memory_space<vmem>>, vector<2x4xf32>
    tpu.vector_store %arg13[%c0_677, %c0_678], %428 {strides = array<i32>} : memref<2x4xf32, #tpu.memory_space<vmem>>, vector<2x4xf32>,
    %430 = arith.mulf %425, %425 : vector<2x4xf32>
    %431 = arith.mulf %423, %423 : vector<2x4xf32>
    %432 = arith.addf %430, %431 : vector<2x4xf32>
    %433 = arith.subf %432, %424 : vector<2x4xf32>
    %cst_679 = arith.constant 5.000000e-01 : f32
    %434 = vector.broadcast %cst_679 : f32 to vector<2x4xf32>
    %435 = arith.subf %433, %434 : vector<2x4xf32>
    %436 = vector.shape_cast %435 : vector<2x4xf32> to vector<1x2x4xf32>
    %cst_680 = arith.constant dense<0.000000e+00> : vector<1xf32>
    %437 = vector.multi_reduction <add>, %436, %cst_680 [1, 2] : vector<1x2x4xf32> to vector<1xf32>
    %438 = vector.shape_cast %437 : vector<1xf32> to vector<1x1x1xf32>
    %439 = vector.extract %438[0, 0, 0] : f32 from vector<1x1x1xf32>
    %440 = vector.broadcast %439 : f32 to vector<1x1xf32>
    %c0_681 = arith.constant 0 : index
    %c0_682 = arith.constant 0 : index
    %441 = vector.load %arg14[%c0_681, %c0_682] : memref<1x1xf32, #tpu.memory_space<vmem>>, vector<1x1xf32>
    tpu.vector_store %arg14[%c0_681, %c0_682], %440 {strides = array<i32>} : memref<1x1xf32, #tpu.memory_space<vmem>>, vector<1x1xf32>,
    return
  }
}

</mosaic_0001>

<llo_original>
// kernel: variational_encoder_forward.1
$region0: #{variational_encoder_forward.1}
  #allocation0 [shape = 'u32[]', space=smem, size = 0x4, offset = 0x4, fixed_abs, tag = 'smem constant byte address 0x4 - core index']
  #allocation1 [shape = 'u32[144,128]{1,0:T(1,128)}', space=vmem, size = 0x12000, scoped, tag = 'internal scratch']
  #allocation2 [shape = 'f32[392,8]{1,0:T(8,128)}', space=vmem, size = 0x31000, scoped, tag = 'scratch operand']
  #allocation3 [shape = 'f32[98,72]{1,0:T(8,128)}', space=vmem, size = 0xd000, scoped, tag = 'scratch operand']
  #allocation4 [shape = 'f32[98,16]{1,0:T(8,128)}', space=vmem, size = 0xd000, scoped, tag = 'scratch operand']
  #allocation5 [shape = 'f32[18,144]{1,0:T(8,128)}', space=vmem, size = 0x6000, scoped, tag = 'scratch operand']
  #allocation6 [shape = 'f32[18,32]{1,0:T(8,128)}', space=vmem, size = 0x3000, scoped, tag = 'scratch operand']
  #allocation7 [shape = 'f32[2,288]{1,0:T(2,128)}', space=vmem, size = 0xc00, scoped, tag = 'scratch operand']
  %s0 = inlined_call_operand.vmem [shape: f32[392,9], index: 0, kind: input, shape index: {}]
  %s1 = inlined_call_operand.vmem [shape: f32[9,8], index: 1, kind: input, shape index: {}]
  %s2 = inlined_call_operand.vmem [shape: f32[1,8], index: 2, kind: input, shape index: {}]
  %s3 = inlined_call_operand.vmem [shape: f32[72,16], index: 3, kind: input, shape index: {}]
  %s4 = inlined_call_operand.vmem [shape: f32[1,16], index: 4, kind: input, shape index: {}]
  %s5 = inlined_call_operand.vmem [shape: f32[1,16], index: 5, kind: input, shape index: {}]
  %s6 = inlined_call_operand.vmem [shape: f32[144,32], index: 6, kind: input, shape index: {}]
  %s7 = inlined_call_operand.vmem [shape: f32[1,32], index: 7, kind: input, shape index: {}]
  %s8 = inlined_call_operand.vmem [shape: f32[288,128], index: 8, kind: input, shape index: {}]
  %s9 = inlined_call_operand.vmem [shape: f32[1,128], index: 9, kind: input, shape index: {}]
  %s10 = inlined_call_operand.vmem [shape: f32[128,8], index: 10, kind: input, shape index: {}]
  %s11 = inlined_call_operand.vmem [shape: f32[1,8], index: 11, kind: input, shape index: {}]
  %s12 = inlined_call_operand.vmem [shape: f32[2,4], index: 12, kind: input, shape index: {}]
  %s13 = inlined_call_operand.hbm [shape: f32[2,4], index: 13, kind: output, shape index: {0}]
  %s14 = inlined_call_operand.hbm [shape: f32[1,1], index: 14, kind: output, shape index: {1}]
  %15 = xla_tuple %s13, %s14
  %s16 = sld [smem:[#allocation0]]
  $region70: #{variational_encoder_forward.1} parent=0
    _
  %s18 = ssub.s32 1, %s16
  %s19 = scalar_select 0, %s18, %s16
  $region1: #{variational_encoder_forward.1} parent=0
    #allocation8 [shape = 'u8[1024]{0}', space=vmem, size = 0x400, scoped, tag = 'output window, operand 0, single buffered']
    #allocation9 [shape = 's32[1]{0}', space=sflag, size = 0x4, scoped, tag = 'scoped memory for variational_encoder_forward.1']
    #allocation10 [shape = 'u8[512]{0}', space=vmem, size = 0x400, scoped, tag = 'output window, operand 1, single buffered']
    #allocation11 [shape = 's32[1]{0}', space=sflag, size = 0x4, scoped, tag = 'scoped memory for variational_encoder_forward.1']
    %20 = vsyncpa [#allocation9], 0
    %21 = vsyncpa [#allocation11], 0
    // Predicated region
    $region2: #{variational_encoder_forward.1} parent=1 // pred_check
      _
    $region3: #{variational_encoder_forward.1} parent=1 // pred_check_branch
      %23 = sbr.rel (0) target = $region5
    $region4: #{variational_encoder_forward.1} parent=1 // pred_region
      _
    $region5: #{variational_encoder_forward.1} parent=1 // pred_fallthru
      _
    // Predicated region
    $region6: #{variational_encoder_forward.1} parent=1 // pred_check
      _
    $region7: #{variational_encoder_forward.1} parent=1 // pred_check_branch
      %25 = sbr.rel (0) target = $region9
    $region8: #{variational_encoder_forward.1} parent=1 // pred_region
      _
    $region9: #{variational_encoder_forward.1} parent=1 // pred_fallthru
      _
    // Predicated region
    $region10: #{variational_encoder_forward.1} parent=1 // pred_check
      _
    $region11: #{variational_encoder_forward.1} parent=1 // pred_check_branch
      %27 = sbr.rel (0) target = $region13
    $region12: #{variational_encoder_forward.1} parent=1 // pred_region
      _
    $region13: #{variational_encoder_forward.1} parent=1 // pred_fallthru
      _
    // Predicated region
    $region14: #{variational_encoder_forward.1} parent=1 // pred_check
      _
    $region15: #{variational_encoder_forward.1} parent=1 // pred_check_branch
      %29 = sbr.rel (0) target = $region17
    $region16: #{variational_encoder_forward.1} parent=1 // pred_region
      _
    $region17: #{variational_encoder_forward.1} parent=1 // pred_fallthru
      _
    // Predicated region
    $region18: #{variational_encoder_forward.1} parent=1 // pred_check
      _
    $region19: #{variational_encoder_forward.1} parent=1 // pred_check_branch
      %31 = sbr.rel (0) target = $region21
    $region20: #{variational_encoder_forward.1} parent=1 // pred_region
      _
    $region21: #{variational_encoder_forward.1} parent=1 // pred_fallthru
      _
    // Predicated region
    $region22: #{variational_encoder_forward.1} parent=1 // pred_check
      _
    $region23: #{variational_encoder_forward.1} parent=1 // pred_check_branch
      %33 = sbr.rel (0) target = $region25
    $region24: #{variational_encoder_forward.1} parent=1 // pred_region
      _
    $region25: #{variational_encoder_forward.1} parent=1 // pred_fallthru
      _
    // Predicated region
    $region26: #{variational_encoder_forward.1} parent=1 // pred_check
      _
    $region27: #{variational_encoder_forward.1} parent=1 // pred_check_branch
      %35 = sbr.rel (0) target = $region29
    $region28: #{variational_encoder_forward.1} parent=1 // pred_region
      _
    $region29: #{variational_encoder_forward.1} parent=1 // pred_fallthru
      _
    // Predicated region
    $region30: #{variational_encoder_forward.1} parent=1 // pred_check
      _
    $region31: #{variational_encoder_forward.1} parent=1 // pred_check_branch
      %37 = sbr.rel (0) target = $region33
    $region32: #{variational_encoder_forward.1} parent=1 // pred_region
      _
    $region33: #{variational_encoder_forward.1} parent=1 // pred_fallthru
      _
    // Predicated region
    $region34: #{variational_encoder_forward.1} parent=1 // pred_check
      _
    $region35: #{variational_encoder_forward.1} parent=1 // pred_check_branch
      %39 = sbr.rel (0) target = $region37
    $region36: #{variational_encoder_forward.1} parent=1 // pred_region
      _
    $region37: #{variational_encoder_forward.1} parent=1 // pred_fallthru
      _
    // Predicated region
    $region38: #{variational_encoder_forward.1} parent=1 // pred_check
      _
    $region39: #{variational_encoder_forward.1} parent=1 // pred_check_branch
      %41 = sbr.rel (0) target = $region41
    $region40: #{variational_encoder_forward.1} parent=1 // pred_region
      _
    $region41: #{variational_encoder_forward.1} parent=1 // pred_fallthru
      _
    // Predicated region
    $region42: #{variational_encoder_forward.1} parent=1 // pred_check
      _
    $region43: #{variational_encoder_forward.1} parent=1 // pred_check_branch
      %43 = sbr.rel (0) target = $region45
    $region44: #{variational_encoder_forward.1} parent=1 // pred_region
      _
    $region45: #{variational_encoder_forward.1} parent=1 // pred_fallthru
      _
    // Predicated region
    $region46: #{variational_encoder_forward.1} parent=1 // pred_check
      _
    $region47: #{variational_encoder_forward.1} parent=1 // pred_check_branch
      %45 = sbr.rel (0) target = $region49
    $region48: #{variational_encoder_forward.1} parent=1 // pred_region
      _
    $region49: #{variational_encoder_forward.1} parent=1 // pred_fallthru
      _
    // Predicated region
    $region50: #{variational_encoder_forward.1} parent=1 // pred_check
      _
    $region51: #{variational_encoder_forward.1} parent=1 // pred_check_branch
      %47 = sbr.rel (0) target = $region53
    $region52: #{variational_encoder_forward.1} parent=1 // pred_region
      _
    $region53: #{variational_encoder_forward.1} parent=1 // pred_fallthru
      _
    %v48 = vld [vmem:[%s0] sm:$0xff]
    %v49 = vld [vmem:[%s0 + $0x8] sm:$0xff]
    %v50 = vld [vmem:[%s0 + $0x10] sm:$0xff]
    %v51 = vld [vmem:[%s0 + $0x18] sm:$0xff]
    %v52 = vld [vmem:[%s0 + $0x20] sm:$0xff]
    %v53 = vld [vmem:[%s0 + $0x28] sm:$0xff]
    %v54 = vld [vmem:[%s0 + $0x30] sm:$0xff]
    %v55 = vld [vmem:[%s0 + $0x38] sm:$0xff]
    %v56 = vld [vmem:[%s0 + $0x40] sm:$0xff]
    %v57 = vld [vmem:[%s0 + $0x48] sm:$0xff]
    %v58 = vld [vmem:[%s0 + $0x50] sm:$0xff]
    %v59 = vld [vmem:[%s0 + $0x58] sm:$0xff]
    %v60 = vld [vmem:[%s0 + $0x60] sm:$0xff]
    %v61 = vld [vmem:[%s0 + $0x68] sm:$0xff]
    %v62 = vld [vmem:[%s0 + $0x70] sm:$0xff]
    %v63 = vld [vmem:[%s0 + $0x78] sm:$0xff]
    %v64 = vld [vmem:[%s0 + $0x80] sm:$0xff]
    %v65 = vld [vmem:[%s0 + $0x88] sm:$0xff]
    %v66 = vld [vmem:[%s0 + $0x90] sm:$0xff]
    %v67 = vld [vmem:[%s0 + $0x98] sm:$0xff]
    %v68 = vld [vmem:[%s0 + $0xa0] sm:$0xff]
    %v69 = vld [vmem:[%s0 + $0xa8] sm:$0xff]
    %v70 = vld [vmem:[%s0 + $0xb0] sm:$0xff]
    %v71 = vld [vmem:[%s0 + $0xb8] sm:$0xff]
    %v72 = vld [vmem:[%s0 + $0xc0] sm:$0xff]
    %v73 = vld [vmem:[%s0 + $0xc8] sm:$0xff]
    %v74 = vld [vmem:[%s0 + $0xd0] sm:$0xff]
    %v75 = vld [vmem:[%s0 + $0xd8] sm:$0xff]
    %v76 = vld [vmem:[%s0 + $0xe0] sm:$0xff]
    %v77 = vld [vmem:[%s0 + $0xe8] sm:$0xff]
    %v78 = vld [vmem:[%s0 + $0xf0] sm:$0xff]
    %v79 = vld [vmem:[%s0 + $0xf8] sm:$0xff]
    %v80 = vld [vmem:[%s0 + $0x100] sm:$0xff]
    %v81 = vld [vmem:[%s0 + $0x108] sm:$0xff]
    %v82 = vld [vmem:[%s0 + $0x110] sm:$0xff]
    %v83 = vld [vmem:[%s0 + $0x118] sm:$0xff]
    %v84 = vld [vmem:[%s0 + $0x120] sm:$0xff]
    %v85 = vld [vmem:[%s0 + $0x128] sm:$0xff]
    %v86 = vld [vmem:[%s0 + $0x130] sm:$0xff]
    %v87 = vld [vmem:[%s0 + $0x138] sm:$0xff]
    %v88 = vld [vmem:[%s0 + $0x140] sm:$0xff]
    %v89 = vld [vmem:[%s0 + $0x148] sm:$0xff]
    %v90 = vld [vmem:[%s0 + $0x150] sm:$0xff]
    %v91 = vld [vmem:[%s0 + $0x158] sm:$0xff]
    %v92 = vld [vmem:[%s0 + $0x160] sm:$0xff]
    %v93 = vld [vmem:[%s0 + $0x168] sm:$0xff]
    %v94 = vld [vmem:[%s0 + $0x170] sm:$0xff]
    %v95 = vld [vmem:[%s0 + $0x178] sm:$0xff]
    %v96 = vld [vmem:[%s0 + $0x180] sm:$0xff]
    %v97 = vld [vmem:[%s1] sm:$0xff]
    %v98 = vld [vmem:[%s1 + $0x8] sm:$0x1]
    %v99 = vld [vmem:[%s2] sm:$0x1]
    %v101 = vlaneseq
    %v102 = vshrl.u32 %v101, 7
    %v103 = vsub.s32 0, %v102
    %v104 = vrot.slane %v99, %v103
    %vm106 = vcmask 72704
    %v108 = vsel %vm106, %v48, 0
    %v111 = vsel %vm106, %v49, 0
    %v114 = vsel %vm106, %v50, 0
    %v117 = vsel %vm106, %v51, 0
    %v120 = vsel %vm106, %v52, 0
    %v123 = vsel %vm106, %v53, 0
    %v126 = vsel %vm106, %v54, 0
    %v129 = vsel %vm106, %v55, 0
    %v132 = vsel %vm106, %v56, 0
    %v135 = vsel %vm106, %v57, 0
    %v138 = vsel %vm106, %v58, 0
    %v141 = vsel %vm106, %v59, 0
    %v144 = vsel %vm106, %v60, 0
    %v147 = vsel %vm106, %v61, 0
    %v150 = vsel %vm106, %v62, 0
    %v153 = vsel %vm106, %v63, 0
    %v156 = vsel %vm106, %v64, 0
    %v159 = vsel %vm106, %v65, 0
    %v162 = vsel %vm106, %v66, 0
    %v165 = vsel %vm106, %v67, 0
    %v168 = vsel %vm106, %v68, 0
    %v171 = vsel %vm106, %v69, 0
    %v174 = vsel %vm106, %v70, 0
    %v177 = vsel %vm106, %v71, 0
    %v180 = vsel %vm106, %v72, 0
    %v183 = vsel %vm106, %v73, 0
    %v186 = vsel %vm106, %v74, 0
    %v189 = vsel %vm106, %v75, 0
    %v192 = vsel %vm106, %v76, 0
    %v195 = vsel %vm106, %v77, 0
    %v198 = vsel %vm106, %v78, 0
    %v201 = vsel %vm106, %v79, 0
    %v204 = vsel %vm106, %v80, 0
    %v207 = vsel %vm106, %v81, 0
    %v210 = vsel %vm106, %v82, 0
    %v213 = vsel %vm106, %v83, 0
    %v216 = vsel %vm106, %v84, 0
    %v219 = vsel %vm106, %v85, 0
    %v222 = vsel %vm106, %v86, 0
    %v225 = vsel %vm106, %v87, 0
    %v228 = vsel %vm106, %v88, 0
    %v231 = vsel %vm106, %v89, 0
    %v234 = vsel %vm106, %v90, 0
    %v237 = vsel %vm106, %v91, 0
    %v240 = vsel %vm106, %v92, 0
    %v243 = vsel %vm106, %v93, 0
    %v246 = vsel %vm106, %v94, 0
    %v249 = vsel %vm106, %v95, 0
    %v252 = vsel %vm106, %v96, 0
    %vm254 = vcmask 1040384
    %v256 = vsel %vm254, %v98, 0
    %258 = vmatprep.subr.mxu0 0.0
    %259 = vmatpush1.msra.mxu0 %v97
    %260 = vmatprep.subr.mxu0 0.0
    %261 = vmatpush1.msra.mxu0 %v256
    %262 = vmatprep.subr.mxu0 0.0
    %263 = vmatpush1.msra.mxu0 0.0
    %264 = vmatprep.subr.mxu0 0.0
    %265 = vmatpush1.msra.mxu0 0.0
    %266 = vmatprep.subr.mxu0 0.0
    %267 = vmatpush1.msra.mxu0 0.0
    %268 = vmatprep.subr.mxu0 0.0
    %269 = vmatpush1.msra.mxu0 0.0
    %270 = vmatprep.subr.mxu0 0.0
    %271 = vmatpush1.msra.mxu0 0.0
    %272 = vmatprep.subr.mxu0 0.0
    %273 = vmatpush1.msra.mxu0 0.0
    %274 = vmatprep.subr.mxu0 0.0
    %275 = vmatpush1.msra.mxu0 0.0
    %276 = vmatprep.subr.mxu0 0.0
    %277 = vmatpush1.msra.mxu0 0.0
    %278 = vmatprep.subr.mxu0 0.0
    %279 = vmatpush1.msra.mxu0 0.0
    %280 = vmatprep.subr.mxu0 0.0
    %281 = vmatpush1.msra.mxu0 0.0
    %282 = vmatprep.subr.mxu0 0.0
    %283 = vmatpush1.msra.mxu0 0.0
    %284 = vmatprep.subr.mxu0 0.0
    %285 = vmatpush1.msra.mxu0 0.0
    %286 = vmatprep.subr.mxu0 0.0
    %287 = vmatpush1.msra.mxu0 0.0
    %288 = vmatprep.subr.mxu0 0.0
    %289 = vmatpush1.msra.mxu0 0.0
    %290 = vmatprep.subr.mxu0 0.0
    %291 = vmatpush1.msra.mxu0 0.0
    %292 = vmatprep.subr.mxu0 0.0
    %293 = vmatpush1.msra.mxu0 0.0
    %294 = vmatprep.subr.mxu0 0.0
    %295 = vmatpush1.msra.mxu0 0.0
    %296 = vmatprep.subr.mxu0 0.0
    %297 = vmatpush1.msra.mxu0 0.0
    %298 = vmatprep.subr.mxu0 0.0
    %299 = vmatpush1.msra.mxu0 0.0
    %300 = vmatprep.subr.mxu0 0.0
    %301 = vmatpush1.msra.mxu0 0.0
    %302 = vmatprep.subr.mxu0 0.0
    %303 = vmatpush1.msra.mxu0 0.0
    %304 = vmatprep.subr.mxu0 0.0
    %305 = vmatpush1.msra.mxu0 0.0
    %306 = vmatprep.subr.mxu0 0.0
    %307 = vmatpush1.msra.mxu0 0.0
    %308 = vmatprep.subr.mxu0 0.0
    %309 = vmatpush1.msra.mxu0 0.0
    %310 = vmatprep.subr.mxu0 0.0
    %311 = vmatpush1.msra.mxu0 0.0
    %312 = vmatprep.subr.mxu0 0.0
    %313 = vmatpush1.msra.mxu0 0.0
    %314 = vmatprep.subr.mxu0 0.0
    %315 = vmatpush1.msra.mxu0 0.0
    %316 = vmatprep.subr.mxu0 0.0
    %317 = vmatpush1.msra.mxu0 0.0
    %318 = vmatprep.subr.mxu0 0.0
    %319 = vmatpush1.msra.mxu0 0.0
    %320 = vmatprep.subr.mxu0 0.0
    %321 = vmatpush1.msra.mxu0 0.0
    %322 = vmatprep.mubr.f32.mxu0 0.0
    %323 = vmatmul.mubr.f32.gmra.mrb[0].mxu0 %v108
    %v324 = vpop.f32.mrb[0].mxu0
    %v325 = vadd.f32 %v104, %v324
    %v326 = vpop.f32.mrb[0].mxu0
    %327 = vmatprep.mubr.f32.mxu0 0.0
    %328 = vmatmul.mubr.f32.gmra.mrb[0].mxu0 %v111
    %v329 = vpop.f32.mrb[0].mxu0
    %v330 = vadd.f32 %v104, %v329
    %v331 = vpop.f32.mrb[0].mxu0
    %332 = vmatprep.mubr.f32.mxu0 0.0
    %333 = vmatmul.mubr.f32.gmra.mrb[0].mxu0 %v114
    %v334 = vpop.f32.mrb[0].mxu0
    %v335 = vadd.f32 %v104, %v334
    %v336 = vpop.f32.mrb[0].mxu0
    %337 = vmatprep.mubr.f32.mxu0 0.0
    %338 = vmatmul.mubr.f32.gmra.mrb[0].mxu0 %v117
    %v339 = vpop.f32.mrb[0].mxu0
    %v340 = vadd.f32 %v104, %v339
    %v341 = vpop.f32.mrb[0].mxu0
    %342 = vmatprep.mubr.f32.mxu0 0.0
    %343 = vmatmul.mubr.f32.gmra.mrb[0].mxu0 %v120
    %v344 = vpop.f32.mrb[0].mxu0
    %v345 = vadd.f32 %v104, %v344
    %v346 = vpop.f32.mrb[0].mxu0
    %347 = vmatprep.mubr.f32.mxu0 0.0
    %348 = vmatmul.mubr.f32.gmra.mrb[0].mxu0 %v123
    %v349 = vpop.f32.mrb[0].mxu0
    %v350 = vadd.f32 %v104, %v349
    %v351 = vpop.f32.mrb[0].mxu0
    %352 = vmatprep.mubr.f32.mxu0 0.0
    %353 = vmatmul.mubr.f32.gmra.mrb[0].mxu0 %v126
    %v354 = vpop.f32.mrb[0].mxu0
    %v355 = vadd.f32 %v104, %v354
    %v356 = vpop.f32.mrb[0].mxu0
    %357 = vmatprep.mubr.f32.mxu0 0.0
    %358 = vmatmul.mubr.f32.gmra.mrb[0].mxu0 %v129
    %v359 = vpop.f32.mrb[0].mxu0
    %v360 = vadd.f32 %v104, %v359
    %v361 = vpop.f32.mrb[0].mxu0
    %362 = vmatprep.mubr.f32.mxu0 0.0
    %363 = vmatmul.mubr.f32.gmra.mrb[0].mxu0 %v132
    %v364 = vpop.f32.mrb[0].mxu0
    %v365 = vadd.f32 %v104, %v364
    %v366 = vpop.f32.mrb[0].mxu0
    %367 = vmatprep.mubr.f32.mxu0 0.0
    %368 = vmatmul.mubr.f32.gmra.mrb[0].mxu0 %v135
    %v369 = vpop.f32.mrb[0].mxu0
    %v370 = vadd.f32 %v104, %v369
    %v371 = vpop.f32.mrb[0].mxu0
    %372 = vmatprep.mubr.f32.mxu0 0.0
    %373 = vmatmul.mubr.f32.gmra.mrb[0].mxu0 %v138
    %v374 = vpop.f32.mrb[0].mxu0
    %v375 = vadd.f32 %v104, %v374
    %v376 = vpop.f32.mrb[0].mxu0
    %377 = vmatprep.mubr.f32.mxu0 0.0
    %378 = vmatmul.mubr.f32.gmra.mrb[0].mxu0 %v141
    %v379 = vpop.f32.mrb[0].mxu0
    %v380 = vadd.f32 %v104, %v379
    %v381 = vpop.f32.mrb[0].mxu0
    %382 = vmatprep.mubr.f32.mxu0 0.0
    %383 = vmatmul.mubr.f32.gmra.mrb[0].mxu0 %v144
    %v384 = vpop.f32.mrb[0].mxu0
    %v385 = vadd.f32 %v104, %v384
    %v386 = vpop.f32.mrb[0].mxu0
    %387 = vmatprep.mubr.f32.mxu0 0.0
    %388 = vmatmul.mubr.f32.gmra.mrb[0].mxu0 %v147
    %v389 = vpop.f32.mrb[0].mxu0
    %v390 = vadd.f32 %v104, %v389
    %v391 = vpop.f32.mrb[0].mxu0
    %392 = vmatprep.mubr.f32.mxu0 0.0
    %393 = vmatmul.mubr.f32.gmra.mrb[0].mxu0 %v150
    %v394 = vpop.f32.mrb[0].mxu0
    %v395 = vadd.f32 %v104, %v394
    %v396 = vpop.f32.mrb[0].mxu0
    %397 = vmatprep.mubr.f32.mxu0 0.0
    %398 = vmatmul.mubr.f32.gmra.mrb[0].mxu0 %v153
    %v399 = vpop.f32.mrb[0].mxu0
    %v400 = vadd.f32 %v104, %v399
    %v401 = vpop.f32.mrb[0].mxu0
    %402 = vmatprep.mubr.f32.mxu0 0.0
    %403 = vmatmul.mubr.f32.gmra.mrb[0].mxu0 %v156
    %v404 = vpop.f32.mrb[0].mxu0
    %v405 = vadd.f32 %v104, %v404
    %v406 = vpop.f32.mrb[0].mxu0
    %407 = vmatprep.mubr.f32.mxu0 0.0
    %408 = vmatmul.mubr.f32.gmra.mrb[0].mxu0 %v159
    %v409 = vpop.f32.mrb[0].mxu0
    %v410 = vadd.f32 %v104, %v409
    %v411 = vpop.f32.mrb[0].mxu0
    %412 = vmatprep.mubr.f32.mxu0 0.0
    %413 = vmatmul.mubr.f32.gmra.mrb[0].mxu0 %v162
    %v414 = vpop.f32.mrb[0].mxu0
    %v415 = vadd.f32 %v104, %v414
    %v416 = vpop.f32.mrb[0].mxu0
    %417 = vmatprep.mubr.f32.mxu0 0.0
    %418 = vmatmul.mubr.f32.gmra.mrb[0].mxu0 %v165
    %v419 = vpop.f32.mrb[0].mxu0
    %v420 = vadd.f32 %v104, %v419
    %v421 = vpop.f32.mrb[0].mxu0
    %422 = vmatprep.mubr.f32.mxu0 0.0
    %423 = vmatmul.mubr.f32.gmra.mrb[0].mxu0 %v168
    %v424 = vpop.f32.mrb[0].mxu0
    %v425 = vadd.f32 %v104, %v424
    %v426 = vpop.f32.mrb[0].mxu0
    %427 = vmatprep.mubr.f32.mxu0 0.0
    %428 = vmatmul.mubr.f32.gmra.mrb[0].mxu0 %v171
    %v429 = vpop.f32.mrb[0].mxu0
    %v430 = vadd.f32 %v104, %v429
    %v431 = vpop.f32.mrb[0].mxu0
    %432 = vmatprep.mubr.f32.mxu0 0.0
    %433 = vmatmul.mubr.f32.gmra.mrb[0].mxu0 %v174
    %v434 = vpop.f32.mrb[0].mxu0
    %v435 = vadd.f32 %v104, %v434
    %v436 = vpop.f32.mrb[0].mxu0
    %437 = vmatprep.mubr.f32.mxu0 0.0
    %438 = vmatmul.mubr.f32.gmra.mrb[0].mxu0 %v177
    %v439 = vpop.f32.mrb[0].mxu0
    %v440 = vadd.f32 %v104, %v439
    %v441 = vpop.f32.mrb[0].mxu0
    %442 = vmatprep.mubr.f32.mxu0 0.0
    %443 = vmatmul.mubr.f32.gmra.mrb[0].mxu0 %v180
    %v444 = vpop.f32.mrb[0].mxu0
    %v445 = vadd.f32 %v104, %v444
    %v446 = vpop.f32.mrb[0].mxu0
    %447 = vmatprep.mubr.f32.mxu0 0.0
    %448 = vmatmul.mubr.f32.gmra.mrb[0].mxu0 %v183
    %v449 = vpop.f32.mrb[0].mxu0
    %v450 = vadd.f32 %v104, %v449
    %v451 = vpop.f32.mrb[0].mxu0
    %452 = vmatprep.mubr.f32.mxu0 0.0
    %453 = vmatmul.mubr.f32.gmra.mrb[0].mxu0 %v186
    %v454 = vpop.f32.mrb[0].mxu0
    %v455 = vadd.f32 %v104, %v454
    %v456 = vpop.f32.mrb[0].mxu0
    %457 = vmatprep.mubr.f32.mxu0 0.0
    %458 = vmatmul.mubr.f32.gmra.mrb[0].mxu0 %v189
    %v459 = vpop.f32.mrb[0].mxu0
    %v460 = vadd.f32 %v104, %v459
    %v461 = vpop.f32.mrb[0].mxu0
    %462 = vmatprep.mubr.f32.mxu0 0.0
    %463 = vmatmul.mubr.f32.gmra.mrb[0].mxu0 %v192
    %v464 = vpop.f32.mrb[0].mxu0
    %v465 = vadd.f32 %v104, %v464
    %v466 = vpop.f32.mrb[0].mxu0
    %467 = vmatprep.mubr.f32.mxu0 0.0
    %468 = vmatmul.mubr.f32.gmra.mrb[0].mxu0 %v195
    %v469 = vpop.f32.mrb[0].mxu0
    %v470 = vadd.f32 %v104, %v469
    %v471 = vpop.f32.mrb[0].mxu0
    %472 = vmatprep.mubr.f32.mxu0 0.0
    %473 = vmatmul.mubr.f32.gmra.mrb[0].mxu0 %v198
    %v474 = vpop.f32.mrb[0].mxu0
    %v475 = vadd.f32 %v104, %v474
    %v476 = vpop.f32.mrb[0].mxu0
    %477 = vmatprep.mubr.f32.mxu0 0.0
    %478 = vmatmul.mubr.f32.gmra.mrb[0].mxu0 %v201
    %v479 = vpop.f32.mrb[0].mxu0
    %v480 = vadd.f32 %v104, %v479
    %v481 = vpop.f32.mrb[0].mxu0
    %482 = vmatprep.mubr.f32.mxu0 0.0
    %483 = vmatmul.mubr.f32.gmra.mrb[0].mxu0 %v204
    %v484 = vpop.f32.mrb[0].mxu0
    %v485 = vadd.f32 %v104, %v484
    %v486 = vpop.f32.mrb[0].mxu0
    %487 = vmatprep.mubr.f32.mxu0 0.0
    %488 = vmatmul.mubr.f32.gmra.mrb[0].mxu0 %v207
    %v489 = vpop.f32.mrb[0].mxu0
    %v490 = vadd.f32 %v104, %v489
    %v491 = vpop.f32.mrb[0].mxu0
    %492 = vmatprep.mubr.f32.mxu0 0.0
    %493 = vmatmul.mubr.f32.gmra.mrb[0].mxu0 %v210
    %v494 = vpop.f32.mrb[0].mxu0
    %v495 = vadd.f32 %v104, %v494
    %v496 = vpop.f32.mrb[0].mxu0
    %497 = vmatprep.mubr.f32.mxu0 0.0
    %498 = vmatmul.mubr.f32.gmra.mrb[0].mxu0 %v213
    %v499 = vpop.f32.mrb[0].mxu0
    %v500 = vadd.f32 %v104, %v499
    %v501 = vpop.f32.mrb[0].mxu0
    %502 = vmatprep.mubr.f32.mxu0 0.0
    %503 = vmatmul.mubr.f32.gmra.mrb[0].mxu0 %v216
    %v504 = vpop.f32.mrb[0].mxu0
    %v505 = vadd.f32 %v104, %v504
    %v506 = vpop.f32.mrb[0].mxu0
    %507 = vmatprep.mubr.f32.mxu0 0.0
    %508 = vmatmul.mubr.f32.gmra.mrb[0].mxu0 %v219
    %v509 = vpop.f32.mrb[0].mxu0
    %v510 = vadd.f32 %v104, %v509
    %v511 = vpop.f32.mrb[0].mxu0
    %512 = vmatprep.mubr.f32.mxu0 0.0
    %513 = vmatmul.mubr.f32.gmra.mrb[0].mxu0 %v222
    %v514 = vpop.f32.mrb[0].mxu0
    %v515 = vadd.f32 %v104, %v514
    %v516 = vpop.f32.mrb[0].mxu0
    %517 = vmatprep.mubr.f32.mxu0 0.0
    %518 = vmatmul.mubr.f32.gmra.mrb[0].mxu0 %v225
    %v519 = vpop.f32.mrb[0].mxu0
    %v520 = vadd.f32 %v104, %v519
    %v521 = vpop.f32.mrb[0].mxu0
    %522 = vmatprep.mubr.f32.mxu0 0.0
    %523 = vmatmul.mubr.f32.gmra.mrb[0].mxu0 %v228
    %v524 = vpop.f32.mrb[0].mxu0
    %v525 = vadd.f32 %v104, %v524
    %v526 = vpop.f32.mrb[0].mxu0
    %527 = vmatprep.mubr.f32.mxu0 0.0
    %528 = vmatmul.mubr.f32.gmra.mrb[0].mxu0 %v231
    %v529 = vpop.f32.mrb[0].mxu0
    %v530 = vadd.f32 %v104, %v529
    %v531 = vpop.f32.mrb[0].mxu0
    %532 = vmatprep.mubr.f32.mxu0 0.0
    %533 = vmatmul.mubr.f32.gmra.mrb[0].mxu0 %v234
    %v534 = vpop.f32.mrb[0].mxu0
    %v535 = vadd.f32 %v104, %v534
    %v536 = vpop.f32.mrb[0].mxu0
    %537 = vmatprep.mubr.f32.mxu0 0.0
    %538 = vmatmul.mubr.f32.gmra.mrb[0].mxu0 %v237
    %v539 = vpop.f32.mrb[0].mxu0
    %v540 = vadd.f32 %v104, %v539
    %v541 = vpop.f32.mrb[0].mxu0
    %542 = vmatprep.mubr.f32.mxu0 0.0
    %543 = vmatmul.mubr.f32.gmra.mrb[0].mxu0 %v240
    %v544 = vpop.f32.mrb[0].mxu0
    %v545 = vadd.f32 %v104, %v544
    %v546 = vpop.f32.mrb[0].mxu0
    %547 = vmatprep.mubr.f32.mxu0 0.0
    %548 = vmatmul.mubr.f32.gmra.mrb[0].mxu0 %v243
    %v549 = vpop.f32.mrb[0].mxu0
    %v550 = vadd.f32 %v104, %v549
    %v551 = vpop.f32.mrb[0].mxu0
    %552 = vmatprep.mubr.f32.mxu0 0.0
    %553 = vmatmul.mubr.f32.gmra.mrb[0].mxu0 %v246
    %v554 = vpop.f32.mrb[0].mxu0
    %v555 = vadd.f32 %v104, %v554
    %v556 = vpop.f32.mrb[0].mxu0
    %557 = vmatprep.mubr.f32.mxu0 0.0
    %558 = vmatmul.mubr.f32.gmra.mrb[0].mxu0 %v249
    %v559 = vpop.f32.mrb[0].mxu0
    %v560 = vadd.f32 %v104, %v559
    %v561 = vpop.f32.mrb[0].mxu0
    %562 = vmatprep.mubr.f32.mxu0 0.0
    %563 = vmatmul.mubr.f32.gmra.mrb[0].mxu0 %v252
    %v564 = vpop.f32.mrb[0].mxu0
    %v565 = vadd.f32 %v104, %v564
    %v566 = vpop.f32.mrb[0].mxu0
    %567 = vdwg.mxu0
    %v568 = vmax.f32 %v325, 0.0
    %v569 = vmax.f32 %v330, 0.0
    %v570 = vmax.f32 %v335, 0.0
    %v571 = vmax.f32 %v340, 0.0
    %v572 = vmax.f32 %v345, 0.0
    %v573 = vmax.f32 %v350, 0.0
    %v574 = vmax.f32 %v355, 0.0
    %v575 = vmax.f32 %v360, 0.0
    %v576 = vmax.f32 %v365, 0.0
    %v577 = vmax.f32 %v370, 0.0
    %v578 = vmax.f32 %v375, 0.0
    %v579 = vmax.f32 %v380, 0.0
    %v580 = vmax.f32 %v385, 0.0
    %v581 = vmax.f32 %v390, 0.0
    %v582 = vmax.f32 %v395, 0.0
    %v583 = vmax.f32 %v400, 0.0
    %v584 = vmax.f32 %v405, 0.0
    %v585 = vmax.f32 %v410, 0.0
    %v586 = vmax.f32 %v415, 0.0
    %v587 = vmax.f32 %v420, 0.0
    %v588 = vmax.f32 %v425, 0.0
    %v589 = vmax.f32 %v430, 0.0
    %v590 = vmax.f32 %v435, 0.0
    %v591 = vmax.f32 %v440, 0.0
    %v592 = vmax.f32 %v445, 0.0
    %v593 = vmax.f32 %v450, 0.0
    %v594 = vmax.f32 %v455, 0.0
    %v595 = vmax.f32 %v460, 0.0
    %v596 = vmax.f32 %v465, 0.0
    %v597 = vmax.f32 %v470, 0.0
    %v598 = vmax.f32 %v475, 0.0
    %v599 = vmax.f32 %v480, 0.0
    %v600 = vmax.f32 %v485, 0.0
    %v601 = vmax.f32 %v490, 0.0
    %v602 = vmax.f32 %v495, 0.0
    %v603 = vmax.f32 %v500, 0.0
    %v604 = vmax.f32 %v505, 0.0
    %v605 = vmax.f32 %v510, 0.0
    %v606 = vmax.f32 %v515, 0.0
    %v607 = vmax.f32 %v520, 0.0
    %v608 = vmax.f32 %v525, 0.0
    %v609 = vmax.f32 %v530, 0.0
    %v610 = vmax.f32 %v535, 0.0
    %v611 = vmax.f32 %v540, 0.0
    %v612 = vmax.f32 %v545, 0.0
    %v613 = vmax.f32 %v550, 0.0
    %v614 = vmax.f32 %v555, 0.0
    %v615 = vmax.f32 %v560, 0.0
    %v616 = vmax.f32 %v565, 0.0
    %vm617 = vcmask 64512
    %618 = vst.msk [vmem:[#allocation2] sm:$0xff] %vm617, %v568
    %619 = vst.msk [vmem:[#allocation2 + $0x8] sm:$0xff] %vm617, %v569
    %620 = vst.msk [vmem:[#allocation2 + $0x10] sm:$0xff] %vm617, %v570
    %621 = vst.msk [vmem:[#allocation2 + $0x18] sm:$0xff] %vm617, %v571
    %622 = vst.msk [vmem:[#allocation2 + $0x20] sm:$0xff] %vm617, %v572
    %623 = vst.msk [vmem:[#allocation2 + $0x28] sm:$0xff] %vm617, %v573
    %624 = vst.msk [vmem:[#allocation2 + $0x30] sm:$0xff] %vm617, %v574
    %625 = vst.msk [vmem:[#allocation2 + $0x38] sm:$0xff] %vm617, %v575
    %626 = vst.msk [vmem:[#allocation2 + $0x40] sm:$0xff] %vm617, %v576
    %627 = vst.msk [vmem:[#allocation2 + $0x48] sm:$0xff] %vm617, %v577
    %628 = vst.msk [vmem:[#allocation2 + $0x50] sm:$0xff] %vm617, %v578
    %629 = vst.msk [vmem:[#allocation2 + $0x58] sm:$0xff] %vm617, %v579
    %630 = vst.msk [vmem:[#allocation2 + $0x60] sm:$0xff] %vm617, %v580
    %631 = vst.msk [vmem:[#allocation2 + $0x68] sm:$0xff] %vm617, %v581
    %632 = vst.msk [vmem:[#allocation2 + $0x70] sm:$0xff] %vm617, %v582
    %633 = vst.msk [vmem:[#allocation2 + $0x78] sm:$0xff] %vm617, %v583
    %634 = vst.msk [vmem:[#allocation2 + $0x80] sm:$0xff] %vm617, %v584
    %635 = vst.msk [vmem:[#allocation2 + $0x88] sm:$0xff] %vm617, %v585
    %636 = vst.msk [vmem:[#allocation2 + $0x90] sm:$0xff] %vm617, %v586
    %637 = vst.msk [vmem:[#allocation2 + $0x98] sm:$0xff] %vm617, %v587
    %638 = vst.msk [vmem:[#allocation2 + $0xa0] sm:$0xff] %vm617, %v588
    %639 = vst.msk [vmem:[#allocation2 + $0xa8] sm:$0xff] %vm617, %v589
    %640 = vst.msk [vmem:[#allocation2 + $0xb0] sm:$0xff] %vm617, %v590
    %641 = vst.msk [vmem:[#allocation2 + $0xb8] sm:$0xff] %vm617, %v591
    %642 = vst.msk [vmem:[#allocation2 + $0xc0] sm:$0xff] %vm617, %v592
    %643 = vst.msk [vmem:[#allocation2 + $0xc8] sm:$0xff] %vm617, %v593
    %644 = vst.msk [vmem:[#allocation2 + $0xd0] sm:$0xff] %vm617, %v594
    %645 = vst.msk [vmem:[#allocation2 + $0xd8] sm:$0xff] %vm617, %v595
    %646 = vst.msk [vmem:[#allocation2 + $0xe0] sm:$0xff] %vm617, %v596
    %647 = vst.msk [vmem:[#allocation2 + $0xe8] sm:$0xff] %vm617, %v597
    %648 = vst.msk [vmem:[#allocation2 + $0xf0] sm:$0xff] %vm617, %v598
    %649 = vst.msk [vmem:[#allocation2 + $0xf8] sm:$0xff] %vm617, %v599
    %650 = vst.msk [vmem:[#allocation2 + $0x100] sm:$0xff] %vm617, %v600
    %651 = vst.msk [vmem:[#allocation2 + $0x108] sm:$0xff] %vm617, %v601
    %652 = vst.msk [vmem:[#allocation2 + $0x110] sm:$0xff] %vm617, %v602
    %653 = vst.msk [vmem:[#allocation2 + $0x118] sm:$0xff] %vm617, %v603
    %654 = vst.msk [vmem:[#allocation2 + $0x120] sm:$0xff] %vm617, %v604
    %655 = vst.msk [vmem:[#allocation2 + $0x128] sm:$0xff] %vm617, %v605
    %656 = vst.msk [vmem:[#allocation2 + $0x130] sm:$0xff] %vm617, %v606
    %657 = vst.msk [vmem:[#allocation2 + $0x138] sm:$0xff] %vm617, %v607
    %658 = vst.msk [vmem:[#allocation2 + $0x140] sm:$0xff] %vm617, %v608
    %659 = vst.msk [vmem:[#allocation2 + $0x148] sm:$0xff] %vm617, %v609
    %660 = vst.msk [vmem:[#allocation2 + $0x150] sm:$0xff] %vm617, %v610
    %661 = vst.msk [vmem:[#allocation2 + $0x158] sm:$0xff] %vm617, %v611
    %662 = vst.msk [vmem:[#allocation2 + $0x160] sm:$0xff] %vm617, %v612
    %663 = vst.msk [vmem:[#allocation2 + $0x168] sm:$0xff] %vm617, %v613
    %664 = vst.msk [vmem:[#allocation2 + $0x170] sm:$0xff] %vm617, %v614
    %665 = vst.msk [vmem:[#allocation2 + $0x178] sm:$0xff] %vm617, %v615
    %666 = vst.msk [vmem:[#allocation2 + $0x180] sm:$0xff] %vm617, %v616
    %667 = vst.msk [vmem:[#allocation3] sm:$0xff] %vm617, 0.0
    %vm668 = vcmask 62464
    %669 = vst.msk [vmem:[#allocation3 + $0x8] sm:$0x3f] %vm668, 0.0
    %vm670 = vcmask 130112
    %671 = vst.msk [vmem:[#allocation3] sm:$0xff] %vm670, 0.0
    %vm672 = vcmask 128064
    %673 = vst.msk [vmem:[#allocation3 + $0x8] sm:$0x3f] %vm672, 0.0
    %vm674 = vcmask 195712
    %675 = vst.msk [vmem:[#allocation3] sm:$0xff] %vm674, 0.0
    %vm676 = vcmask 193664
    %677 = vst.msk [vmem:[#allocation3 + $0x8] sm:$0x3f] %vm676, 0.0
    %vm678 = vcmask 255168
    %679 = vst.msk [vmem:[#allocation3] sm:$0x3] %vm678, 0.0
    %vm680 = vcmask 451968
    %681 = vst.msk [vmem:[#allocation3] sm:$0x3] %vm680, 0.0
    %vm682 = vcmask 58368
    %683 = vst.msk [vmem:[#allocation3 + $0xe] sm:$0x3] %vm682, 0.0
    %684 = vst.msk [vmem:[#allocation3 + $0xe] sm:$0x3] %vm678, 0.0
    %685 = vst.msk [vmem:[#allocation3 + $0xe] sm:$0x3] %vm680, 0.0
    %686 = vst.msk [vmem:[#allocation3 + $0x1c] sm:$0x3] %vm682, 0.0
    %687 = vst.msk [vmem:[#allocation3 + $0x1c] sm:$0x3] %vm678, 0.0
    %688 = vst.msk [vmem:[#allocation3 + $0x1c] sm:$0x3] %vm680, 0.0
    %689 = vst.msk [vmem:[#allocation3 + $0x2a] sm:$0x3] %vm682, 0.0
    %690 = vst.msk [vmem:[#allocation3 + $0x2a] sm:$0x3] %vm678, 0.0
    %691 = vst.msk [vmem:[#allocation3 + $0x2a] sm:$0x3] %vm680, 0.0
    %692 = vst.msk [vmem:[#allocation3 + $0x38] sm:$0x3] %vm682, 0.0
    %693 = vst.msk [vmem:[#allocation3 + $0x38] sm:$0x3] %vm678, 0.0
    %694 = vst.msk [vmem:[#allocation3 + $0x38] sm:$0x3] %vm680, 0.0
    %695 = vst.msk [vmem:[#allocation3 + $0x46] sm:$0x3] %vm682, 0.0
    %696 = vst.msk [vmem:[#allocation3 + $0x46] sm:$0x3] %vm678, 0.0
    %697 = vst.msk [vmem:[#allocation3 + $0x46] sm:$0x3] %vm680, 0.0
    %698 = vst.msk [vmem:[#allocation3 + $0x54] sm:$0x3] %vm682, 0.0
    %699 = vst.msk [vmem:[#allocation3 + $0x54] sm:$0x3] %vm678, 0.0
    %700 = vst.msk [vmem:[#allocation3 + $0x54] sm:$0x3] %vm680, 0.0
    %v701 = vld [vmem:[#allocation2 + $0x16] sm:$0x3f]
    %703 = vrot.lane.b32.xlu0 %v701, 24
    %v704 = vpop.permute.xlu0 %703
    %vm706 = vcmask 259264
    %707 = vst.msk [vmem:[#allocation3 + $0x2] sm:$0x3f] %vm706, %v704
    %v708 = vld [vmem:[#allocation2 + $0x8] sm:$0x3f]
    %710 = vrot.lane.b32.xlu0 %v708, 24
    %v711 = vpop.permute.xlu0 %710
    %713 = vst.msk [vmem:[#allocation3 + $0x8] sm:$0x3f] %vm706, %v711
    %v714 = vld [vmem:[#allocation2] sm:$0xff]
    %716 = vrot.lane.b32.xlu0 %v714, 32
    %v717 = vpop.permute.xlu0 %716
    %vm719 = vcmask 326912
    %720 = vst.msk [vmem:[#allocation3] sm:$0xff] %vm719, %v717
    %v721 = vld [vmem:[#allocation2 + $0x10] sm:$0x3f]
    %723 = vrot.lane.b32.xlu0 %v721, 32
    %v724 = vpop.permute.xlu0 %723
    %vm726 = vcmask 324864
    %727 = vst.msk [vmem:[#allocation3 + $0x8] sm:$0x3f] %vm726, %v724
    %v728 = vld [vmem:[#allocation2 + $0x8] sm:$0xff]
    %730 = vrot.lane.b32.xlu0 %v728, 40
    %v731 = vpop.permute.xlu0 %730
    %vm733 = vcmask 392512
    %734 = vst.msk [vmem:[#allocation3] sm:$0xff] %vm733, %v731
    %v735 = vld [vmem:[#allocation2 + $0x16] sm:$0x3f]
    %737 = vrot.lane.b32.xlu0 %v735, 40
    %v738 = vpop.permute.xlu0 %737
    %vm740 = vcmask 390464
    %741 = vst.msk [vmem:[#allocation3 + $0x8] sm:$0x3f] %vm740, %v738
    %v742 = vld [vmem:[#allocation2 + $0x32] sm:$0x3f]
    %744 = vrot.lane.b32.xlu0 %v742, 48
    %v745 = vpop.permute.xlu0 %744
    %vm747 = vcmask 456064
    %748 = vst.msk [vmem:[#allocation3 + $0x2] sm:$0x3f] %vm747, %v745
    %v749 = vld [vmem:[#allocation2 + $0x24] sm:$0x3f]
    %751 = vrot.lane.b32.xlu0 %v749, 48
    %v752 = vpop.permute.xlu0 %751
    %754 = vst.msk [vmem:[#allocation3 + $0x8] sm:$0x3f] %vm747, %v752
    %v755 = vld [vmem:[#allocation2 + $0x1c] sm:$0xff]
    %757 = vrot.lane.b32.xlu0 %v755, 56
    %v758 = vpop.permute.xlu0 %757
    %vm760 = vcmask 523712
    %761 = vst.msk [vmem:[#allocation3] sm:$0xff] %vm760, %v758
    %v762 = vld [vmem:[#allocation2 + $0x2c] sm:$0x3f]
    %764 = vrot.lane.b32.xlu0 %v762, 56
    %v765 = vpop.permute.xlu0 %764
    %vm767 = vcmask 521664
    %768 = vst.msk [vmem:[#allocation3 + $0x8] sm:$0x3f] %vm767, %v765
    %v769 = vld [vmem:[#allocation2 + $0x24] sm:$0xff]
    %771 = vrot.lane.b32.xlu0 %v769, 64
    %v772 = vpop.permute.xlu0 %771
    %vm774 = vcmask 589312
    %775 = vst.msk [vmem:[#allocation3] sm:$0xff] %vm774, %v772
    %v776 = vld [vmem:[#allocation2 + $0x32] sm:$0x3f]
    %778 = vrot.lane.b32.xlu0 %v776, 64
    %v779 = vpop.permute.xlu0 %778
    %vm781 = vcmask 587264
    %782 = vst.msk [vmem:[#allocation3 + $0x8] sm:$0x3f] %vm781, %v779
    %v783 = vld [vmem:[#allocation2 + $0x32] sm:$0x3f]
    %784 = vst.msk [vmem:[#allocation3 + $0x10] sm:$0x3f] %vm668, %v783
    %v785 = vld [vmem:[#allocation2 + $0x24] sm:$0x3f]
    %786 = vst.msk [vmem:[#allocation3 + $0x16] sm:$0x3f] %vm668, %v785
    %v787 = vld [vmem:[#allocation2 + $0x1c] sm:$0xff]
    %789 = vrot.lane.b32.xlu0 %v787, 8
    %v790 = vpop.permute.xlu0 %789
    %792 = vst.msk [vmem:[#allocation3 + $0xe] sm:$0xff] %vm670, %v790
    %v793 = vld [vmem:[#allocation2 + $0x2c] sm:$0x3f]
    %795 = vrot.lane.b32.xlu0 %v793, 8
    %v796 = vpop.permute.xlu0 %795
    %798 = vst.msk [vmem:[#allocation3 + $0x16] sm:$0x3f] %vm672, %v796
    %v799 = vld [vmem:[#allocation2 + $0x24] sm:$0xff]
    %801 = vrot.lane.b32.xlu0 %v799, 16
    %v802 = vpop.permute.xlu0 %801
    %804 = vst.msk [vmem:[#allocation3 + $0xe] sm:$0xff] %vm674, %v802
    %v805 = vld [vmem:[#allocation2 + $0x32] sm:$0x3f]
    %807 = vrot.lane.b32.xlu0 %v805, 16
    %v808 = vpop.permute.xlu0 %807
    %810 = vst.msk [vmem:[#allocation3 + $0x16] sm:$0x3f] %vm676, %v808
    %v811 = vld [vmem:[#allocation2 + $0x4e] sm:$0x3f]
    %813 = vrot.lane.b32.xlu0 %v811, 24
    %v814 = vpop.permute.xlu0 %813
    %816 = vst.msk [vmem:[#allocation3 + $0x10] sm:$0x3f] %vm706, %v814
    %v817 = vld [vmem:[#allocation2 + $0x40] sm:$0x3f]
    %819 = vrot.lane.b32.xlu0 %v817, 24
    %v820 = vpop.permute.xlu0 %819
    %822 = vst.msk [vmem:[#allocation3 + $0x16] sm:$0x3f] %vm706, %v820
    %v823 = vld [vmem:[#allocation2 + $0x38] sm:$0xff]
    %825 = vrot.lane.b32.xlu0 %v823, 32
    %v826 = vpop.permute.xlu0 %825
    %828 = vst.msk [vmem:[#allocation3 + $0xe] sm:$0xff] %vm719, %v826
    %v829 = vld [vmem:[#allocation2 + $0x48] sm:$0x3f]
    %831 = vrot.lane.b32.xlu0 %v829, 32
    %v832 = vpop.permute.xlu0 %831
    %834 = vst.msk [vmem:[#allocation3 + $0x16] sm:$0x3f] %vm726, %v832
    %v835 = vld [vmem:[#allocation2 + $0x40] sm:$0xff]
    %837 = vrot.lane.b32.xlu0 %v835, 40
    %v838 = vpop.permute.xlu0 %837
    %840 = vst.msk [vmem:[#allocation3 + $0xe] sm:$0xff] %vm733, %v838
    %v841 = vld [vmem:[#allocation2 + $0x4e] sm:$0x3f]
    %843 = vrot.lane.b32.xlu0 %v841, 40
    %v844 = vpop.permute.xlu0 %843
    %846 = vst.msk [vmem:[#allocation3 + $0x16] sm:$0x3f] %vm740, %v844
    %v847 = vld [vmem:[#allocation2 + $0x6a] sm:$0x3f]
    %849 = vrot.lane.b32.xlu0 %v847, 48
    %v850 = vpop.permute.xlu0 %849
    %852 = vst.msk [vmem:[#allocation3 + $0x10] sm:$0x3f] %vm747, %v850
    %v853 = vld [vmem:[#allocation2 + $0x5c] sm:$0x3f]
    %855 = vrot.lane.b32.xlu0 %v853, 48
    %v856 = vpop.permute.xlu0 %855
    %858 = vst.msk [vmem:[#allocation3 + $0x16] sm:$0x3f] %vm747, %v856
    %v859 = vld [vmem:[#allocation2 + $0x54] sm:$0xff]
    %861 = vrot.lane.b32.xlu0 %v859, 56
    %v862 = vpop.permute.xlu0 %861
    %864 = vst.msk [vmem:[#allocation3 + $0xe] sm:$0xff] %vm760, %v862
    %v865 = vld [vmem:[#allocation2 + $0x64] sm:$0x3f]
    %867 = vrot.lane.b32.xlu0 %v865, 56
    %v868 = vpop.permute.xlu0 %867
    %870 = vst.msk [vmem:[#allocation3 + $0x16] sm:$0x3f] %vm767, %v868
    %v871 = vld [vmem:[#allocation2 + $0x5c] sm:$0xff]
    %873 = vrot.lane.b32.xlu0 %v871, 64
    %v874 = vpop.permute.xlu0 %873
    %876 = vst.msk [vmem:[#allocation3 + $0xe] sm:$0xff] %vm774, %v874
    %v877 = vld [vmem:[#allocation2 + $0x6a] sm:$0x3f]
    %879 = vrot.lane.b32.xlu0 %v877, 64
    %v880 = vpop.permute.xlu0 %879
    %882 = vst.msk [vmem:[#allocation3 + $0x16] sm:$0x3f] %vm781, %v880
    %v883 = vld [vmem:[#allocation2 + $0x6a] sm:$0x3f]
    %884 = vst.msk [vmem:[#allocation3 + $0x1e] sm:$0x3f] %vm668, %v883
    %v885 = vld [vmem:[#allocation2 + $0x5c] sm:$0x3f]
    %886 = vst.msk [vmem:[#allocation3 + $0x24] sm:$0x3f] %vm668, %v885
    %v887 = vld [vmem:[#allocation2 + $0x54] sm:$0xff]
    %889 = vrot.lane.b32.xlu0 %v887, 8
    %v890 = vpop.permute.xlu0 %889
    %892 = vst.msk [vmem:[#allocation3 + $0x1c] sm:$0xff] %vm670, %v890
    %v893 = vld [vmem:[#allocation2 + $0x64] sm:$0x3f]
    %895 = vrot.lane.b32.xlu0 %v893, 8
    %v896 = vpop.permute.xlu0 %895
    %898 = vst.msk [vmem:[#allocation3 + $0x24] sm:$0x3f] %vm672, %v896
    %v899 = vld [vmem:[#allocation2 + $0x5c] sm:$0xff]
    %901 = vrot.lane.b32.xlu0 %v899, 16
    %v902 = vpop.permute.xlu0 %901
    %904 = vst.msk [vmem:[#allocation3 + $0x1c] sm:$0xff] %vm674, %v902
    %v905 = vld [vmem:[#allocation2 + $0x6a] sm:$0x3f]
    %907 = vrot.lane.b32.xlu0 %v905, 16
    %v908 = vpop.permute.xlu0 %907
    %910 = vst.msk [vmem:[#allocation3 + $0x24] sm:$0x3f] %vm676, %v908
    %v911 = vld [vmem:[#allocation2 + $0x86] sm:$0x3f]
    %913 = vrot.lane.b32.xlu0 %v911, 24
    %v914 = vpop.permute.xlu0 %913
    %916 = vst.msk [vmem:[#allocation3 + $0x1e] sm:$0x3f] %vm706, %v914
    %v917 = vld [vmem:[#allocation2 + $0x78] sm:$0x3f]
    %919 = vrot.lane.b32.xlu0 %v917, 24
    %v920 = vpop.permute.xlu0 %919
    %922 = vst.msk [vmem:[#allocation3 + $0x24] sm:$0x3f] %vm706, %v920
    %v923 = vld [vmem:[#allocation2 + $0x70] sm:$0xff]
    %925 = vrot.lane.b32.xlu0 %v923, 32
    %v926 = vpop.permute.xlu0 %925
    %928 = vst.msk [vmem:[#allocation3 + $0x1c] sm:$0xff] %vm719, %v926
    %v929 = vld [vmem:[#allocation2 + $0x80] sm:$0x3f]
    %931 = vrot.lane.b32.xlu0 %v929, 32
    %v932 = vpop.permute.xlu0 %931
    %934 = vst.msk [vmem:[#allocation3 + $0x24] sm:$0x3f] %vm726, %v932
    %v935 = vld [vmem:[#allocation2 + $0x78] sm:$0xff]
    %937 = vrot.lane.b32.xlu0 %v935, 40
    %v938 = vpop.permute.xlu0 %937
    %940 = vst.msk [vmem:[#allocation3 + $0x1c] sm:$0xff] %vm733, %v938
    %v941 = vld [vmem:[#allocation2 + $0x86] sm:$0x3f]
    %943 = vrot.lane.b32.xlu0 %v941, 40
    %v944 = vpop.permute.xlu0 %943
    %946 = vst.msk [vmem:[#allocation3 + $0x24] sm:$0x3f] %vm740, %v944
    %v947 = vld [vmem:[#allocation2 + $0xa2] sm:$0x3f]
    %949 = vrot.lane.b32.xlu0 %v947, 48
    %v950 = vpop.permute.xlu0 %949
    %952 = vst.msk [vmem:[#allocation3 + $0x1e] sm:$0x3f] %vm747, %v950
    %v953 = vld [vmem:[#allocation2 + $0x94] sm:$0x3f]
    %955 = vrot.lane.b32.xlu0 %v953, 48
    %v956 = vpop.permute.xlu0 %955
    %958 = vst.msk [vmem:[#allocation3 + $0x24] sm:$0x3f] %vm747, %v956
    %v959 = vld [vmem:[#allocation2 + $0x8c] sm:$0xff]
    %961 = vrot.lane.b32.xlu0 %v959, 56
    %v962 = vpop.permute.xlu0 %961
    %964 = vst.msk [vmem:[#allocation3 + $0x1c] sm:$0xff] %vm760, %v962
    %v965 = vld [vmem:[#allocation2 + $0x9c] sm:$0x3f]
    %967 = vrot.lane.b32.xlu0 %v965, 56
    %v968 = vpop.permute.xlu0 %967
    %970 = vst.msk [vmem:[#allocation3 + $0x24] sm:$0x3f] %vm767, %v968
    %v971 = vld [vmem:[#allocation2 + $0x94] sm:$0xff]
    %973 = vrot.lane.b32.xlu0 %v971, 64
    %v974 = vpop.permute.xlu0 %973
    %976 = vst.msk [vmem:[#allocation3 + $0x1c] sm:$0xff] %vm774, %v974
    %v977 = vld [vmem:[#allocation2 + $0xa2] sm:$0x3f]
    %979 = vrot.lane.b32.xlu0 %v977, 64
    %v980 = vpop.permute.xlu0 %979
    %982 = vst.msk [vmem:[#allocation3 + $0x24] sm:$0x3f] %vm781, %v980
    %v983 = vld [vmem:[#allocation2 + $0xa2] sm:$0x3f]
    %984 = vst.msk [vmem:[#allocation3 + $0x2c] sm:$0x3f] %vm668, %v983
    %v985 = vld [vmem:[#allocation2 + $0x94] sm:$0x3f]
    %986 = vst.msk [vmem:[#allocation3 + $0x32] sm:$0x3f] %vm668, %v985
    %v987 = vld [vmem:[#allocation2 + $0x8c] sm:$0xff]
    %989 = vrot.lane.b32.xlu0 %v987, 8
    %v990 = vpop.permute.xlu0 %989
    %992 = vst.msk [vmem:[#allocation3 + $0x2a] sm:$0xff] %vm670, %v990
    %v993 = vld [vmem:[#allocation2 + $0x9c] sm:$0x3f]
    %995 = vrot.lane.b32.xlu0 %v993, 8
    %v996 = vpop.permute.xlu0 %995
    %998 = vst.msk [vmem:[#allocation3 + $0x32] sm:$0x3f] %vm672, %v996
    %v999 = vld [vmem:[#allocation2 + $0x94] sm:$0xff]
    %1001 = vrot.lane.b32.xlu0 %v999, 16
    %v1002 = vpop.permute.xlu0 %1001
    %1004 = vst.msk [vmem:[#allocation3 + $0x2a] sm:$0xff] %vm674, %v1002
    %v1005 = vld [vmem:[#allocation2 + $0xa2] sm:$0x3f]
    %1007 = vrot.lane.b32.xlu0 %v1005, 16
    %v1008 = vpop.permute.xlu0 %1007
    %1010 = vst.msk [vmem:[#allocation3 + $0x32] sm:$0x3f] %vm676, %v1008
    %v1011 = vld [vmem:[#allocation2 + $0xbe] sm:$0x3f]
    %1013 = vrot.lane.b32.xlu0 %v1011, 24
    %v1014 = vpop.permute.xlu0 %1013
    %1016 = vst.msk [vmem:[#allocation3 + $0x2c] sm:$0x3f] %vm706, %v1014
    %v1017 = vld [vmem:[#allocation2 + $0xb0] sm:$0x3f]
    %1019 = vrot.lane.b32.xlu0 %v1017, 24
    %v1020 = vpop.permute.xlu0 %1019
    %1022 = vst.msk [vmem:[#allocation3 + $0x32] sm:$0x3f] %vm706, %v1020
    %v1023 = vld [vmem:[#allocation2 + $0xa8] sm:$0xff]
    %1025 = vrot.lane.b32.xlu0 %v1023, 32
    %v1026 = vpop.permute.xlu0 %1025
    %1028 = vst.msk [vmem:[#allocation3 + $0x2a] sm:$0xff] %vm719, %v1026
    %v1029 = vld [vmem:[#allocation2 + $0xb8] sm:$0x3f]
    %1031 = vrot.lane.b32.xlu0 %v1029, 32
    %v1032 = vpop.permute.xlu0 %1031
    %1034 = vst.msk [vmem:[#allocation3 + $0x32] sm:$0x3f] %vm726, %v1032
    %v1035 = vld [vmem:[#allocation2 + $0xb0] sm:$0xff]
    %1037 = vrot.lane.b32.xlu0 %v1035, 40
    %v1038 = vpop.permute.xlu0 %1037
    %1040 = vst.msk [vmem:[#allocation3 + $0x2a] sm:$0xff] %vm733, %v1038
    %v1041 = vld [vmem:[#allocation2 + $0xbe] sm:$0x3f]
    %1043 = vrot.lane.b32.xlu0 %v1041, 40
    %v1044 = vpop.permute.xlu0 %1043
    %1046 = vst.msk [vmem:[#allocation3 + $0x32] sm:$0x3f] %vm740, %v1044
    %v1047 = vld [vmem:[#allocation2 + $0xda] sm:$0x3f]
    %1049 = vrot.lane.b32.xlu0 %v1047, 48
    %v1050 = vpop.permute.xlu0 %1049
    %1052 = vst.msk [vmem:[#allocation3 + $0x2c] sm:$0x3f] %vm747, %v1050
    %v1053 = vld [vmem:[#allocation2 + $0xcc] sm:$0x3f]
    %1055 = vrot.lane.b32.xlu0 %v1053, 48
    %v1056 = vpop.permute.xlu0 %1055
    %1058 = vst.msk [vmem:[#allocation3 + $0x32] sm:$0x3f] %vm747, %v1056
    %v1059 = vld [vmem:[#allocation2 + $0xc4] sm:$0xff]
    %1061 = vrot.lane.b32.xlu0 %v1059, 56
    %v1062 = vpop.permute.xlu0 %1061
    %1064 = vst.msk [vmem:[#allocation3 + $0x2a] sm:$0xff] %vm760, %v1062
    %v1065 = vld [vmem:[#allocation2 + $0xd4] sm:$0x3f]
    %1067 = vrot.lane.b32.xlu0 %v1065, 56
    %v1068 = vpop.permute.xlu0 %1067
    %1070 = vst.msk [vmem:[#allocation3 + $0x32] sm:$0x3f] %vm767, %v1068
    %v1071 = vld [vmem:[#allocation2 + $0xcc] sm:$0xff]
    %1073 = vrot.lane.b32.xlu0 %v1071, 64
    %v1074 = vpop.permute.xlu0 %1073
    %1076 = vst.msk [vmem:[#allocation3 + $0x2a] sm:$0xff] %vm774, %v1074
    %v1077 = vld [vmem:[#allocation2 + $0xda] sm:$0x3f]
    %1079 = vrot.lane.b32.xlu0 %v1077, 64
    %v1080 = vpop.permute.xlu0 %1079
    %1082 = vst.msk [vmem:[#allocation3 + $0x32] sm:$0x3f] %vm781, %v1080
    %v1083 = vld [vmem:[#allocation2 + $0xda] sm:$0x3f]
    %1084 = vst.msk [vmem:[#allocation3 + $0x3a] sm:$0x3f] %vm668, %v1083
    %v1085 = vld [vmem:[#allocation2 + $0xcc] sm:$0x3f]
    %1086 = vst.msk [vmem:[#allocation3 + $0x40] sm:$0x3f] %vm668, %v1085
    %v1087 = vld [vmem:[#allocation2 + $0xc4] sm:$0xff]
    %1089 = vrot.lane.b32.xlu0 %v1087, 8
    %v1090 = vpop.permute.xlu0 %1089
    %1092 = vst.msk [vmem:[#allocation3 + $0x38] sm:$0xff] %vm670, %v1090
    %v1093 = vld [vmem:[#allocation2 + $0xd4] sm:$0x3f]
    %1095 = vrot.lane.b32.xlu0 %v1093, 8
    %v1096 = vpop.permute.xlu0 %1095
    %1098 = vst.msk [vmem:[#allocation3 + $0x40] sm:$0x3f] %vm672, %v1096
    %v1099 = vld [vmem:[#allocation2 + $0xcc] sm:$0xff]
    %1101 = vrot.lane.b32.xlu0 %v1099, 16
    %v1102 = vpop.permute.xlu0 %1101
    %1104 = vst.msk [vmem:[#allocation3 + $0x38] sm:$0xff] %vm674, %v1102
    %v1105 = vld [vmem:[#allocation2 + $0xda] sm:$0x3f]
    %1107 = vrot.lane.b32.xlu0 %v1105, 16
    %v1108 = vpop.permute.xlu0 %1107
    %1110 = vst.msk [vmem:[#allocation3 + $0x40] sm:$0x3f] %vm676, %v1108
    %v1111 = vld [vmem:[#allocation2 + $0xf6] sm:$0x3f]
    %1113 = vrot.lane.b32.xlu0 %v1111, 24
    %v1114 = vpop.permute.xlu0 %1113
    %1116 = vst.msk [vmem:[#allocation3 + $0x3a] sm:$0x3f] %vm706, %v1114
    %v1117 = vld [vmem:[#allocation2 + $0xe8] sm:$0x3f]
    %1119 = vrot.lane.b32.xlu0 %v1117, 24
    %v1120 = vpop.permute.xlu0 %1119
    %1122 = vst.msk [vmem:[#allocation3 + $0x40] sm:$0x3f] %vm706, %v1120
    %v1123 = vld [vmem:[#allocation2 + $0xe0] sm:$0xff]
    %1125 = vrot.lane.b32.xlu0 %v1123, 32
    %v1126 = vpop.permute.xlu0 %1125
    %1128 = vst.msk [vmem:[#allocation3 + $0x38] sm:$0xff] %vm719, %v1126
    %v1129 = vld [vmem:[#allocation2 + $0xf0] sm:$0x3f]
    %1131 = vrot.lane.b32.xlu0 %v1129, 32
    %v1132 = vpop.permute.xlu0 %1131
    %1134 = vst.msk [vmem:[#allocation3 + $0x40] sm:$0x3f] %vm726, %v1132
    %v1135 = vld [vmem:[#allocation2 + $0xe8] sm:$0xff]
    %1137 = vrot.lane.b32.xlu0 %v1135, 40
    %v1138 = vpop.permute.xlu0 %1137
    %1140 = vst.msk [vmem:[#allocation3 + $0x38] sm:$0xff] %vm733, %v1138
    %v1141 = vld [vmem:[#allocation2 + $0xf6] sm:$0x3f]
    %1143 = vrot.lane.b32.xlu0 %v1141, 40
    %v1144 = vpop.permute.xlu0 %1143
    %1146 = vst.msk [vmem:[#allocation3 + $0x40] sm:$0x3f] %vm740, %v1144
    %v1147 = vld [vmem:[#allocation2 + $0x112] sm:$0x3f]
    %1149 = vrot.lane.b32.xlu0 %v1147, 48
    %v1150 = vpop.permute.xlu0 %1149
    %1152 = vst.msk [vmem:[#allocation3 + $0x3a] sm:$0x3f] %vm747, %v1150
    %v1153 = vld [vmem:[#allocation2 + $0x104] sm:$0x3f]
    %1155 = vrot.lane.b32.xlu0 %v1153, 48
    %v1156 = vpop.permute.xlu0 %1155
    %1158 = vst.msk [vmem:[#allocation3 + $0x40] sm:$0x3f] %vm747, %v1156
    %v1159 = vld [vmem:[#allocation2 + $0xfc] sm:$0xff]
    %1161 = vrot.lane.b32.xlu0 %v1159, 56
    %v1162 = vpop.permute.xlu0 %1161
    %1164 = vst.msk [vmem:[#allocation3 + $0x38] sm:$0xff] %vm760, %v1162
    %v1165 = vld [vmem:[#allocation2 + $0x10c] sm:$0x3f]
    %1167 = vrot.lane.b32.xlu0 %v1165, 56
    %v1168 = vpop.permute.xlu0 %1167
    %1170 = vst.msk [vmem:[#allocation3 + $0x40] sm:$0x3f] %vm767, %v1168
    %v1171 = vld [vmem:[#allocation2 + $0x104] sm:$0xff]
    %1173 = vrot.lane.b32.xlu0 %v1171, 64
    %v1174 = vpop.permute.xlu0 %1173
    %1176 = vst.msk [vmem:[#allocation3 + $0x38] sm:$0xff] %vm774, %v1174
    %v1177 = vld [vmem:[#allocation2 + $0x112] sm:$0x3f]
    %1179 = vrot.lane.b32.xlu0 %v1177, 64
    %v1180 = vpop.permute.xlu0 %1179
    %1182 = vst.msk [vmem:[#allocation3 + $0x40] sm:$0x3f] %vm781, %v1180
    %v1183 = vld [vmem:[#allocation2 + $0x112] sm:$0x3f]
    %1184 = vst.msk [vmem:[#allocation3 + $0x48] sm:$0x3f] %vm668, %v1183
    %v1185 = vld [vmem:[#allocation2 + $0x104] sm:$0x3f]
    %1186 = vst.msk [vmem:[#allocation3 + $0x4e] sm:$0x3f] %vm668, %v1185
    %v1187 = vld [vmem:[#allocation2 + $0xfc] sm:$0xff]
    %1189 = vrot.lane.b32.xlu0 %v1187, 8
    %v1190 = vpop.permute.xlu0 %1189
    %1192 = vst.msk [vmem:[#allocation3 + $0x46] sm:$0xff] %vm670, %v1190
    %v1193 = vld [vmem:[#allocation2 + $0x10c] sm:$0x3f]
    %1195 = vrot.lane.b32.xlu0 %v1193, 8
    %v1196 = vpop.permute.xlu0 %1195
    %1198 = vst.msk [vmem:[#allocation3 + $0x4e] sm:$0x3f] %vm672, %v1196
    %v1199 = vld [vmem:[#allocation2 + $0x104] sm:$0xff]
    %1201 = vrot.lane.b32.xlu0 %v1199, 16
    %v1202 = vpop.permute.xlu0 %1201
    %1204 = vst.msk [vmem:[#allocation3 + $0x46] sm:$0xff] %vm674, %v1202
    %v1205 = vld [vmem:[#allocation2 + $0x112] sm:$0x3f]
    %1207 = vrot.lane.b32.xlu0 %v1205, 16
    %v1208 = vpop.permute.xlu0 %1207
    %1210 = vst.msk [vmem:[#allocation3 + $0x4e] sm:$0x3f] %vm676, %v1208
    %v1211 = vld [vmem:[#allocation2 + $0x12e] sm:$0x3f]
    %1213 = vrot.lane.b32.xlu0 %v1211, 24
    %v1214 = vpop.permute.xlu0 %1213
    %1216 = vst.msk [vmem:[#allocation3 + $0x48] sm:$0x3f] %vm706, %v1214
    %v1217 = vld [vmem:[#allocation2 + $0x120] sm:$0x3f]
    %1219 = vrot.lane.b32.xlu0 %v1217, 24
    %v1220 = vpop.permute.xlu0 %1219
    %1222 = vst.msk [vmem:[#allocation3 + $0x4e] sm:$0x3f] %vm706, %v1220
    %v1223 = vld [vmem:[#allocation2 + $0x118] sm:$0xff]
    %1225 = vrot.lane.b32.xlu0 %v1223, 32
    %v1226 = vpop.permute.xlu0 %1225
    %1228 = vst.msk [vmem:[#allocation3 + $0x46] sm:$0xff] %vm719, %v1226
    %v1229 = vld [vmem:[#allocation2 + $0x128] sm:$0x3f]
    %1231 = vrot.lane.b32.xlu0 %v1229, 32
    %v1232 = vpop.permute.xlu0 %1231
    %1234 = vst.msk [vmem:[#allocation3 + $0x4e] sm:$0x3f] %vm726, %v1232
    %v1235 = vld [vmem:[#allocation2 + $0x120] sm:$0xff]
    %1237 = vrot.lane.b32.xlu0 %v1235, 40
    %v1238 = vpop.permute.xlu0 %1237
    %1240 = vst.msk [vmem:[#allocation3 + $0x46] sm:$0xff] %vm733, %v1238
    %v1241 = vld [vmem:[#allocation2 + $0x12e] sm:$0x3f]
    %1243 = vrot.lane.b32.xlu0 %v1241, 40
    %v1244 = vpop.permute.xlu0 %1243
    %1246 = vst.msk [vmem:[#allocation3 + $0x4e] sm:$0x3f] %vm740, %v1244
    %v1247 = vld [vmem:[#allocation2 + $0x14a] sm:$0x3f]
    %1249 = vrot.lane.b32.xlu0 %v1247, 48
    %v1250 = vpop.permute.xlu0 %1249
    %1252 = vst.msk [vmem:[#allocation3 + $0x48] sm:$0x3f] %vm747, %v1250
    %v1253 = vld [vmem:[#allocation2 + $0x13c] sm:$0x3f]
    %1255 = vrot.lane.b32.xlu0 %v1253, 48
    %v1256 = vpop.permute.xlu0 %1255
    %1258 = vst.msk [vmem:[#allocation3 + $0x4e] sm:$0x3f] %vm747, %v1256
    %v1259 = vld [vmem:[#allocation2 + $0x134] sm:$0xff]
    %1261 = vrot.lane.b32.xlu0 %v1259, 56
    %v1262 = vpop.permute.xlu0 %1261
    %1264 = vst.msk [vmem:[#allocation3 + $0x46] sm:$0xff] %vm760, %v1262
    %v1265 = vld [vmem:[#allocation2 + $0x144] sm:$0x3f]
    %1267 = vrot.lane.b32.xlu0 %v1265, 56
    %v1268 = vpop.permute.xlu0 %1267
    %1270 = vst.msk [vmem:[#allocation3 + $0x4e] sm:$0x3f] %vm767, %v1268
    %v1271 = vld [vmem:[#allocation2 + $0x13c] sm:$0xff]
    %1273 = vrot.lane.b32.xlu0 %v1271, 64
    %v1274 = vpop.permute.xlu0 %1273
    %1276 = vst.msk [vmem:[#allocation3 + $0x46] sm:$0xff] %vm774, %v1274
    %v1277 = vld [vmem:[#allocation2 + $0x14a] sm:$0x3f]
    %1279 = vrot.lane.b32.xlu0 %v1277, 64
    %v1280 = vpop.permute.xlu0 %1279
    %1282 = vst.msk [vmem:[#allocation3 + $0x4e] sm:$0x3f] %vm781, %v1280
    %v1283 = vld [vmem:[#allocation2 + $0x14a] sm:$0x3f]
    %1284 = vst.msk [vmem:[#allocation3 + $0x56] sm:$0x3f] %vm668, %v1283
    %v1285 = vld [vmem:[#allocation2 + $0x13c] sm:$0x3f]
    %1286 = vst.msk [vmem:[#allocation3 + $0x5c] sm:$0x3f] %vm668, %v1285
    %v1287 = vld [vmem:[#allocation2 + $0x134] sm:$0xff]
    %1289 = vrot.lane.b32.xlu0 %v1287, 8
    %v1290 = vpop.permute.xlu0 %1289
    %1292 = vst.msk [vmem:[#allocation3 + $0x54] sm:$0xff] %vm670, %v1290
    %v1293 = vld [vmem:[#allocation2 + $0x144] sm:$0x3f]
    %1295 = vrot.lane.b32.xlu0 %v1293, 8
    %v1296 = vpop.permute.xlu0 %1295
    %1298 = vst.msk [vmem:[#allocation3 + $0x5c] sm:$0x3f] %vm672, %v1296
    %v1299 = vld [vmem:[#allocation2 + $0x13c] sm:$0xff]
    %1301 = vrot.lane.b32.xlu0 %v1299, 16
    %v1302 = vpop.permute.xlu0 %1301
    %1304 = vst.msk [vmem:[#allocation3 + $0x54] sm:$0xff] %vm674, %v1302
    %v1305 = vld [vmem:[#allocation2 + $0x14a] sm:$0x3f]
    %1307 = vrot.lane.b32.xlu0 %v1305, 16
    %v1308 = vpop.permute.xlu0 %1307
    %1310 = vst.msk [vmem:[#allocation3 + $0x5c] sm:$0x3f] %vm676, %v1308
    %v1311 = vld [vmem:[#allocation2 + $0x166] sm:$0x3f]
    %1313 = vrot.lane.b32.xlu0 %v1311, 24
    %v1314 = vpop.permute.xlu0 %1313
    %1316 = vst.msk [vmem:[#allocation3 + $0x56] sm:$0x3f] %vm706, %v1314
    %v1317 = vld [vmem:[#allocation2 + $0x158] sm:$0x3f]
    %1319 = vrot.lane.b32.xlu0 %v1317, 24
    %v1320 = vpop.permute.xlu0 %1319
    %1322 = vst.msk [vmem:[#allocation3 + $0x5c] sm:$0x3f] %vm706, %v1320
    %v1323 = vld [vmem:[#allocation2 + $0x150] sm:$0xff]
    %1325 = vrot.lane.b32.xlu0 %v1323, 32
    %v1326 = vpop.permute.xlu0 %1325
    %1328 = vst.msk [vmem:[#allocation3 + $0x54] sm:$0xff] %vm719, %v1326
    %v1329 = vld [vmem:[#allocation2 + $0x160] sm:$0x3f]
    %1331 = vrot.lane.b32.xlu0 %v1329, 32
    %v1332 = vpop.permute.xlu0 %1331
    %1334 = vst.msk [vmem:[#allocation3 + $0x5c] sm:$0x3f] %vm726, %v1332
    %v1335 = vld [vmem:[#allocation2 + $0x158] sm:$0xff]
    %1337 = vrot.lane.b32.xlu0 %v1335, 40
    %v1338 = vpop.permute.xlu0 %1337
    %1340 = vst.msk [vmem:[#allocation3 + $0x54] sm:$0xff] %vm733, %v1338
    %v1341 = vld [vmem:[#allocation2 + $0x166] sm:$0x3f]
    %1343 = vrot.lane.b32.xlu0 %v1341, 40
    %v1344 = vpop.permute.xlu0 %1343
    %1346 = vst.msk [vmem:[#allocation3 + $0x5c] sm:$0x3f] %vm740, %v1344
    %v1347 = vld [vmem:[#allocation2 + $0x182] sm:$0x3f]
    %1349 = vrot.lane.b32.xlu0 %v1347, 48
    %v1350 = vpop.permute.xlu0 %1349
    %1352 = vst.msk [vmem:[#allocation3 + $0x56] sm:$0x3f] %vm747, %v1350
    %v1353 = vld [vmem:[#allocation2 + $0x174] sm:$0x3f]
    %1355 = vrot.lane.b32.xlu0 %v1353, 48
    %v1356 = vpop.permute.xlu0 %1355
    %1358 = vst.msk [vmem:[#allocation3 + $0x5c] sm:$0x3f] %vm747, %v1356
    %v1359 = vld [vmem:[#allocation2 + $0x16c] sm:$0xff]
    %1361 = vrot.lane.b32.xlu0 %v1359, 56
    %v1362 = vpop.permute.xlu0 %1361
    %1364 = vst.msk [vmem:[#allocation3 + $0x54] sm:$0xff] %vm760, %v1362
    %v1365 = vld [vmem:[#allocation2 + $0x17c] sm:$0x3f]
    %1367 = vrot.lane.b32.xlu0 %v1365, 56
    %v1368 = vpop.permute.xlu0 %1367
    %1370 = vst.msk [vmem:[#allocation3 + $0x5c] sm:$0x3f] %vm767, %v1368
    %v1371 = vld [vmem:[#allocation2 + $0x174] sm:$0xff]
    %1373 = vrot.lane.b32.xlu0 %v1371, 64
    %v1374 = vpop.permute.xlu0 %1373
    %1376 = vst.msk [vmem:[#allocation3 + $0x54] sm:$0xff] %vm774, %v1374
    %v1377 = vld [vmem:[#allocation2 + $0x182] sm:$0x3f]
    %1379 = vrot.lane.b32.xlu0 %v1377, 64
    %v1380 = vpop.permute.xlu0 %1379
    %1382 = vst.msk [vmem:[#allocation3 + $0x5c] sm:$0x3f] %vm781, %v1380
    %v1383 = vld [vmem:[#allocation3] sm:$0xff]
    %v1384 = vld [vmem:[#allocation3 + $0x8] sm:$0xff]
    %v1385 = vld [vmem:[#allocation3 + $0x10] sm:$0xff]
    %v1386 = vld [vmem:[#allocation3 + $0x18] sm:$0xff]
    %v1387 = vld [vmem:[#allocation3 + $0x20] sm:$0xff]
    %v1388 = vld [vmem:[#allocation3 + $0x28] sm:$0xff]
    %v1389 = vld [vmem:[#allocation3 + $0x30] sm:$0xff]
    %v1390 = vld [vmem:[#allocation3 + $0x38] sm:$0xff]
    %v1391 = vld [vmem:[#allocation3 + $0x40] sm:$0xff]
    %v1392 = vld [vmem:[#allocation3 + $0x48] sm:$0xff]
    %v1393 = vld [vmem:[#allocation3 + $0x50] sm:$0xff]
    %v1394 = vld [vmem:[#allocation3 + $0x58] sm:$0xff]
    %v1395 = vld [vmem:[#allocation3 + $0x60] sm:$0x3]
    %v1396 = vld [vmem:[%s3] sm:$0xff]
    %v1397 = vld [vmem:[%s3 + $0x8] sm:$0xff]
    %v1398 = vld [vmem:[%s3 + $0x10] sm:$0xff]
    %v1399 = vld [vmem:[%s3 + $0x18] sm:$0xff]
    %v1400 = vld [vmem:[%s3 + $0x20] sm:$0xff]
    %v1401 = vld [vmem:[%s3 + $0x28] sm:$0xff]
    %v1402 = vld [vmem:[%s3 + $0x30] sm:$0xff]
    %v1403 = vld [vmem:[%s3 + $0x38] sm:$0xff]
    %v1404 = vld [vmem:[%s3 + $0x40] sm:$0xff]
    %vm1405 = vcmask 588800
    %v1407 = vsel %vm1405, %v1383, 0
    %v1410 = vsel %vm1405, %v1384, 0
    %v1413 = vsel %vm1405, %v1385, 0
    %v1416 = vsel %vm1405, %v1386, 0
    %v1419 = vsel %vm1405, %v1387, 0
    %v1422 = vsel %vm1405, %v1388, 0
    %v1425 = vsel %vm1405, %v1389, 0
    %v1428 = vsel %vm1405, %v1390, 0
    %v1431 = vsel %vm1405, %v1391, 0
    %v1434 = vsel %vm1405, %v1392, 0
    %v1437 = vsel %vm1405, %v1393, 0
    %v1440 = vsel %vm1405, %v1394, 0
    %v1443 = vsel %vm1405, %v1395, 0
    %1445 = vmatprep.subr.mxu0 0.0
    %1446 = vmatpush1.msra.mxu0 %v1396
    %1447 = vmatprep.subr.mxu0 0.0
    %1448 = vmatpush1.msra.mxu0 %v1397
    %1449 = vmatprep.subr.mxu0 0.0
    %1450 = vmatpush1.msra.mxu0 %v1398
    %1451 = vmatprep.subr.mxu0 0.0
    %1452 = vmatpush1.msra.mxu0 %v1399
    %1453 = vmatprep.subr.mxu0 0.0
    %1454 = vmatpush1.msra.mxu0 %v1400
    %1455 = vmatprep.subr.mxu0 0.0
    %1456 = vmatpush1.msra.mxu0 %v1401
    %1457 = vmatprep.subr.mxu0 0.0
    %1458 = vmatpush1.msra.mxu0 %v1402
    %1459 = vmatprep.subr.mxu0 0.0
    %1460 = vmatpush1.msra.mxu0 %v1403
    %1461 = vmatprep.subr.mxu0 0.0
    %1462 = vmatpush1.msra.mxu0 %v1404
    %1463 = vmatprep.subr.mxu0 0.0
    %1464 = vmatpush1.msra.mxu0 0.0
    %1465 = vmatprep.subr.mxu0 0.0
    %1466 = vmatpush1.msra.mxu0 0.0
    %1467 = vmatprep.subr.mxu0 0.0
    %1468 = vmatpush1.msra.mxu0 0.0
    %1469 = vmatprep.subr.mxu0 0.0
    %1470 = vmatpush1.msra.mxu0 0.0
    %1471 = vmatprep.subr.mxu0 0.0
    %1472 = vmatpush1.msra.mxu0 0.0
    %1473 = vmatprep.subr.mxu0 0.0
    %1474 = vmatpush1.msra.mxu0 0.0
    %1475 = vmatprep.subr.mxu0 0.0
    %1476 = vmatpush1.msra.mxu0 0.0
    %1477 = vmatprep.subr.mxu0 0.0
    %1478 = vmatpush1.msra.mxu0 0.0
    %1479 = vmatprep.subr.mxu0 0.0
    %1480 = vmatpush1.msra.mxu0 0.0
    %1481 = vmatprep.subr.mxu0 0.0
    %1482 = vmatpush1.msra.mxu0 0.0
    %1483 = vmatprep.subr.mxu0 0.0
    %1484 = vmatpush1.msra.mxu0 0.0
    %1485 = vmatprep.subr.mxu0 0.0
    %1486 = vmatpush1.msra.mxu0 0.0
    %1487 = vmatprep.subr.mxu0 0.0
    %1488 = vmatpush1.msra.mxu0 0.0
    %1489 = vmatprep.subr.mxu0 0.0
    %1490 = vmatpush1.msra.mxu0 0.0
    %1491 = vmatprep.subr.mxu0 0.0
    %1492 = vmatpush1.msra.mxu0 0.0
    %1493 = vmatprep.subr.mxu0 0.0
    %1494 = vmatpush1.msra.mxu0 0.0
    %1495 = vmatprep.subr.mxu0 0.0
    %1496 = vmatpush1.msra.mxu0 0.0
    %1497 = vmatprep.subr.mxu0 0.0
    %1498 = vmatpush1.msra.mxu0 0.0
    %1499 = vmatprep.subr.mxu0 0.0
    %1500 = vmatpush1.msra.mxu0 0.0
    %1501 = vmatprep.subr.mxu0 0.0
    %1502 = vmatpush1.msra.mxu0 0.0
    %1503 = vmatprep.subr.mxu0 0.0
    %1504 = vmatpush1.msra.mxu0 0.0
    %1505 = vmatprep.subr.mxu0 0.0
    %1506 = vmatpush1.msra.mxu0 0.0
    %1507 = vmatprep.subr.mxu0 0.0
    %1508 = vmatpush1.msra.mxu0 0.0
    %1509 = vmatprep.mubr.f32.mxu0 0.0
    %1510 = vmatmul.mubr.f32.gmra.mrb[0].mxu0 %v1407
    %v1511 = vpop.f32.mrb[0].mxu0
    %v1512 = vadd.f32 0.0, %v1511
    %v1513 = vpop.f32.mrb[0].mxu0
    %1514 = vmatprep.mubr.f32.mxu0 0.0
    %1515 = vmatmul.mubr.f32.gmra.mrb[0].mxu0 %v1410
    %v1516 = vpop.f32.mrb[0].mxu0
    %v1517 = vadd.f32 0.0, %v1516
    %v1518 = vpop.f32.mrb[0].mxu0
    %1519 = vmatprep.mubr.f32.mxu0 0.0
    %1520 = vmatmul.mubr.f32.gmra.mrb[0].mxu0 %v1413
    %v1521 = vpop.f32.mrb[0].mxu0
    %v1522 = vadd.f32 0.0, %v1521
    %v1523 = vpop.f32.mrb[0].mxu0
    %1524 = vmatprep.mubr.f32.mxu0 0.0
    %1525 = vmatmul.mubr.f32.gmra.mrb[0].mxu0 %v1416
    %v1526 = vpop.f32.mrb[0].mxu0
    %v1527 = vadd.f32 0.0, %v1526
    %v1528 = vpop.f32.mrb[0].mxu0
    %1529 = vmatprep.mubr.f32.mxu0 0.0
    %1530 = vmatmul.mubr.f32.gmra.mrb[0].mxu0 %v1419
    %v1531 = vpop.f32.mrb[0].mxu0
    %v1532 = vadd.f32 0.0, %v1531
    %v1533 = vpop.f32.mrb[0].mxu0
    %1534 = vmatprep.mubr.f32.mxu0 0.0
    %1535 = vmatmul.mubr.f32.gmra.mrb[0].mxu0 %v1422
    %v1536 = vpop.f32.mrb[0].mxu0
    %v1537 = vadd.f32 0.0, %v1536
    %v1538 = vpop.f32.mrb[0].mxu0
    %1539 = vmatprep.mubr.f32.mxu0 0.0
    %1540 = vmatmul.mubr.f32.gmra.mrb[0].mxu0 %v1425
    %v1541 = vpop.f32.mrb[0].mxu0
    %v1542 = vadd.f32 0.0, %v1541
    %v1543 = vpop.f32.mrb[0].mxu0
    %1544 = vmatprep.mubr.f32.mxu0 0.0
    %1545 = vmatmul.mubr.f32.gmra.mrb[0].mxu0 %v1428
    %v1546 = vpop.f32.mrb[0].mxu0
    %v1547 = vadd.f32 0.0, %v1546
    %v1548 = vpop.f32.mrb[0].mxu0
    %1549 = vmatprep.mubr.f32.mxu0 0.0
    %1550 = vmatmul.mubr.f32.gmra.mrb[0].mxu0 %v1431
    %v1551 = vpop.f32.mrb[0].mxu0
    %v1552 = vadd.f32 0.0, %v1551
    %v1553 = vpop.f32.mrb[0].mxu0
    %1554 = vmatprep.mubr.f32.mxu0 0.0
    %1555 = vmatmul.mubr.f32.gmra.mrb[0].mxu0 %v1434
    %v1556 = vpop.f32.mrb[0].mxu0
    %v1557 = vadd.f32 0.0, %v1556
    %v1558 = vpop.f32.mrb[0].mxu0
    %1559 = vmatprep.mubr.f32.mxu0 0.0
    %1560 = vmatmul.mubr.f32.gmra.mrb[0].mxu0 %v1437
    %v1561 = vpop.f32.mrb[0].mxu0
    %v1562 = vadd.f32 0.0, %v1561
    %v1563 = vpop.f32.mrb[0].mxu0
    %1564 = vmatprep.mubr.f32.mxu0 0.0
    %1565 = vmatmul.mubr.f32.gmra.mrb[0].mxu0 %v1440
    %v1566 = vpop.f32.mrb[0].mxu0
    %v1567 = vadd.f32 0.0, %v1566
    %v1568 = vpop.f32.mrb[0].mxu0
    %1569 = vmatprep.mubr.f32.mxu0 0.0
    %1570 = vmatmul.mubr.f32.gmra.mrb[0].mxu0 %v1443
    %v1571 = vpop.f32.mrb[0].mxu0
    %v1572 = vadd.f32 0.0, %v1571
    %v1573 = vpop.f32.mrb[0].mxu0
    %1574 = vdwg.mxu0
    %vm1575 = vcmask 130048
    %v1576 = vsel %vm1575, %v1512, 0.0
    %v1577 = vsel %vm1575, %v1517, 0.0
    %v1578 = vadd.f32 %v1576, %v1577
    %v1579 = vsel %vm1575, %v1522, 0.0
    %v1580 = vadd.f32 %v1578, %v1579
    %v1581 = vsel %vm1575, %v1527, 0.0
    %v1582 = vadd.f32 %v1580, %v1581
    %v1583 = vsel %vm1575, %v1532, 0.0
    %v1584 = vadd.f32 %v1582, %v1583
    %v1585 = vsel %vm1575, %v1537, 0.0
    %v1586 = vadd.f32 %v1584, %v1585
    %v1587 = vsel %vm1575, %v1542, 0.0
    %v1588 = vadd.f32 %v1586, %v1587
    %v1589 = vsel %vm1575, %v1547, 0.0
    %v1590 = vadd.f32 %v1588, %v1589
    %v1591 = vsel %vm1575, %v1552, 0.0
    %v1592 = vadd.f32 %v1590, %v1591
    %v1593 = vsel %vm1575, %v1557, 0.0
    %v1594 = vadd.f32 %v1592, %v1593
    %v1595 = vsel %vm1575, %v1562, 0.0
    %v1596 = vadd.f32 %v1594, %v1595
    %v1597 = vsel %vm1575, %v1567, 0.0
    %v1598 = vadd.f32 %v1596, %v1597
    %vm1599 = vcmask 123904
    %v1600 = vsel %vm1599, %v1572, 0.0
    %v1601 = vadd.f32 %v1598, %v1600
    %v1602 = vrot.slane %v1601, 4
    %v1603 = vadd.f32 %v1601, %v1602
    %v1604 = vrot.slane %v1603, 2
    %v1605 = vadd.f32 %v1603, %v1604
    %v1606 = vrot.slane %v1605, 1
    %v1607 = vadd.f32 %v1605, %v1606
    %v1608 = vmul.f32 %v1607, 0.010204081
    %v1609 = vsub.f32 %v1512, %v1608
    %v1610 = vsub.f32 %v1517, %v1608
    %v1611 = vsub.f32 %v1522, %v1608
    %v1612 = vsub.f32 %v1527, %v1608
    %v1613 = vsub.f32 %v1532, %v1608
    %v1614 = vsub.f32 %v1537, %v1608
    %v1615 = vsub.f32 %v1542, %v1608
    %v1616 = vsub.f32 %v1547, %v1608
    %v1617 = vsub.f32 %v1552, %v1608
    %v1618 = vsub.f32 %v1557, %v1608
    %v1619 = vsub.f32 %v1562, %v1608
    %v1620 = vsub.f32 %v1567, %v1608
    %v1621 = vsub.f32 %v1572, %v1608
    %v1622 = vmul.f32 %v1609, %v1609
    %v1623 = vmul.f32 %v1610, %v1610
    %v1624 = vmul.f32 %v1611, %v1611
    %v1625 = vmul.f32 %v1612, %v1612
    %v1626 = vmul.f32 %v1613, %v1613
    %v1627 = vmul.f32 %v1614, %v1614
    %v1628 = vmul.f32 %v1615, %v1615
    %v1629 = vmul.f32 %v1616, %v1616
    %v1630 = vmul.f32 %v1617, %v1617
    %v1631 = vmul.f32 %v1618, %v1618
    %v1632 = vmul.f32 %v1619, %v1619
    %v1633 = vmul.f32 %v1620, %v1620
    %v1634 = vmul.f32 %v1621, %v1621
    %v1635 = vsel %vm1575, %v1622, 0.0
    %v1636 = vsel %vm1575, %v1623, 0.0
    %v1637 = vadd.f32 %v1635, %v1636
    %v1638 = vsel %vm1575, %v1624, 0.0
    %v1639 = vadd.f32 %v1637, %v1638
    %v1640 = vsel %vm1575, %v1625, 0.0
    %v1641 = vadd.f32 %v1639, %v1640
    %v1642 = vsel %vm1575, %v1626, 0.0
    %v1643 = vadd.f32 %v1641, %v1642
    %v1644 = vsel %vm1575, %v1627, 0.0
    %v1645 = vadd.f32 %v1643, %v1644
    %v1646 = vsel %vm1575, %v1628, 0.0
    %v1647 = vadd.f32 %v1645, %v1646
    %v1648 = vsel %vm1575, %v1629, 0.0
    %v1649 = vadd.f32 %v1647, %v1648
    %v1650 = vsel %vm1575, %v1630, 0.0
    %v1651 = vadd.f32 %v1649, %v1650
    %v1652 = vsel %vm1575, %v1631, 0.0
    %v1653 = vadd.f32 %v1651, %v1652
    %v1654 = vsel %vm1575, %v1632, 0.0
    %v1655 = vadd.f32 %v1653, %v1654
    %v1656 = vsel %vm1575, %v1633, 0.0
    %v1657 = vadd.f32 %v1655, %v1656
    %v1658 = vsel %vm1599, %v1634, 0.0
    %v1659 = vadd.f32 %v1657, %v1658
    %v1660 = vrot.slane %v1659, 4
    %v1661 = vadd.f32 %v1659, %v1660
    %v1662 = vrot.slane %v1661, 2
    %v1663 = vadd.f32 %v1661, %v1662
    %v1664 = vrot.slane %v1663, 1
    %v1665 = vadd.f32 %v1663, %v1664
    %v1666 = vmul.f32 %v1665, 0.010204081
    %v1667 = vadd.f32 %v1666, 1e-05
    %v1668 = vrsqrt.pop %v1667
    %v1669 = vmul.f32 %v1609, %v1668
    %v1670 = vmul.f32 %v1610, %v1668
    %v1671 = vmul.f32 %v1611, %v1668
    %v1672 = vmul.f32 %v1612, %v1668
    %v1673 = vmul.f32 %v1613, %v1668
    %v1674 = vmul.f32 %v1614, %v1668
    %v1675 = vmul.f32 %v1615, %v1668
    %v1676 = vmul.f32 %v1616, %v1668
    %v1677 = vmul.f32 %v1617, %v1668
    %v1678 = vmul.f32 %v1618, %v1668
    %v1679 = vmul.f32 %v1619, %v1668
    %v1680 = vmul.f32 %v1620, %v1668
    %v1681 = vmul.f32 %v1621, %v1668
    %v1682 = vld [vmem:[%s4] sm:$0x1]
    %v1684 = vlaneseq
    %v1685 = vshrl.u32 %v1684, 7
    %v1686 = vsub.s32 0, %v1685
    %v1687 = vrot.slane %v1682, %v1686
    %v1689 = vmul.f32 %v1669, %v1687
    %v1690 = vmul.f32 %v1670, %v1687
    %v1691 = vmul.f32 %v1671, %v1687
    %v1692 = vmul.f32 %v1672, %v1687
    %v1693 = vmul.f32 %v1673, %v1687
    %v1694 = vmul.f32 %v1674, %v1687
    %v1695 = vmul.f32 %v1675, %v1687
    %v1696 = vmul.f32 %v1676, %v1687
    %v1697 = vmul.f32 %v1677, %v1687
    %v1698 = vmul.f32 %v1678, %v1687
    %v1699 = vmul.f32 %v1679, %v1687
    %v1700 = vmul.f32 %v1680, %v1687
    %v1701 = vmul.f32 %v1681, %v1687
    %v1702 = vld [vmem:[%s5] sm:$0x1]
    %v1704 = vlaneseq
    %v1705 = vshrl.u32 %v1704, 7
    %v1706 = vsub.s32 0, %v1705
    %v1707 = vrot.slane %v1702, %v1706
    %v1709 = vadd.f32 %v1689, %v1707
    %v1710 = vadd.f32 %v1690, %v1707
    %v1711 = vadd.f32 %v1691, %v1707
    %v1712 = vadd.f32 %v1692, %v1707
    %v1713 = vadd.f32 %v1693, %v1707
    %v1714 = vadd.f32 %v1694, %v1707
    %v1715 = vadd.f32 %v1695, %v1707
    %v1716 = vadd.f32 %v1696, %v1707
    %v1717 = vadd.f32 %v1697, %v1707
    %v1718 = vadd.f32 %v1698, %v1707
    %v1719 = vadd.f32 %v1699, %v1707
    %v1720 = vadd.f32 %v1700, %v1707
    %v1721 = vadd.f32 %v1701, %v1707
    %v1722 = vmax.f32 %v1709, 0.0
    %v1723 = vmax.f32 %v1710, 0.0
    %v1724 = vmax.f32 %v1711, 0.0
    %v1725 = vmax.f32 %v1712, 0.0
    %v1726 = vmax.f32 %v1713, 0.0
    %v1727 = vmax.f32 %v1714, 0.0
    %v1728 = vmax.f32 %v1715, 0.0
    %v1729 = vmax.f32 %v1716, 0.0
    %v1730 = vmax.f32 %v1717, 0.0
    %v1731 = vmax.f32 %v1718, 0.0
    %v1732 = vmax.f32 %v1719, 0.0
    %v1733 = vmax.f32 %v1720, 0.0
    %v1734 = vmax.f32 %v1721, 0.0
    %1735 = vst.msk [vmem:[#allocation4] sm:$0xff] %vm1575, %v1722
    %1736 = vst.msk [vmem:[#allocation4 + $0x8] sm:$0xff] %vm1575, %v1723
    %1737 = vst.msk [vmem:[#allocation4 + $0x10] sm:$0xff] %vm1575, %v1724
    %1738 = vst.msk [vmem:[#allocation4 + $0x18] sm:$0xff] %vm1575, %v1725
    %1739 = vst.msk [vmem:[#allocation4 + $0x20] sm:$0xff] %vm1575, %v1726
    %1740 = vst.msk [vmem:[#allocation4 + $0x28] sm:$0xff] %vm1575, %v1727
    %1741 = vst.msk [vmem:[#allocation4 + $0x30] sm:$0xff] %vm1575, %v1728
    %1742 = vst.msk [vmem:[#allocation4 + $0x38] sm:$0xff] %vm1575, %v1729
    %1743 = vst.msk [vmem:[#allocation4 + $0x40] sm:$0xff] %vm1575, %v1730
    %1744 = vst.msk [vmem:[#allocation4 + $0x48] sm:$0xff] %vm1575, %v1731
    %1745 = vst.msk [vmem:[#allocation4 + $0x50] sm:$0xff] %vm1575, %v1732
    %1746 = vst.msk [vmem:[#allocation4 + $0x58] sm:$0xff] %vm1575, %v1733
    %1747 = vst.msk [vmem:[#allocation4 + $0x60] sm:$0x3] %vm1599, %v1734
    %v1748 = vld [vmem:[#allocation4] sm:$0x3f]
    %vm1749 = vcmask 128000
    %1750 = vst.msk [vmem:[#allocation5] sm:$0x3f] %vm1749, %v1748
    %v1751 = vld [vmem:[#allocation4 + $0x8] sm:$0x3f]
    %1753 = vrot.lane.b32.xlu0 %v1751, 16
    %v1754 = vpop.permute.xlu0 %1753
    %vm1756 = vcmask 259200
    %1757 = vst.msk [vmem:[#allocation5] sm:$0x3f] %vm1756, %v1754
    %v1758 = vld [vmem:[#allocation4 + $0x2] sm:$0x3f]
    %1760 = vrot.lane.b32.xlu0 %v1758, 32
    %v1761 = vpop.permute.xlu0 %1760
    %vm1763 = vcmask 390400
    %1764 = vst.msk [vmem:[#allocation5] sm:$0x3f] %vm1763, %v1761
    %v1765 = vld [vmem:[#allocation4 + $0xe] sm:$0x3f]
    %1767 = vrot.lane.b32.xlu0 %v1765, 48
    %v1768 = vpop.permute.xlu0 %1767
    %vm1770 = vcmask 521600
    %1771 = vst.msk [vmem:[#allocation5] sm:$0x3f] %vm1770, %v1768
    %v1772 = vld [vmem:[#allocation4 + $0x16] sm:$0x3f]
    %1774 = vrot.lane.b32.xlu0 %v1772, 64
    %v1775 = vpop.permute.xlu0 %1774
    %vm1777 = vcmask 652800
    %1778 = vst.msk [vmem:[#allocation5] sm:$0x3f] %vm1777, %v1775
    %v1779 = vld [vmem:[#allocation4 + $0x10] sm:$0x3f]
    %1781 = vrot.lane.b32.xlu0 %v1779, 80
    %v1782 = vpop.permute.xlu0 %1781
    %vm1784 = vcmask 784000
    %1785 = vst.msk [vmem:[#allocation5] sm:$0x3f] %vm1784, %v1782
    %v1786 = vld [vmem:[#allocation4 + $0x1c] sm:$0x3f]
    %1788 = vrot.lane.b32.xlu0 %v1786, 96
    %v1789 = vpop.permute.xlu0 %1788
    %vm1791 = vcmask 915200
    %1792 = vst.msk [vmem:[#allocation5] sm:$0x3f] %vm1791, %v1789
    %v1793 = vld [vmem:[#allocation4 + $0x24] sm:$0x3f]
    %1795 = vrot.lane.b32.xlu0 %v1793, 112
    %v1796 = vpop.permute.xlu0 %1795
    %vm1798 = vcmask 1046400
    %1799 = vst.msk [vmem:[#allocation5] sm:$0x3f] %vm1798, %v1796
    %v1800 = vld [vmem:[#allocation4 + $0x1e] sm:$0x3f]
    %1801 = vst.msk [vmem:[#allocation5 + $0x8] sm:$0x3f] %vm1749, %v1800
    %v1802 = vld [vmem:[#allocation4 + $0x1c] sm:$0x3f]
    %v1804 = vrot.slane %v1802, 2
    %vm1806 = vcmask 130054
    %1807 = vst.msk [vmem:[#allocation5] sm:$0xc0] %vm1806, %v1804
    %vm1808 = vcmask 125952
    %1809 = vst.msk [vmem:[#allocation5 + $0x10] sm:$0xf] %vm1808, %v1804
    %v1810 = vld [vmem:[#allocation4 + $0x24] sm:$0x3f]
    %v1812 = vrot.slane %v1810, 2
    %1813 = vrot.lane.b32.xlu0 %v1812, 16
    %v1814 = vpop.permute.xlu0 %1813
    %vm1816 = vcmask 261254
    %1817 = vst.msk [vmem:[#allocation5] sm:$0xc0] %vm1816, %v1814
    %vm1818 = vcmask 257152
    %1819 = vst.msk [vmem:[#allocation5 + $0x10] sm:$0xf] %vm1818, %v1814
    %v1820 = vld [vmem:[#allocation4 + $0x1e] sm:$0x3f]
    %v1822 = vrot.slane %v1820, 2
    %1823 = vrot.lane.b32.xlu0 %v1822, 32
    %v1824 = vpop.permute.xlu0 %1823
    %vm1826 = vcmask 392454
    %1827 = vst.msk [vmem:[#allocation5] sm:$0xc0] %vm1826, %v1824
    %vm1828 = vcmask 388352
    %1829 = vst.msk [vmem:[#allocation5 + $0x10] sm:$0xf] %vm1828, %v1824
    %v1830 = vld [vmem:[#allocation4 + $0x2a] sm:$0x3f]
    %v1832 = vrot.slane %v1830, 2
    %1833 = vrot.lane.b32.xlu0 %v1832, 48
    %v1834 = vpop.permute.xlu0 %1833
    %vm1836 = vcmask 523654
    %1837 = vst.msk [vmem:[#allocation5] sm:$0xc0] %vm1836, %v1834
    %vm1838 = vcmask 519552
    %1839 = vst.msk [vmem:[#allocation5 + $0x10] sm:$0xf] %vm1838, %v1834
    %v1840 = vld [vmem:[#allocation4 + $0x32] sm:$0x3f]
    %v1842 = vrot.slane %v1840, 2
    %1843 = vrot.lane.b32.xlu0 %v1842, 64
    %v1844 = vpop.permute.xlu0 %1843
    %vm1846 = vcmask 654854
    %1847 = vst.msk [vmem:[#allocation5] sm:$0xc0] %vm1846, %v1844
    %vm1848 = vcmask 650752
    %1849 = vst.msk [vmem:[#allocation5 + $0x10] sm:$0xf] %vm1848, %v1844
    %v1850 = vld [vmem:[#allocation4 + $0x2c] sm:$0x3f]
    %v1852 = vrot.slane %v1850, 2
    %1853 = vrot.lane.b32.xlu0 %v1852, 80
    %v1854 = vpop.permute.xlu0 %1853
    %vm1856 = vcmask 786054
    %1857 = vst.msk [vmem:[#allocation5] sm:$0xc0] %vm1856, %v1854
    %vm1858 = vcmask 781952
    %1859 = vst.msk [vmem:[#allocation5 + $0x10] sm:$0xf] %vm1858, %v1854
    %v1860 = vld [vmem:[#allocation4 + $0x38] sm:$0x3f]
    %v1862 = vrot.slane %v1860, 2
    %1863 = vrot.lane.b32.xlu0 %v1862, 96
    %v1864 = vpop.permute.xlu0 %1863
    %vm1866 = vcmask 917254
    %1867 = vst.msk [vmem:[#allocation5] sm:$0xc0] %vm1866, %v1864
    %vm1868 = vcmask 913152
    %1869 = vst.msk [vmem:[#allocation5 + $0x10] sm:$0xf] %vm1868, %v1864
    %v1870 = vld [vmem:[#allocation4 + $0x40] sm:$0x3f]
    %v1872 = vrot.slane %v1870, 2
    %1873 = vrot.lane.b32.xlu0 %v1872, 112
    %v1874 = vpop.permute.xlu0 %1873
    %vm1876 = vcmask 1048454
    %1877 = vst.msk [vmem:[#allocation5] sm:$0xc0] %vm1876, %v1874
    %vm1878 = vcmask 1044352
    %1879 = vst.msk [vmem:[#allocation5 + $0x10] sm:$0xf] %vm1878, %v1874
    %v1880 = vld [vmem:[#allocation4 + $0x3a] sm:$0x3f]
    %v1882 = vrot.slane %v1880, 2
    %1884 = vst.msk [vmem:[#allocation5 + $0x8] sm:$0xc0] %vm1806, %v1882
    %1885 = vst.msk [vmem:[#allocation5 + $0x18] sm:$0xf] %vm1808, %v1882
    %v1886 = vld [vmem:[#allocation4 + $0x38] sm:$0x3f]
    %v1888 = vrot.slane %v1886, 4
    %vm1890 = vcmask 130052
    %1891 = vst.msk [vmem:[#allocation5 + $0x10] sm:$0xf0] %vm1890, %v1888
    %1892 = vst.msk [vmem:[#allocation5 + $0x20] sm:$0x3] %vm1599, %v1888
    %v1893 = vld [vmem:[#allocation4 + $0x40] sm:$0x3f]
    %v1895 = vrot.slane %v1893, 4
    %1896 = vrot.lane.b32.xlu0 %v1895, 16
    %v1897 = vpop.permute.xlu0 %1896
    %vm1899 = vcmask 261252
    %1900 = vst.msk [vmem:[#allocation5 + $0x10] sm:$0xf0] %vm1899, %v1897
    %vm1901 = vcmask 255104
    %1902 = vst.msk [vmem:[#allocation5 + $0x20] sm:$0x3] %vm1901, %v1897
    %v1903 = vld [vmem:[#allocation4 + $0x3a] sm:$0x3f]
    %v1905 = vrot.slane %v1903, 4
    %1906 = vrot.lane.b32.xlu0 %v1905, 32
    %v1907 = vpop.permute.xlu0 %1906
    %vm1909 = vcmask 392452
    %1910 = vst.msk [vmem:[#allocation5 + $0x10] sm:$0xf0] %vm1909, %v1907
    %vm1911 = vcmask 386304
    %1912 = vst.msk [vmem:[#allocation5 + $0x20] sm:$0x3] %vm1911, %v1907
    %v1913 = vld [vmem:[#allocation4 + $0x46] sm:$0x3f]
    %v1915 = vrot.slane %v1913, 4
    %1916 = vrot.lane.b32.xlu0 %v1915, 48
    %v1917 = vpop.permute.xlu0 %1916
    %vm1919 = vcmask 523652
    %1920 = vst.msk [vmem:[#allocation5 + $0x10] sm:$0xf0] %vm1919, %v1917
    %vm1921 = vcmask 517504
    %1922 = vst.msk [vmem:[#allocation5 + $0x20] sm:$0x3] %vm1921, %v1917
    %v1923 = vld [vmem:[#allocation4 + $0x4e] sm:$0x3f]
    %v1925 = vrot.slane %v1923, 4
    %1926 = vrot.lane.b32.xlu0 %v1925, 64
    %v1927 = vpop.permute.xlu0 %1926
    %vm1929 = vcmask 654852
    %1930 = vst.msk [vmem:[#allocation5 + $0x10] sm:$0xf0] %vm1929, %v1927
    %vm1931 = vcmask 648704
    %1932 = vst.msk [vmem:[#allocation5 + $0x20] sm:$0x3] %vm1931, %v1927
    %v1933 = vld [vmem:[#allocation4 + $0x48] sm:$0x3f]
    %v1935 = vrot.slane %v1933, 4
    %1936 = vrot.lane.b32.xlu0 %v1935, 80
    %v1937 = vpop.permute.xlu0 %1936
    %vm1939 = vcmask 786052
    %1940 = vst.msk [vmem:[#allocation5 + $0x10] sm:$0xf0] %vm1939, %v1937
    %vm1941 = vcmask 779904
    %1942 = vst.msk [vmem:[#allocation5 + $0x20] sm:$0x3] %vm1941, %v1937
    %v1943 = vld [vmem:[#allocation4 + $0x54] sm:$0x3f]
    %v1945 = vrot.slane %v1943, 4
    %1946 = vrot.lane.b32.xlu0 %v1945, 96
    %v1947 = vpop.permute.xlu0 %1946
    %vm1949 = vcmask 917252
    %1950 = vst.msk [vmem:[#allocation5 + $0x10] sm:$0xf0] %vm1949, %v1947
    %vm1951 = vcmask 911104
    %1952 = vst.msk [vmem:[#allocation5 + $0x20] sm:$0x3] %vm1951, %v1947
    %v1953 = vld [vmem:[#allocation4 + $0x5c] sm:$0x3f]
    %v1955 = vrot.slane %v1953, 4
    %1956 = vrot.lane.b32.xlu0 %v1955, 112
    %v1957 = vpop.permute.xlu0 %1956
    %vm1959 = vcmask 1048452
    %1960 = vst.msk [vmem:[#allocation5 + $0x10] sm:$0xf0] %vm1959, %v1957
    %vm1961 = vcmask 1042304
    %1962 = vst.msk [vmem:[#allocation5 + $0x20] sm:$0x3] %vm1961, %v1957
    %v1963 = vld [vmem:[#allocation4 + $0x56] sm:$0x3f]
    %v1965 = vrot.slane %v1963, 4
    %1967 = vst.msk [vmem:[#allocation5 + $0x18] sm:$0xf0] %vm1890, %v1965
    %1968 = vst.msk [vmem:[#allocation5 + $0x28] sm:$0x3] %vm1599, %v1965
    %v1969 = vld [vmem:[#allocation5] sm:$0xff]
    %v1970 = vld [vmem:[#allocation5 + $0x8] sm:$0xff]
    %v1971 = vld [vmem:[#allocation5 + $0x10] sm:$0xff]
    %v1972 = vld [vmem:[#allocation5 + $0x18] sm:$0xff]
    %v1973 = vld [vmem:[#allocation5 + $0x20] sm:$0x3]
    %v1974 = vld [vmem:[#allocation5 + $0x28] sm:$0x3]
    %v1975 = vld [vmem:[%s6] sm:$0xff]
    %v1976 = vld [vmem:[%s6 + $0x8] sm:$0xff]
    %v1977 = vld [vmem:[%s6 + $0x10] sm:$0xff]
    %v1978 = vld [vmem:[%s6 + $0x18] sm:$0xff]
    %v1979 = vld [vmem:[%s6 + $0x20] sm:$0xff]
    %v1980 = vld [vmem:[%s6 + $0x28] sm:$0xff]
    %v1981 = vld [vmem:[%s6 + $0x30] sm:$0xff]
    %v1982 = vld [vmem:[%s6 + $0x38] sm:$0xff]
    %v1983 = vld [vmem:[%s6 + $0x40] sm:$0xff]
    %v1984 = vld [vmem:[%s6 + $0x48] sm:$0xff]
    %v1985 = vld [vmem:[%s6 + $0x50] sm:$0xff]
    %v1986 = vld [vmem:[%s6 + $0x58] sm:$0xff]
    %v1987 = vld [vmem:[%s6 + $0x60] sm:$0xff]
    %v1988 = vld [vmem:[%s6 + $0x68] sm:$0xff]
    %v1989 = vld [vmem:[%s6 + $0x70] sm:$0xff]
    %v1990 = vld [vmem:[%s6 + $0x78] sm:$0xff]
    %v1991 = vld [vmem:[%s6 + $0x80] sm:$0xff]
    %v1992 = vld [vmem:[%s6 + $0x88] sm:$0xff]
    %v1993 = vld [vmem:[%s7] sm:$0x1]
    %v1995 = vlaneseq
    %v1996 = vshrl.u32 %v1995, 7
    %v1997 = vsub.s32 0, %v1996
    %v1998 = vrot.slane %v1993, %v1997
    %v2001 = vsel %vm1575, %v1970, 0
    %v2004 = vsel %vm1575, %v1972, 0
    %v2007 = vsel %vm1575, %v1974, 0
    %2009 = vmatprep.subr.mxu0 0.0
    %2010 = vmatpush1.msra.mxu0 %v1975
    %2011 = vmatprep.subr.mxu0 0.0
    %2012 = vmatpush1.msra.mxu0 %v1976
    %2013 = vmatprep.subr.mxu0 0.0
    %2014 = vmatpush1.msra.mxu0 %v1977
    %2015 = vmatprep.subr.mxu0 0.0
    %2016 = vmatpush1.msra.mxu0 %v1978
    %2017 = vmatprep.subr.mxu0 0.0
    %2018 = vmatpush1.msra.mxu0 %v1979
    %2019 = vmatprep.subr.mxu0 0.0
    %2020 = vmatpush1.msra.mxu0 %v1980
    %2021 = vmatprep.subr.mxu0 0.0
    %2022 = vmatpush1.msra.mxu0 %v1981
    %2023 = vmatprep.subr.mxu0 0.0
    %2024 = vmatpush1.msra.mxu0 %v1982
    %2025 = vmatprep.subr.mxu0 0.0
    %2026 = vmatpush1.msra.mxu0 %v1983
    %2027 = vmatprep.subr.mxu0 0.0
    %2028 = vmatpush1.msra.mxu0 %v1984
    %2029 = vmatprep.subr.mxu0 0.0
    %2030 = vmatpush1.msra.mxu0 %v1985
    %2031 = vmatprep.subr.mxu0 0.0
    %2032 = vmatpush1.msra.mxu0 %v1986
    %2033 = vmatprep.subr.mxu0 0.0
    %2034 = vmatpush1.msra.mxu0 %v1987
    %2035 = vmatprep.subr.mxu0 0.0
    %2036 = vmatpush1.msra.mxu0 %v1988
    %2037 = vmatprep.subr.mxu0 0.0
    %2038 = vmatpush1.msra.mxu0 %v1989
    %2039 = vmatprep.subr.mxu0 0.0
    %2040 = vmatpush1.msra.mxu0 %v1990
    %2041 = vmatprep.subr.mxu0 0.0
    %2042 = vmatpush1.msra.mxu0 %v1991
    %2043 = vmatprep.subr.mxu0 0.0
    %2044 = vmatpush1.msra.mxu0 %v1992
    %2045 = vmatprep.subr.mxu0 0.0
    %2046 = vmatpush1.msra.mxu0 0.0
    %2047 = vmatprep.subr.mxu0 0.0
    %2048 = vmatpush1.msra.mxu0 0.0
    %2049 = vmatprep.subr.mxu0 0.0
    %2050 = vmatpush1.msra.mxu0 0.0
    %2051 = vmatprep.subr.mxu0 0.0
    %2052 = vmatpush1.msra.mxu0 0.0
    %2053 = vmatprep.subr.mxu0 0.0
    %2054 = vmatpush1.msra.mxu0 0.0
    %2055 = vmatprep.subr.mxu0 0.0
    %2056 = vmatpush1.msra.mxu0 0.0
    %2057 = vmatprep.subr.mxu0 0.0
    %2058 = vmatpush1.msra.mxu0 0.0
    %2059 = vmatprep.subr.mxu0 0.0
    %2060 = vmatpush1.msra.mxu0 0.0
    %2061 = vmatprep.subr.mxu0 0.0
    %2062 = vmatpush1.msra.mxu0 0.0
    %2063 = vmatprep.subr.mxu0 0.0
    %2064 = vmatpush1.msra.mxu0 0.0
    %2065 = vmatprep.subr.mxu0 0.0
    %2066 = vmatpush1.msra.mxu0 0.0
    %2067 = vmatprep.subr.mxu0 0.0
    %2068 = vmatpush1.msra.mxu0 0.0
    %2069 = vmatprep.subr.mxu0 0.0
    %2070 = vmatpush1.msra.mxu0 0.0
    %2071 = vmatprep.subr.mxu0 0.0
    %2072 = vmatpush1.msra.mxu0 0.0
    %2073 = vmatprep.mubr.f32.mxu0 %v2001
    %2074 = vmatmul.mubr.f32.gmra.mrb[0].mxu0 %v1969
    %v2075 = vpop.f32.mrb[0].mxu0
    %v2076 = vadd.f32 %v1998, %v2075
    %v2077 = vpop.f32.mrb[0].mxu0
    %2078 = vmatprep.mubr.f32.mxu0 %v2004
    %2079 = vmatmul.mubr.f32.gmra.mrb[0].mxu0 %v1971
    %v2080 = vpop.f32.mrb[0].mxu0
    %v2081 = vadd.f32 %v1998, %v2080
    %v2082 = vpop.f32.mrb[0].mxu0
    %2083 = vmatprep.mubr.f32.mxu0 %v2007
    %2084 = vmatmul.mubr.f32.gmra.mrb[0].mxu0 %v1973
    %v2085 = vpop.f32.mrb[0].mxu0
    %v2086 = vadd.f32 %v1998, %v2085
    %v2087 = vpop.f32.mrb[0].mxu0
    %2088 = vdwg.mxu0
    %v2089 = vmax.f32 %v2076, 0.0
    %v2090 = vmax.f32 %v2081, 0.0
    %v2091 = vmax.f32 %v2086, 0.0
    %vm2092 = vcmask 261120
    %2093 = vst.msk [vmem:[#allocation6] sm:$0xff] %vm2092, %v2089
    %2094 = vst.msk [vmem:[#allocation6 + $0x8] sm:$0xff] %vm2092, %v2090
    %vm2095 = vcmask 254976
    %2096 = vst.msk [vmem:[#allocation6 + $0x10] sm:$0x3] %vm2095, %v2091
    %v2097 = vld [vmem:[#allocation6] sm:$0x3]
    %2098 = vst.msk [vmem:[#allocation7] sm:$0x3] %vm2095, %v2097
    %v2099 = vld [vmem:[#allocation6 + $0x2] sm:$0x3]
    %v2102 = vunpack.c.l.s4 1983009808
    %v2103 = vunpack.c.0.s8 %v2102
    %v2104 = vlaneseq
    %v2105 = vshrl.u32 %v2104, 7
    %v2106 = vsub.s32 %v2103, %v2105
    %v2107 = vrot.slane %v2099, %v2106
    %2108 = vrot.lane.b32.xlu0 %v2107, 32
    %v2109 = vpop.permute.xlu0 %2108
    %vm2111 = vcmask 517376
    %2112 = vst.msk [vmem:[#allocation7] sm:$0x3] %vm2111, %v2109
    %v2113 = vld [vmem:[#allocation6 + $0x4] sm:$0x3]
    %v2116 = vunpack.c.l.s4 1983009808
    %v2117 = vunpack.c.0.s8 %v2116
    %v2118 = vlaneseq
    %v2119 = vshrl.u32 %v2118, 7
    %v2120 = vsub.s32 %v2117, %v2119
    %v2121 = vrot.slane %v2113, %v2120
    %2122 = vrot.lane.b32.xlu0 %v2121, 64
    %v2123 = vpop.permute.xlu0 %2122
    %vm2125 = vcmask 779776
    %2126 = vst.msk [vmem:[#allocation7] sm:$0x3] %vm2125, %v2123
    %v2127 = vld [vmem:[#allocation6 + $0x6] sm:$0x3]
    %v2130 = vunpack.c.l.s4 1983009808
    %v2131 = vunpack.c.0.s8 %v2130
    %v2132 = vlaneseq
    %v2133 = vshrl.u32 %v2132, 7
    %v2134 = vsub.s32 %v2131, %v2133
    %v2135 = vrot.slane %v2127, %v2134
    %2136 = vrot.lane.b32.xlu0 %v2135, 96
    %v2137 = vpop.permute.xlu0 %2136
    %vm2139 = vcmask 1042176
    %2140 = vst.msk [vmem:[#allocation7] sm:$0x3] %vm2139, %v2137
    %v2141 = vld [vmem:[#allocation6 + $0x8] sm:$0x3]
    %2142 = vst.msk [vmem:[#allocation7 + $0x2] sm:$0x3] %vm2095, %v2141
    %v2143 = vld [vmem:[#allocation6 + $0xa] sm:$0x3]
    %v2146 = vunpack.c.l.s4 1983009808
    %v2147 = vunpack.c.0.s8 %v2146
    %v2148 = vlaneseq
    %v2149 = vshrl.u32 %v2148, 7
    %v2150 = vsub.s32 %v2147, %v2149
    %v2151 = vrot.slane %v2143, %v2150
    %2152 = vrot.lane.b32.xlu0 %v2151, 32
    %v2153 = vpop.permute.xlu0 %2152
    %2155 = vst.msk [vmem:[#allocation7 + $0x2] sm:$0x3] %vm2111, %v2153
    %v2156 = vld [vmem:[#allocation6 + $0xc] sm:$0x3]
    %v2159 = vunpack.c.l.s4 1983009808
    %v2160 = vunpack.c.0.s8 %v2159
    %v2161 = vlaneseq
    %v2162 = vshrl.u32 %v2161, 7
    %v2163 = vsub.s32 %v2160, %v2162
    %v2164 = vrot.slane %v2156, %v2163
    %2165 = vrot.lane.b32.xlu0 %v2164, 64
    %v2166 = vpop.permute.xlu0 %2165
    %2168 = vst.msk [vmem:[#allocation7 + $0x2] sm:$0x3] %vm2125, %v2166
    %v2169 = vld [vmem:[#allocation6 + $0xe] sm:$0x3]
    %v2172 = vunpack.c.l.s4 1983009808
    %v2173 = vunpack.c.0.s8 %v2172
    %v2174 = vlaneseq
    %v2175 = vshrl.u32 %v2174, 7
    %v2176 = vsub.s32 %v2173, %v2175
    %v2177 = vrot.slane %v2169, %v2176
    %2178 = vrot.lane.b32.xlu0 %v2177, 96
    %v2179 = vpop.permute.xlu0 %2178
    %2181 = vst.msk [vmem:[#allocation7 + $0x2] sm:$0x3] %vm2139, %v2179
    %v2182 = vld [vmem:[#allocation6 + $0x10] sm:$0x3]
    %2183 = vst.msk [vmem:[#allocation7 + $0x4] sm:$0x3] %vm2095, %v2182
    %v2184 = vld [vmem:[#allocation7] sm:$0x3f]
    %v2185 = vld [vmem:[%s8] sm:$0xff]
    %v2186 = vld [vmem:[%s8 + $0x8] sm:$0xff]
    %v2187 = vld [vmem:[%s8 + $0x10] sm:$0xff]
    %v2188 = vld [vmem:[%s8 + $0x18] sm:$0xff]
    %v2189 = vld [vmem:[%s8 + $0x20] sm:$0xff]
    %v2190 = vld [vmem:[%s8 + $0x28] sm:$0xff]
    %v2191 = vld [vmem:[%s8 + $0x30] sm:$0xff]
    %v2192 = vld [vmem:[%s8 + $0x38] sm:$0xff]
    %v2193 = vld [vmem:[%s8 + $0x40] sm:$0xff]
    %v2194 = vld [vmem:[%s8 + $0x48] sm:$0xff]
    %v2195 = vld [vmem:[%s8 + $0x50] sm:$0xff]
    %v2196 = vld [vmem:[%s8 + $0x58] sm:$0xff]
    %v2197 = vld [vmem:[%s8 + $0x60] sm:$0xff]
    %v2198 = vld [vmem:[%s8 + $0x68] sm:$0xff]
    %v2199 = vld [vmem:[%s8 + $0x70] sm:$0xff]
    %v2200 = vld [vmem:[%s8 + $0x78] sm:$0xff]
    %v2201 = vld [vmem:[%s8 + $0x80] sm:$0xff]
    %v2202 = vld [vmem:[%s8 + $0x88] sm:$0xff]
    %v2203 = vld [vmem:[%s8 + $0x90] sm:$0xff]
    %v2204 = vld [vmem:[%s8 + $0x98] sm:$0xff]
    %v2205 = vld [vmem:[%s8 + $0xa0] sm:$0xff]
    %v2206 = vld [vmem:[%s8 + $0xa8] sm:$0xff]
    %v2207 = vld [vmem:[%s8 + $0xb0] sm:$0xff]
    %v2208 = vld [vmem:[%s8 + $0xb8] sm:$0xff]
    %v2209 = vld [vmem:[%s8 + $0xc0] sm:$0xff]
    %v2210 = vld [vmem:[%s8 + $0xc8] sm:$0xff]
    %v2211 = vld [vmem:[%s8 + $0xd0] sm:$0xff]
    %v2212 = vld [vmem:[%s8 + $0xd8] sm:$0xff]
    %v2213 = vld [vmem:[%s8 + $0xe0] sm:$0xff]
    %v2214 = vld [vmem:[%s8 + $0xe8] sm:$0xff]
    %v2215 = vld [vmem:[%s8 + $0xf0] sm:$0xff]
    %v2216 = vld [vmem:[%s8 + $0xf8] sm:$0xff]
    %v2217 = vld [vmem:[%s8 + $0x100] sm:$0xff]
    %v2218 = vld [vmem:[%s8 + $0x108] sm:$0xff]
    %v2219 = vld [vmem:[%s8 + $0x110] sm:$0xff]
    %v2220 = vld [vmem:[%s8 + $0x118] sm:$0xff]
    %v2221 = vld [vmem:[%s9] sm:$0x1]
    %v2223 = vlaneseq
    %v2224 = vshrl.u32 %v2223, 7
    %v2225 = vsub.s32 0, %v2224
    %v2226 = vrot.slane %v2221, %v2225
    %v2229 = vcombine.high %v2184, %v2184
    %v2231 = vunpack.c.l.s4 1983009808
    %v2232 = vunpack.c.0.s8 %v2231
    %v2233 = vlaneseq
    %v2234 = vshrl.u32 %v2233, 7
    %v2235 = vsub.s32 %v2232, %v2234
    %v2236 = vrot.slane %v2184, %v2235
    %v2238 = vunpack.c.l.s4 1983009808
    %v2239 = vunpack.c.0.s8 %v2238
    %v2240 = vlaneseq
    %v2241 = vshrl.u32 %v2240, 7
    %v2242 = vsub.s32 %v2239, %v2241
    %v2243 = vrot.slane %v2229, %v2242
    %v2244 = vcombine.high %v2236, %v2236
    %v2247 = vsel %vm2092, %v2243, 0
    %2249 = vmatprep.subr.mxu0 0.0
    %2250 = vmatpush1.msra.mxu0 %v2185
    %2251 = vmatprep.subr.mxu0 0.0
    %2252 = vmatpush1.msra.mxu0 %v2186
    %2253 = vmatprep.subr.mxu0 0.0
    %2254 = vmatpush1.msra.mxu0 %v2187
    %2255 = vmatprep.subr.mxu0 0.0
    %2256 = vmatpush1.msra.mxu0 %v2188
    %2257 = vmatprep.subr.mxu0 0.0
    %2258 = vmatpush1.msra.mxu0 %v2189
    %2259 = vmatprep.subr.mxu0 0.0
    %2260 = vmatpush1.msra.mxu0 %v2190
    %2261 = vmatprep.subr.mxu0 0.0
    %2262 = vmatpush1.msra.mxu0 %v2191
    %2263 = vmatprep.subr.mxu0 0.0
    %2264 = vmatpush1.msra.mxu0 %v2192
    %2265 = vmatprep.subr.mxu0 0.0
    %2266 = vmatpush1.msra.mxu0 %v2193
    %2267 = vmatprep.subr.mxu0 0.0
    %2268 = vmatpush1.msra.mxu0 %v2194
    %2269 = vmatprep.subr.mxu0 0.0
    %2270 = vmatpush1.msra.mxu0 %v2195
    %2271 = vmatprep.subr.mxu0 0.0
    %2272 = vmatpush1.msra.mxu0 %v2196
    %2273 = vmatprep.subr.mxu0 0.0
    %2274 = vmatpush1.msra.mxu0 %v2197
    %2275 = vmatprep.subr.mxu0 0.0
    %2276 = vmatpush1.msra.mxu0 %v2198
    %2277 = vmatprep.subr.mxu0 0.0
    %2278 = vmatpush1.msra.mxu0 %v2199
    %2279 = vmatprep.subr.mxu0 0.0
    %2280 = vmatpush1.msra.mxu0 %v2200
    %2281 = vmatprep.subr.mxu0 0.0
    %2282 = vmatpush1.msra.mxu0 %v2201
    %2283 = vmatprep.subr.mxu0 0.0
    %2284 = vmatpush1.msra.mxu0 %v2202
    %2285 = vmatprep.subr.mxu0 0.0
    %2286 = vmatpush1.msra.mxu0 %v2203
    %2287 = vmatprep.subr.mxu0 0.0
    %2288 = vmatpush1.msra.mxu0 %v2204
    %2289 = vmatprep.subr.mxu0 0.0
    %2290 = vmatpush1.msra.mxu0 %v2205
    %2291 = vmatprep.subr.mxu0 0.0
    %2292 = vmatpush1.msra.mxu0 %v2206
    %2293 = vmatprep.subr.mxu0 0.0
    %2294 = vmatpush1.msra.mxu0 %v2207
    %2295 = vmatprep.subr.mxu0 0.0
    %2296 = vmatpush1.msra.mxu0 %v2208
    %2297 = vmatprep.subr.mxu0 0.0
    %2298 = vmatpush1.msra.mxu0 %v2209
    %2299 = vmatprep.subr.mxu0 0.0
    %2300 = vmatpush1.msra.mxu0 %v2210
    %2301 = vmatprep.subr.mxu0 0.0
    %2302 = vmatpush1.msra.mxu0 %v2211
    %2303 = vmatprep.subr.mxu0 0.0
    %2304 = vmatpush1.msra.mxu0 %v2212
    %2305 = vmatprep.subr.mxu0 0.0
    %2306 = vmatpush1.msra.mxu0 %v2213
    %2307 = vmatprep.subr.mxu0 0.0
    %2308 = vmatpush1.msra.mxu0 %v2214
    %2309 = vmatprep.subr.mxu0 0.0
    %2310 = vmatpush1.msra.mxu0 %v2215
    %2311 = vmatprep.subr.mxu0 0.0
    %2312 = vmatpush1.msra.mxu0 %v2216
    %2313 = vmatprep.mubr.f32.mxu0 %v2244
    %2314 = vmatmul.mubr.f32.gmra.mrb[0].mxu0 %v2236
    %v2315 = vpop.f32.mrb[0].mxu0
    %v2316 = vadd.f32 %v2226, %v2315
    %v2317 = vpop.f32.mrb[0].mxu0
    %2318 = vdwg.mxu0
    %2319 = vmatprep.subr.mxu0 0.0
    %2320 = vmatpush1.msra.mxu0 %v2217
    %2321 = vmatprep.subr.mxu0 0.0
    %2322 = vmatpush1.msra.mxu0 %v2218
    %2323 = vmatprep.subr.mxu0 0.0
    %2324 = vmatpush1.msra.mxu0 %v2219
    %2325 = vmatprep.subr.mxu0 0.0
    %2326 = vmatpush1.msra.mxu0 %v2220
    %2327 = vmatprep.subr.mxu0 0.0
    %2328 = vmatpush1.msra.mxu0 0.0
    %2329 = vmatprep.subr.mxu0 0.0
    %2330 = vmatpush1.msra.mxu0 0.0
    %2331 = vmatprep.subr.mxu0 0.0
    %2332 = vmatpush1.msra.mxu0 0.0
    %2333 = vmatprep.subr.mxu0 0.0
    %2334 = vmatpush1.msra.mxu0 0.0
    %2335 = vmatprep.subr.mxu0 0.0
    %2336 = vmatpush1.msra.mxu0 0.0
    %2337 = vmatprep.subr.mxu0 0.0
    %2338 = vmatpush1.msra.mxu0 0.0
    %2339 = vmatprep.subr.mxu0 0.0
    %2340 = vmatpush1.msra.mxu0 0.0
    %2341 = vmatprep.subr.mxu0 0.0
    %2342 = vmatpush1.msra.mxu0 0.0
    %2343 = vmatprep.subr.mxu0 0.0
    %2344 = vmatpush1.msra.mxu0 0.0
    %2345 = vmatprep.subr.mxu0 0.0
    %2346 = vmatpush1.msra.mxu0 0.0
    %2347 = vmatprep.subr.mxu0 0.0
    %2348 = vmatpush1.msra.mxu0 0.0
    %2349 = vmatprep.subr.mxu0 0.0
    %2350 = vmatpush1.msra.mxu0 0.0
    %2351 = vmatprep.subr.mxu0 0.0
    %2352 = vmatpush1.msra.mxu0 0.0
    %2353 = vmatprep.subr.mxu0 0.0
    %2354 = vmatpush1.msra.mxu0 0.0
    %2355 = vmatprep.subr.mxu0 0.0
    %2356 = vmatpush1.msra.mxu0 0.0
    %2357 = vmatprep.subr.mxu0 0.0
    %2358 = vmatpush1.msra.mxu0 0.0
    %2359 = vmatprep.subr.mxu0 0.0
    %2360 = vmatpush1.msra.mxu0 0.0
    %2361 = vmatprep.subr.mxu0 0.0
    %2362 = vmatpush1.msra.mxu0 0.0
    %2363 = vmatprep.subr.mxu0 0.0
    %2364 = vmatpush1.msra.mxu0 0.0
    %2365 = vmatprep.subr.mxu0 0.0
    %2366 = vmatpush1.msra.mxu0 0.0
    %2367 = vmatprep.subr.mxu0 0.0
    %2368 = vmatpush1.msra.mxu0 0.0
    %2369 = vmatprep.subr.mxu0 0.0
    %2370 = vmatpush1.msra.mxu0 0.0
    %2371 = vmatprep.subr.mxu0 0.0
    %2372 = vmatpush1.msra.mxu0 0.0
    %2373 = vmatprep.subr.mxu0 0.0
    %2374 = vmatpush1.msra.mxu0 0.0
    %2375 = vmatprep.subr.mxu0 0.0
    %2376 = vmatpush1.msra.mxu0 0.0
    %2377 = vmatprep.subr.mxu0 0.0
    %2378 = vmatpush1.msra.mxu0 0.0
    %2379 = vmatprep.subr.mxu0 0.0
    %2380 = vmatpush1.msra.mxu0 0.0
    %2381 = vmatprep.subr.mxu0 0.0
    %2382 = vmatpush1.msra.mxu0 0.0
    %2383 = vmatprep.mubr.f32.mxu0 0.0
    %2384 = vmatmul.mubr.f32.gmra.mrb[0].mxu0 %v2247
    %v2385 = vpop.f32.mrb[0].mxu0
    %v2386 = vadd.f32 %v2316, %v2385
    %v2387 = vpop.f32.mrb[0].mxu0
    %2388 = vdwg.mxu0
    %v2389 = vmax.f32 %v2386, 0.0
    %v2390 = vld [vmem:[%s10] sm:$0xff]
    %v2391 = vld [vmem:[%s10 + $0x8] sm:$0xff]
    %v2392 = vld [vmem:[%s10 + $0x10] sm:$0xff]
    %v2393 = vld [vmem:[%s10 + $0x18] sm:$0xff]
    %v2394 = vld [vmem:[%s10 + $0x20] sm:$0xff]
    %v2395 = vld [vmem:[%s10 + $0x28] sm:$0xff]
    %v2396 = vld [vmem:[%s10 + $0x30] sm:$0xff]
    %v2397 = vld [vmem:[%s10 + $0x38] sm:$0xff]
    %v2398 = vld [vmem:[%s10 + $0x40] sm:$0xff]
    %v2399 = vld [vmem:[%s10 + $0x48] sm:$0xff]
    %v2400 = vld [vmem:[%s10 + $0x50] sm:$0xff]
    %v2401 = vld [vmem:[%s10 + $0x58] sm:$0xff]
    %v2402 = vld [vmem:[%s10 + $0x60] sm:$0xff]
    %v2403 = vld [vmem:[%s10 + $0x68] sm:$0xff]
    %v2404 = vld [vmem:[%s10 + $0x70] sm:$0xff]
    %v2405 = vld [vmem:[%s10 + $0x78] sm:$0xff]
    %v2406 = vld [vmem:[%s11] sm:$0x1]
    %v2408 = vlaneseq
    %v2409 = vshrl.u32 %v2408, 7
    %v2410 = vsub.s32 0, %v2409
    %v2411 = vrot.slane %v2406, %v2410
    %2413 = vmatprep.subr.mxu0 0.0
    %2414 = vmatpush1.msra.mxu0 %v2390
    %2415 = vmatprep.subr.mxu0 0.0
    %2416 = vmatpush1.msra.mxu0 %v2391
    %2417 = vmatprep.subr.mxu0 0.0
    %2418 = vmatpush1.msra.mxu0 %v2392
    %2419 = vmatprep.subr.mxu0 0.0
    %2420 = vmatpush1.msra.mxu0 %v2393
    %2421 = vmatprep.subr.mxu0 0.0
    %2422 = vmatpush1.msra.mxu0 %v2394
    %2423 = vmatprep.subr.mxu0 0.0
    %2424 = vmatpush1.msra.mxu0 %v2395
    %2425 = vmatprep.subr.mxu0 0.0
    %2426 = vmatpush1.msra.mxu0 %v2396
    %2427 = vmatprep.subr.mxu0 0.0
    %2428 = vmatpush1.msra.mxu0 %v2397
    %2429 = vmatprep.subr.mxu0 0.0
    %2430 = vmatpush1.msra.mxu0 %v2398
    %2431 = vmatprep.subr.mxu0 0.0
    %2432 = vmatpush1.msra.mxu0 %v2399
    %2433 = vmatprep.subr.mxu0 0.0
    %2434 = vmatpush1.msra.mxu0 %v2400
    %2435 = vmatprep.subr.mxu0 0.0
    %2436 = vmatpush1.msra.mxu0 %v2401
    %2437 = vmatprep.subr.mxu0 0.0
    %2438 = vmatpush1.msra.mxu0 %v2402
    %2439 = vmatprep.subr.mxu0 0.0
    %2440 = vmatpush1.msra.mxu0 %v2403
    %2441 = vmatprep.subr.mxu0 0.0
    %2442 = vmatpush1.msra.mxu0 %v2404
    %2443 = vmatprep.subr.mxu0 0.0
    %2444 = vmatpush1.msra.mxu0 %v2405
    %2445 = vmatprep.subr.mxu0 0.0
    %2446 = vmatpush1.msra.mxu0 0.0
    %2447 = vmatprep.subr.mxu0 0.0
    %2448 = vmatpush1.msra.mxu0 0.0
    %2449 = vmatprep.subr.mxu0 0.0
    %2450 = vmatpush1.msra.mxu0 0.0
    %2451 = vmatprep.subr.mxu0 0.0
    %2452 = vmatpush1.msra.mxu0 0.0
    %2453 = vmatprep.subr.mxu0 0.0
    %2454 = vmatpush1.msra.mxu0 0.0
    %2455 = vmatprep.subr.mxu0 0.0
    %2456 = vmatpush1.msra.mxu0 0.0
    %2457 = vmatprep.subr.mxu0 0.0
    %2458 = vmatpush1.msra.mxu0 0.0
    %2459 = vmatprep.subr.mxu0 0.0
    %2460 = vmatpush1.msra.mxu0 0.0
    %2461 = vmatprep.subr.mxu0 0.0
    %2462 = vmatpush1.msra.mxu0 0.0
    %2463 = vmatprep.subr.mxu0 0.0
    %2464 = vmatpush1.msra.mxu0 0.0
    %2465 = vmatprep.subr.mxu0 0.0
    %2466 = vmatpush1.msra.mxu0 0.0
    %2467 = vmatprep.subr.mxu0 0.0
    %2468 = vmatpush1.msra.mxu0 0.0
    %2469 = vmatprep.subr.mxu0 0.0
    %2470 = vmatpush1.msra.mxu0 0.0
    %2471 = vmatprep.subr.mxu0 0.0
    %2472 = vmatpush1.msra.mxu0 0.0
    %2473 = vmatprep.subr.mxu0 0.0
    %2474 = vmatpush1.msra.mxu0 0.0
    %2475 = vmatprep.subr.mxu0 0.0
    %2476 = vmatpush1.msra.mxu0 0.0
    %2477 = vmatprep.mubr.f32.mxu0 0.0
    %2478 = vmatmul.mubr.f32.gmra.mrb[0].mxu0 %v2389
    %v2479 = vpop.f32.mrb[0].mxu0
    %v2480 = vadd.f32 %v2411, %v2479
    %v2481 = vpop.f32.mrb[0].mxu0
    %2482 = vdwg.mxu0
    %v2483 = vmul.f32 %v2480, 1.442695
    %v2484 = vpow.pop %v2483
    %v2485 = vld [vmem:[%s12] sm:$0x3]
    %2487 = vrot.lane.b32.xlu0 %v2485, 4
    %v2488 = vpop.permute.xlu0 %2487
    %v2490 = vmul.f32 %v2484, %v2488
    %2492 = vrot.lane.b32.xlu0 %v2490, 124
    %v2493 = vpop.permute.xlu0 %2492
    %v2495 = vadd.f32 %v2480, %v2493
    %vm2496 = vcmask 25600
    %2497 = vst.msk [vmem:[#allocation8] sm:$0x3] %vm2496, %v2495
    %v2498 = vmul.f32 %v2484, %v2484
    %v2499 = vmul.f32 %v2480, %v2480
    %2501 = vrot.lane.b32.xlu0 %v2499, 4
    %v2502 = vpop.permute.xlu0 %2501
    %v2504 = vadd.f32 %v2498, %v2502
    %v2505 = vsub.f32 %v2504, %v2480
    %v2506 = vsub.f32 %v2505, 0.5
    %2508 = vrot.lane.b32.xlu0 %v2506, 124
    %v2509 = vpop.permute.xlu0 %2508
    %v2511 = vsel %vm2496, %v2509, 0.0
    %2512 = vadd.xlane.f32.xlu0 %v2511
    %v2513 = vpop.xlane.xlu0 %2512
    %v2514 = vrot.slane %v2513, 4
    %v2515 = vadd.f32 %v2513, %v2514
    %v2516 = vrot.slane %v2515, 2
    %v2517 = vadd.f32 %v2515, %v2516
    %v2518 = vrot.slane %v2517, 1
    %v2519 = vadd.f32 %v2517, %v2518
    %s2520 = vtos %v2519
    %v2521 = vstv %s2520
    %vm2522 = vcmask 0
    %2523 = vst.msk [vmem:[#allocation10] sm:$0x1] %vm2522, %v2521
    // Predicated region
    $region54: #{variational_encoder_forward.1} parent=1 // pred_check
      _
    $region55: #{variational_encoder_forward.1} parent=1 // pred_check_branch
      %2525 = sbr.rel (0) target = $region57
    $region56: #{variational_encoder_forward.1} parent=1 // pred_region
      %s2527 = ssub.s32 32, 32
      %2528 = vsyncadd [#allocation9], %s2527
      %s2530 = sshll.u32 [#allocation8], 4
      %s2531 = int_to_ptr.vmem [resolvable:$true] %s2530
      %2533 = dma.vmem_to_hbm [thread:$0]  %s2531, 32, %s13, [#allocation9]
    $region57: #{variational_encoder_forward.1} parent=1 // pred_fallthru
      _
    // Predicated region
    $region58: #{variational_encoder_forward.1} parent=1 // pred_check
      _
    $region59: #{variational_encoder_forward.1} parent=1 // pred_check_branch
      %2535 = sbr.rel (0) target = $region61
    $region60: #{variational_encoder_forward.1} parent=1 // pred_region
      %s2537 = ssub.s32 16, 16
      %2538 = vsyncadd [#allocation11], %s2537
      %s2540 = sshll.u32 [#allocation10], 4
      %s2541 = int_to_ptr.vmem [resolvable:$true] %s2540
      %2543 = dma.vmem_to_hbm [thread:$0]  %s2541, 16, %s14, [#allocation11]
    $region61: #{variational_encoder_forward.1} parent=1 // pred_fallthru
      _
    // Predicated region
    $region62: #{variational_encoder_forward.1} parent=1 // pred_check
      _
    $region63: #{variational_encoder_forward.1} parent=1 // pred_check_branch
      %2545 = sbr.rel (0) target = $region65
    $region64: #{variational_encoder_forward.1} parent=1 // pred_region
      %2546 = dma.done [#allocation9], 32
    $region65: #{variational_encoder_forward.1} parent=1 // pred_fallthru
      _
    // Predicated region
    $region66: #{variational_encoder_forward.1} parent=1 // pred_check
      _
    $region67: #{variational_encoder_forward.1} parent=1 // pred_check_branch
      %2548 = sbr.rel (0) target = $region69
    $region68: #{variational_encoder_forward.1} parent=1 // pred_region
      %2549 = dma.done [#allocation11], 16
    $region69: #{variational_encoder_forward.1} parent=1 // pred_fallthru
      _
    %2550 = vsyncpa [#allocation9], 1
    %2551 = vsyncpa [#allocation11], 1

</llo_original>
